<compile_context>
chip_gen: v7x
topology: tpu7x:2x2x1
jax: 0.10.0
libtpu: 0.0.40
codegen_flags: <defaults>
</compile_context>

<pallas_src>
import functools

import jax
import jax.numpy as jnp
from jax.experimental import pallas as pl
from jax.experimental.pallas import tpu as pltpu


# ---------------------------------------------------------------------------
# Fused kernel: ReLU -> dw(stride) -> 1x1 -> BN -> ReLU -> dw(1) -> 1x1 -> BN
# One grid step = one block of n_blk images.  All intermediates stay in VMEM.
# ---------------------------------------------------------------------------
def _dual_sep_conv_kernel(xph_ref, wca_ref, ba_ref, wcb_ref, bb_ref,
                          o_ref, mid_ref, *,
                          K, stride, dil, pad, n_blk,
                          Ho1, Wo1, Ho2, Wo2, C_in, C_out):
    s = stride
    M1 = n_blk * Ho1 * Wo1
    M2 = n_blk * Ho2 * Wo2

    # Enumerate the depthwise taps of SepConv A and group them by polyphase
    # plane so each plane is loaded and ReLU'd exactly once (hoisted ReLU).
    taps_by_plane = {}
    for kh in range(K):
        for kw in range(K):
            rh, qh = (kh * dil) % s, (kh * dil) // s
            rw, qw = (kw * dil) % s, (kw * dil) // s
            taps_by_plane.setdefault((rh, rw), []).append((kh * K + kw, qh, qw))

    # Combined (depthwise x pointwise x BN-scale) weights, loaded once.
    wca = wca_ref[...]                       # (K*K, C_in, C_in)
    wcb = wcb_ref[...]                       # (K*K, C_in, C_out)

    # ---- SepConv A: ReLU -> depthwise (stride s) -> 1x1 -> BN --------------
    # The depthwise conv is folded into the 1x1, so every tap is one MXU
    # matmul:  acc += x_tap (M1, C_in) @ Wc_a[tap] (C_in, C_in).
    acc = jnp.zeros((M1, C_in), jnp.float32)
    for (rh, rw), tap_list in taps_by_plane.items():
        # ReLU precedes the conv; zero padding commutes with ReLU.
        plane = jnp.maximum(xph_ref[rh * s + rw], 0.0)   # (n_blk, Hph, Wph, C_in)
        for (t, qh, qw) in tap_list:
            patch = plane[:, qh:qh + Ho1, qw:qw + Wo1, :].reshape(M1, C_in)
            acc = acc + jnp.dot(patch, wca[t],
                                preferred_element_type=jnp.float32)
    y = acc + ba_ref[...]                    # BN scale folded into wca; bias only

    # ---- intermediate: ReLU of SepConv B input, zero-padded, kept in VMEM --
    # Re-zero only the thin pad border each step (interior fully overwritten).
    if pad > 0:
        Hm, Wm = Ho1 + 2 * pad, Wo1 + 2 * pad
        zrow = jnp.zeros((n_blk, pad, Wm, C_in), jnp.float32)
        zcol = jnp.zeros((n_blk, Hm, pad, C_in), jnp.float32)
        mid_ref[:, pl.ds(0, pad), :, :] = zrow
        mid_ref[:, pl.ds(pad + Ho1, pad), :, :] = zrow
        mid_ref[:, :, pl.ds(0, pad), :] = zcol
        mid_ref[:, :, pl.ds(pad + Wo1, pad), :] = zcol
    mid_ref[:, pl.ds(pad, Ho1), pl.ds(pad, Wo1), :] = (
        jnp.maximum(y, 0.0).reshape(n_blk, Ho1, Wo1, C_in))

    # ---- SepConv B: (ReLU already applied) depthwise (stride 1) -> 1x1 -> BN
    acc2 = jnp.zeros((M2, C_out), jnp.float32)
    for kh in range(K):
        for kw in range(K):
            patch = mid_ref[:, pl.ds(kh * dil, Ho2), pl.ds(kw * dil, Wo2), :]
            acc2 = acc2 + jnp.dot(patch.reshape(M2, C_in), wcb[kh * K + kw],
                                  preferred_element_type=jnp.float32)
    o_ref[...] = acc2 + bb_ref[...]          # single full-block store


# ---------------------------------------------------------------------------
# Glue (layout plumbing + constant folding only)
# ---------------------------------------------------------------------------
def _fold_bn(bn, conv_bias, affine, eps=1e-5):
    """Fold BN (running stats) + optional preceding conv bias into scale/bias."""
    inv = 1.0 / jnp.sqrt(bn["var"] + eps)
    if affine:
        scale = bn["gamma"] * inv
        bias = bn["beta"] - bn["mean"] * scale
    else:
        scale = inv
        bias = -bn["mean"] * scale
    if conv_bias is not None:
        bias = bias + conv_bias * scale
    return scale.astype(jnp.float32), bias.astype(jnp.float32)


def _polyphase(xpad, s):
    """(N, Hp, Wp, C) zero-padded NHWC -> (s*s, N, ceil(Hp/s), ceil(Wp/s), C).

    Plane rh*s + rw holds xpad[:, rh::s, rw::s, :] (space-to-depth), so a
    stride-s depthwise tap becomes a contiguous, un-strided slice in-kernel."""
    N, Hp, Wp, C = xpad.shape
    Hph, Wph = -(-Hp // s), -(-Wp // s)
    xpad = jnp.pad(xpad, ((0, 0), (0, Hph * s - Hp), (0, Wph * s - Wp), (0, 0)))
    ph = xpad.reshape(N, Hph, s, Wph, s, C).transpose(2, 4, 0, 1, 3, 5)
    return ph.reshape(s * s, N, Hph, Wph, C), Hph, Wph


def _pick_batch_block(N, pixels):
    """Largest divisor of N with matmul M-dim = n_blk*pixels targeting ~256."""
    target = max(1, 256 // max(pixels, 1))
    nb = min(N, target)
    while N % nb:
        nb -= 1
    return max(nb, 1)


@functools.partial(jax.jit,
                   static_argnames=("K", "stride", "padding", "dilation",
                                    "affine"))
def dual_sep_conv(x_nchw, params, *, K, stride, padding, dilation, affine):
    N, C_in, H, W = x_nchw.shape
    C_out = params["wpw_b"].shape[1]
    s, p, d = stride, padding, dilation

    Hp1, Wp1 = H + 2 * p, W + 2 * p
    Ho1 = (Hp1 - d * (K - 1) - 1) // s + 1          # SepConv A output (stride s)
    Wo1 = (Wp1 - d * (K - 1) - 1) // s + 1
    Ho2 = Ho1 + 2 * p - d * (K - 1)                 # SepConv B output (stride 1)
    Wo2 = Wo1 + 2 * p - d * (K - 1)

    # Layout plumbing in XLA: NCHW->NHWC, zero pad, polyphase space-to-depth.
    # TODO(synk): for large inputs, fold pad/polyphase into the kernel via
    # strided pl.ds loads to save one full HBM pass over the input.
    x = jnp.transpose(x_nchw, (0, 2, 3, 1)).astype(jnp.float32)
    xpad = jnp.pad(x, ((0, 0), (p, p), (p, p), (0, 0)))
    phases, Hph, Wph = _polyphase(xpad, s)

    # Static bound check for the polyphase tap windows (review concern).
    assert ((K - 1) * d) // s + Ho1 <= Hph, "polyphase tap OOB along H"
    assert ((K - 1) * d) // s + Wo1 <= Wph, "polyphase tap OOB along W"

    # Fold BN (running stats) + optional 1x1 bias into scale/bias, then fold
    # the scale and the depthwise weights into per-tap (C_in, C_out) weights.
    sa, ba = _fold_bn(params["bn_a"], params["bias_a"], affine)
    sb, bb = _fold_bn(params["bn_b"], params["bias_b"], affine)
    wca = (params["wdw_a"][:, :, None] *
           (params["wpw_a"] * sa[None, :])[None, :, :]).astype(jnp.float32)
    wcb = (params["wdw_b"][:, :, None] *
           (params["wpw_b"] * sb[None, :])[None, :, :]).astype(jnp.float32)

    n_blk = _pick_batch_block(N, Ho1 * Wo1)
    grid = (N // n_blk,)

    kernel = functools.partial(
        _dual_sep_conv_kernel, K=K, stride=s, dil=d, pad=p, n_blk=n_blk,
        Ho1=Ho1, Wo1=Wo1, Ho2=Ho2, Wo2=Wo2, C_in=C_in, C_out=C_out)

    out = pl.pallas_call(
        kernel,
        grid=grid,
        in_specs=[
            pl.BlockSpec((s * s, n_blk, Hph, Wph, C_in),
                         lambda n: (0, n, 0, 0, 0)),
            pl.BlockSpec((K * K, C_in, C_in), lambda n: (0, 0, 0)),
            pl.BlockSpec((1, C_in), lambda n: (0, 0)),
            pl.BlockSpec((K * K, C_in, C_out), lambda n: (0, 0, 0)),
            pl.BlockSpec((1, C_out), lambda n: (0, 0)),
        ],
        out_specs=pl.BlockSpec((n_blk * Ho2 * Wo2, C_out), lambda n: (n, 0)),
        out_shape=jax.ShapeDtypeStruct((N * Ho2 * Wo2, C_out), jnp.float32),
        scratch_shapes=[
            pltpu.VMEM((n_blk, Ho1 + 2 * p, Wo1 + 2 * p, C_in), jnp.float32)],
        compiler_params=pltpu.CompilerParams(
            dimension_semantics=("parallel",)),
    )(phases, wca, ba.reshape(1, C_in), wcb, bb.reshape(1, C_out))

    out = out.reshape(N, Ho2, Wo2, C_out)
    return jnp.transpose(out, (0, 3, 1, 2))                        # NHWC -> NCHW


# ---------------------------------------------------------------------------
# Pure-JAX reference (lax.conv) for a correctness check
# ---------------------------------------------------------------------------
def _sep_conv_ref(x, wdw, wpw, conv_bias, bn, *, K, stride, padding, dilation,
                  affine, eps=1e-5):
    C = x.shape[-1]
    r = jnp.maximum(x, 0.0)
    dw = wdw.reshape(K, K, 1, C)                                   # HWIO, grouped
    y = jax.lax.conv_general_dilated(
        r, dw, window_strides=(stride, stride),
        padding=[(padding, padding), (padding, padding)],
        rhs_dilation=(dilation, dilation),
        dimension_numbers=("NHWC", "HWIO", "NHWC"),
        feature_group_count=C, precision=jax.lax.Precision.HIGHEST)
    pw = wpw.reshape(1, 1, wpw.shape[0], wpw.shape[1])
    y = jax.lax.conv_general_dilated(
        y, pw, window_strides=(1, 1), padding=[(0, 0), (0, 0)],
        dimension_numbers=("NHWC", "HWIO", "NHWC"),
        precision=jax.lax.Precision.HIGHEST)
    if conv_bias is not None:
        y = y + conv_bias
    inv = 1.0 / jnp.sqrt(bn["var"] + eps)
    if affine:
        return (y - bn["mean"]) * inv * bn["gamma"] + bn["beta"]
    return (y - bn["mean"]) * inv


def dual_sep_conv_ref(x_nchw, params, *, K, stride, padding, dilation, affine):
    x = jnp.transpose(x_nchw, (0, 2, 3, 1)).astype(jnp.float32)
    y = _sep_conv_ref(x, params["wdw_a"], params["wpw_a"], params["bias_a"],
                      params["bn_a"], K=K, stride=stride, padding=padding,
                      dilation=dilation, affine=affine)
    y = _sep_conv_ref(y, params["wdw_b"], params["wpw_b"], params["bias_b"],
                      params["bn_b"], K=K, stride=1, padding=padding,
                      dilation=dilation, affine=affine)
    return jnp.transpose(y, (0, 3, 1, 2))


# ---------------------------------------------------------------------------
# Parameter initialization (deterministic)
# ---------------------------------------------------------------------------
def init_params(key, C_in, C_out, K, affine):
    ks = jax.random.split(key, 8)

    def nrm(k, shape, s=0.1):
        return s * jax.random.normal(k, shape, jnp.float32)

    def bn(k, c):
        k1, k2, k3, k4 = jax.random.split(k, 4)
        return dict(
            gamma=1.0 + 0.1 * jax.random.normal(k1, (c,), jnp.float32),
            beta=0.05 * jax.random.normal(k2, (c,), jnp.float32),
            mean=0.05 * jax.random.normal(k3, (c,), jnp.float32),
            var=1.0 + 0.1 * jnp.abs(jax.random.normal(k4, (c,), jnp.float32)))

    return {
        "wdw_a": nrm(ks[0], (K * K, C_in)),   # depthwise A: [kh*K+kw, channel]
        "wpw_a": nrm(ks[1], (C_in, C_in)),    # 1x1 A:       [c_in, c_out]
        "bias_a": None if affine else nrm(ks[2], (C_in,)),
        "bn_a": bn(ks[3], C_in),
        "wdw_b": nrm(ks[4], (K * K, C_in)),   # depthwise B
        "wpw_b": nrm(ks[5], (C_in, C_out)),   # 1x1 B
        "bias_b": None if affine else nrm(ks[6], (C_out,)),
        "bn_b": bn(ks[7], C_out),
    }


# ---------------------------------------------------------------------------
if __name__ == "__main__":
    # DualSepConv(C_in=16, C_out=32, kernel_size=3, stride=2, padding=1,
    #             dilation=1, affine=True); input (N=2, C=16, H=W=16) NCHW.
    C_in, C_out, K = 16, 32, 3
    stride, padding, dilation, affine = 2, 1, 1, True
    N, H, W = 2, 16, 16

    key = jax.random.PRNGKey(0)
    kp, kx = jax.random.split(key)
    params = init_params(kp, C_in, C_out, K, affine)
    x = jax.random.normal(kx, (N, C_in, H, W), jnp.float32)

    y = dual_sep_conv(x, params, K=K, stride=stride, padding=padding,
                      dilation=dilation, affine=affine)
    y = jax.block_until_ready(y)

    y_ref = dual_sep_conv_ref(x, params, K=K, stride=stride, padding=padding,
                              dilation=dilation, affine=affine)
    assert y.shape == y_ref.shape == (N, C_out, 8, 8)
    assert bool(jnp.all(jnp.isfinite(y)))
    err = float(jnp.max(jnp.abs(y - y_ref)))
    assert err < 5e-3, f"max abs error vs reference: {err}"
    print("KERNEL_OK")
</pallas_src>

<mosaic_0001>
module attributes {stable_mosaic.version = 11 : i64} {
  func.func @_dual_sep_conv_kernel(%arg0: i32, %arg1: memref<4x2x9x9x16xf32, #tpu.memory_space<vmem>>, %arg2: memref<9x16x16xf32, #tpu.memory_space<vmem>>, %arg3: memref<1x16xf32, #tpu.memory_space<vmem>>, %arg4: memref<9x16x32xf32, #tpu.memory_space<vmem>>, %arg5: memref<1x32xf32, #tpu.memory_space<vmem>>, %arg6: memref<128x32xf32, #tpu.memory_space<vmem>>, %arg7: memref<2x10x10x16xf32, #tpu.memory_space<vmem>>) attributes {dimension_semantics = [#tpu.dimension_semantics<parallel>], iteration_bounds = array<i64: 1>, scalar_prefetch = 0 : i64, scratch_operands = 1 : i64, tpu.core_type = #tpu.core_type<tc>, window_params = [{transform_indices = @transform_0, window_bounds = array<i64: 4, 2, 9, 9, 16>}, {pipeline_mode = #tpu.pipeline_mode<synchronous>, transform_indices = @transform_1, window_bounds = array<i64: 9, 16, 16>}, {pipeline_mode = #tpu.pipeline_mode<synchronous>, transform_indices = @transform_2, window_bounds = array<i64: 1, 16>}, {pipeline_mode = #tpu.pipeline_mode<synchronous>, transform_indices = @transform_3, window_bounds = array<i64: 9, 16, 32>}, {pipeline_mode = #tpu.pipeline_mode<synchronous>, transform_indices = @transform_4, window_bounds = array<i64: 1, 32>}, {transform_indices = @transform_5, window_bounds = array<i64: 128, 32>}]} {
    %c0 = arith.constant 0 : index
    %c0_0 = arith.constant 0 : index
    %c0_1 = arith.constant 0 : index
    %0 = vector.load %arg2[%c0, %c0_0, %c0_1] : memref<9x16x16xf32, #tpu.memory_space<vmem>>, vector<9x16x16xf32>
    %c0_2 = arith.constant 0 : index
    %c0_3 = arith.constant 0 : index
    %c0_4 = arith.constant 0 : index
    %1 = vector.load %arg4[%c0_2, %c0_3, %c0_4] : memref<9x16x32xf32, #tpu.memory_space<vmem>>, vector<9x16x32xf32>
    %cst = arith.constant 0.000000e+00 : f32
    %2 = vector.broadcast %cst : f32 to vector<128x16xf32>
    %c0_5 = arith.constant 0 : index
    %c0_6 = arith.constant 0 : index
    %c0_7 = arith.constant 0 : index
    %c0_8 = arith.constant 0 : index
    %c0_9 = arith.constant 0 : index
    %3 = vector.load %arg1[%c0_5, %c0_6, %c0_7, %c0_8, %c0_9] : memref<4x2x9x9x16xf32, #tpu.memory_space<vmem>>, vector<1x2x9x9x16xf32>
    %4 = vector.shape_cast %3 : vector<1x2x9x9x16xf32> to vector<2x9x9x16xf32>
    %cst_10 = arith.constant 0.000000e+00 : f32
    %5 = vector.broadcast %cst_10 : f32 to vector<2x9x9x16xf32>
    %6 = arith.maximumf %4, %5 : vector<2x9x9x16xf32>
    %7 = vector.extract_strided_slice %6 {offsets = [0, 0, 0, 0], sizes = [2, 8, 8, 16], strides = [1, 1, 1, 1]} : vector<2x9x9x16xf32> to vector<2x8x8x16xf32>
    %8 = vector.shape_cast %7 : vector<2x8x8x16xf32> to vector<128x16xf32>
    %9 = vector.extract_strided_slice %0 {offsets = [0, 0, 0], sizes = [1, 16, 16], strides = [1, 1, 1]} : vector<9x16x16xf32> to vector<1x16x16xf32>
    %10 = vector.shape_cast %9 : vector<1x16x16xf32> to vector<16x16xf32>
    %cst_11 = arith.constant dense<0.000000e+00> : vector<128x16xf32>
    %11 = tpu.matmul %8, %10, %cst_11 {dimension_numbers = #tpu.dot_dimension_numbers<[1], [0], [0], [1], [0, 0, 1, 1], [], []>} : vector<128x16xf32>, vector<16x16xf32>, vector<128x16xf32> -> vector<128x16xf32>
    %12 = arith.addf %2, %11 : vector<128x16xf32>
    %13 = vector.extract_strided_slice %6 {offsets = [0, 0, 1, 0], sizes = [2, 8, 8, 16], strides = [1, 1, 1, 1]} : vector<2x9x9x16xf32> to vector<2x8x8x16xf32>
    %14 = vector.shape_cast %13 : vector<2x8x8x16xf32> to vector<128x16xf32>
    %15 = vector.extract_strided_slice %0 {offsets = [2, 0, 0], sizes = [1, 16, 16], strides = [1, 1, 1]} : vector<9x16x16xf32> to vector<1x16x16xf32>
    %16 = vector.shape_cast %15 : vector<1x16x16xf32> to vector<16x16xf32>
    %cst_12 = arith.constant dense<0.000000e+00> : vector<128x16xf32>
    %17 = tpu.matmul %14, %16, %cst_12 {dimension_numbers = #tpu.dot_dimension_numbers<[1], [0], [0], [1], [0, 0, 1, 1], [], []>} : vector<128x16xf32>, vector<16x16xf32>, vector<128x16xf32> -> vector<128x16xf32>
    %18 = arith.addf %12, %17 : vector<128x16xf32>
    %19 = vector.extract_strided_slice %6 {offsets = [0, 1, 0, 0], sizes = [2, 8, 8, 16], strides = [1, 1, 1, 1]} : vector<2x9x9x16xf32> to vector<2x8x8x16xf32>
    %20 = vector.shape_cast %19 : vector<2x8x8x16xf32> to vector<128x16xf32>
    %21 = vector.extract_strided_slice %0 {offsets = [6, 0, 0], sizes = [1, 16, 16], strides = [1, 1, 1]} : vector<9x16x16xf32> to vector<1x16x16xf32>
    %22 = vector.shape_cast %21 : vector<1x16x16xf32> to vector<16x16xf32>
    %cst_13 = arith.constant dense<0.000000e+00> : vector<128x16xf32>
    %23 = tpu.matmul %20, %22, %cst_13 {dimension_numbers = #tpu.dot_dimension_numbers<[1], [0], [0], [1], [0, 0, 1, 1], [], []>} : vector<128x16xf32>, vector<16x16xf32>, vector<128x16xf32> -> vector<128x16xf32>
    %24 = arith.addf %18, %23 : vector<128x16xf32>
    %25 = vector.extract_strided_slice %6 {offsets = [0, 1, 1, 0], sizes = [2, 8, 8, 16], strides = [1, 1, 1, 1]} : vector<2x9x9x16xf32> to vector<2x8x8x16xf32>
    %26 = vector.shape_cast %25 : vector<2x8x8x16xf32> to vector<128x16xf32>
    %27 = vector.extract_strided_slice %0 {offsets = [8, 0, 0], sizes = [1, 16, 16], strides = [1, 1, 1]} : vector<9x16x16xf32> to vector<1x16x16xf32>
    %28 = vector.shape_cast %27 : vector<1x16x16xf32> to vector<16x16xf32>
    %cst_14 = arith.constant dense<0.000000e+00> : vector<128x16xf32>
    %29 = tpu.matmul %26, %28, %cst_14 {dimension_numbers = #tpu.dot_dimension_numbers<[1], [0], [0], [1], [0, 0, 1, 1], [], []>} : vector<128x16xf32>, vector<16x16xf32>, vector<128x16xf32> -> vector<128x16xf32>
    %30 = arith.addf %24, %29 : vector<128x16xf32>
    %c1 = arith.constant 1 : index
    %c0_15 = arith.constant 0 : index
    %c0_16 = arith.constant 0 : index
    %c0_17 = arith.constant 0 : index
    %c0_18 = arith.constant 0 : index
    %31 = vector.load %arg1[%c1, %c0_15, %c0_16, %c0_17, %c0_18] : memref<4x2x9x9x16xf32, #tpu.memory_space<vmem>>, vector<1x2x9x9x16xf32>
    %32 = vector.shape_cast %31 : vector<1x2x9x9x16xf32> to vector<2x9x9x16xf32>
    %cst_19 = arith.constant 0.000000e+00 : f32
    %33 = vector.broadcast %cst_19 : f32 to vector<2x9x9x16xf32>
    %34 = arith.maximumf %32, %33 : vector<2x9x9x16xf32>
    %35 = vector.extract_strided_slice %34 {offsets = [0, 0, 0, 0], sizes = [2, 8, 8, 16], strides = [1, 1, 1, 1]} : vector<2x9x9x16xf32> to vector<2x8x8x16xf32>
    %36 = vector.shape_cast %35 : vector<2x8x8x16xf32> to vector<128x16xf32>
    %37 = vector.extract_strided_slice %0 {offsets = [1, 0, 0], sizes = [1, 16, 16], strides = [1, 1, 1]} : vector<9x16x16xf32> to vector<1x16x16xf32>
    %38 = vector.shape_cast %37 : vector<1x16x16xf32> to vector<16x16xf32>
    %cst_20 = arith.constant dense<0.000000e+00> : vector<128x16xf32>
    %39 = tpu.matmul %36, %38, %cst_20 {dimension_numbers = #tpu.dot_dimension_numbers<[1], [0], [0], [1], [0, 0, 1, 1], [], []>} : vector<128x16xf32>, vector<16x16xf32>, vector<128x16xf32> -> vector<128x16xf32>
    %40 = arith.addf %30, %39 : vector<128x16xf32>
    %41 = vector.extract_strided_slice %34 {offsets = [0, 1, 0, 0], sizes = [2, 8, 8, 16], strides = [1, 1, 1, 1]} : vector<2x9x9x16xf32> to vector<2x8x8x16xf32>
    %42 = vector.shape_cast %41 : vector<2x8x8x16xf32> to vector<128x16xf32>
    %43 = vector.extract_strided_slice %0 {offsets = [7, 0, 0], sizes = [1, 16, 16], strides = [1, 1, 1]} : vector<9x16x16xf32> to vector<1x16x16xf32>
    %44 = vector.shape_cast %43 : vector<1x16x16xf32> to vector<16x16xf32>
    %cst_21 = arith.constant dense<0.000000e+00> : vector<128x16xf32>
    %45 = tpu.matmul %42, %44, %cst_21 {dimension_numbers = #tpu.dot_dimension_numbers<[1], [0], [0], [1], [0, 0, 1, 1], [], []>} : vector<128x16xf32>, vector<16x16xf32>, vector<128x16xf32> -> vector<128x16xf32>
    %46 = arith.addf %40, %45 : vector<128x16xf32>
    %c2 = arith.constant 2 : index
    %c0_22 = arith.constant 0 : index
    %c0_23 = arith.constant 0 : index
    %c0_24 = arith.constant 0 : index
    %c0_25 = arith.constant 0 : index
    %47 = vector.load %arg1[%c2, %c0_22, %c0_23, %c0_24, %c0_25] : memref<4x2x9x9x16xf32, #tpu.memory_space<vmem>>, vector<1x2x9x9x16xf32>
    %48 = vector.shape_cast %47 : vector<1x2x9x9x16xf32> to vector<2x9x9x16xf32>
    %cst_26 = arith.constant 0.000000e+00 : f32
    %49 = vector.broadcast %cst_26 : f32 to vector<2x9x9x16xf32>
    %50 = arith.maximumf %48, %49 : vector<2x9x9x16xf32>
    %51 = vector.extract_strided_slice %50 {offsets = [0, 0, 0, 0], sizes = [2, 8, 8, 16], strides = [1, 1, 1, 1]} : vector<2x9x9x16xf32> to vector<2x8x8x16xf32>
    %52 = vector.shape_cast %51 : vector<2x8x8x16xf32> to vector<128x16xf32>
    %53 = vector.extract_strided_slice %0 {offsets = [3, 0, 0], sizes = [1, 16, 16], strides = [1, 1, 1]} : vector<9x16x16xf32> to vector<1x16x16xf32>
    %54 = vector.shape_cast %53 : vector<1x16x16xf32> to vector<16x16xf32>
    %cst_27 = arith.constant dense<0.000000e+00> : vector<128x16xf32>
    %55 = tpu.matmul %52, %54, %cst_27 {dimension_numbers = #tpu.dot_dimension_numbers<[1], [0], [0], [1], [0, 0, 1, 1], [], []>} : vector<128x16xf32>, vector<16x16xf32>, vector<128x16xf32> -> vector<128x16xf32>
    %56 = arith.addf %46, %55 : vector<128x16xf32>
    %57 = vector.extract_strided_slice %50 {offsets = [0, 0, 1, 0], sizes = [2, 8, 8, 16], strides = [1, 1, 1, 1]} : vector<2x9x9x16xf32> to vector<2x8x8x16xf32>
    %58 = vector.shape_cast %57 : vector<2x8x8x16xf32> to vector<128x16xf32>
    %59 = vector.extract_strided_slice %0 {offsets = [5, 0, 0], sizes = [1, 16, 16], strides = [1, 1, 1]} : vector<9x16x16xf32> to vector<1x16x16xf32>
    %60 = vector.shape_cast %59 : vector<1x16x16xf32> to vector<16x16xf32>
    %cst_28 = arith.constant dense<0.000000e+00> : vector<128x16xf32>
    %61 = tpu.matmul %58, %60, %cst_28 {dimension_numbers = #tpu.dot_dimension_numbers<[1], [0], [0], [1], [0, 0, 1, 1], [], []>} : vector<128x16xf32>, vector<16x16xf32>, vector<128x16xf32> -> vector<128x16xf32>
    %62 = arith.addf %56, %61 : vector<128x16xf32>
    %c3 = arith.constant 3 : index
    %c0_29 = arith.constant 0 : index
    %c0_30 = arith.constant 0 : index
    %c0_31 = arith.constant 0 : index
    %c0_32 = arith.constant 0 : index
    %63 = vector.load %arg1[%c3, %c0_29, %c0_30, %c0_31, %c0_32] : memref<4x2x9x9x16xf32, #tpu.memory_space<vmem>>, vector<1x2x9x9x16xf32>
    %64 = vector.shape_cast %63 : vector<1x2x9x9x16xf32> to vector<2x9x9x16xf32>
    %cst_33 = arith.constant 0.000000e+00 : f32
    %65 = vector.broadcast %cst_33 : f32 to vector<2x9x9x16xf32>
    %66 = arith.maximumf %64, %65 : vector<2x9x9x16xf32>
    %67 = vector.extract_strided_slice %66 {offsets = [0, 0, 0, 0], sizes = [2, 8, 8, 16], strides = [1, 1, 1, 1]} : vector<2x9x9x16xf32> to vector<2x8x8x16xf32>
    %68 = vector.shape_cast %67 : vector<2x8x8x16xf32> to vector<128x16xf32>
    %69 = vector.extract_strided_slice %0 {offsets = [4, 0, 0], sizes = [1, 16, 16], strides = [1, 1, 1]} : vector<9x16x16xf32> to vector<1x16x16xf32>
    %70 = vector.shape_cast %69 : vector<1x16x16xf32> to vector<16x16xf32>
    %cst_34 = arith.constant dense<0.000000e+00> : vector<128x16xf32>
    %71 = tpu.matmul %68, %70, %cst_34 {dimension_numbers = #tpu.dot_dimension_numbers<[1], [0], [0], [1], [0, 0, 1, 1], [], []>} : vector<128x16xf32>, vector<16x16xf32>, vector<128x16xf32> -> vector<128x16xf32>
    %72 = arith.addf %62, %71 : vector<128x16xf32>
    %c0_35 = arith.constant 0 : index
    %c0_36 = arith.constant 0 : index
    %73 = vector.load %arg3[%c0_35, %c0_36] : memref<1x16xf32, #tpu.memory_space<vmem>>, vector<1x16xf32>
    %74 = vector.broadcast %73 : vector<1x16xf32> to vector<128x16xf32>
    %75 = arith.addf %72, %74 : vector<128x16xf32>
    %cst_37 = arith.constant 0.000000e+00 : f32
    %76 = vector.broadcast %cst_37 : f32 to vector<2x1x10x16xf32>
    %cst_38 = arith.constant 0.000000e+00 : f32
    %77 = vector.broadcast %cst_38 : f32 to vector<2x10x1x16xf32>
    %c0_39 = arith.constant 0 : index
    %c0_40 = arith.constant 0 : index
    %c0_41 = arith.constant 0 : index
    %c0_42 = arith.constant 0 : index
    %78 = vector.load %arg7[%c0_39, %c0_40, %c0_41, %c0_42] : memref<2x10x10x16xf32, #tpu.memory_space<vmem>>, vector<2x1x10x16xf32>
    tpu.vector_store %arg7[%c0_39, %c0_40, %c0_41, %c0_42], %76 {strides = array<i32>} : memref<2x10x10x16xf32, #tpu.memory_space<vmem>>, vector<2x1x10x16xf32>,
    %c0_43 = arith.constant 0 : index
    %c9 = arith.constant 9 : index
    %c0_44 = arith.constant 0 : index
    %c0_45 = arith.constant 0 : index
    %79 = vector.load %arg7[%c0_43, %c9, %c0_44, %c0_45] : memref<2x10x10x16xf32, #tpu.memory_space<vmem>>, vector<2x1x10x16xf32>
    tpu.vector_store %arg7[%c0_43, %c9, %c0_44, %c0_45], %76 {strides = array<i32>} : memref<2x10x10x16xf32, #tpu.memory_space<vmem>>, vector<2x1x10x16xf32>,
    %c0_46 = arith.constant 0 : index
    %c0_47 = arith.constant 0 : index
    %c0_48 = arith.constant 0 : index
    %c0_49 = arith.constant 0 : index
    %80 = vector.load %arg7[%c0_46, %c0_47, %c0_48, %c0_49] : memref<2x10x10x16xf32, #tpu.memory_space<vmem>>, vector<2x10x1x16xf32>
    tpu.vector_store %arg7[%c0_46, %c0_47, %c0_48, %c0_49], %77 {strides = array<i32>} : memref<2x10x10x16xf32, #tpu.memory_space<vmem>>, vector<2x10x1x16xf32>,
    %c0_50 = arith.constant 0 : index
    %c0_51 = arith.constant 0 : index
    %c9_52 = arith.constant 9 : index
    %c0_53 = arith.constant 0 : index
    %81 = vector.load %arg7[%c0_50, %c0_51, %c9_52, %c0_53] : memref<2x10x10x16xf32, #tpu.memory_space<vmem>>, vector<2x10x1x16xf32>
    tpu.vector_store %arg7[%c0_50, %c0_51, %c9_52, %c0_53], %77 {strides = array<i32>} : memref<2x10x10x16xf32, #tpu.memory_space<vmem>>, vector<2x10x1x16xf32>,
    %cst_54 = arith.constant 0.000000e+00 : f32
    %82 = vector.broadcast %cst_54 : f32 to vector<128x16xf32>
    %83 = arith.maximumf %75, %82 : vector<128x16xf32>
    %84 = vector.shape_cast %83 : vector<128x16xf32> to vector<2x8x8x16xf32>
    %c0_55 = arith.constant 0 : index
    %c1_56 = arith.constant 1 : index
    %c1_57 = arith.constant 1 : index
    %c0_58 = arith.constant 0 : index
    %85 = vector.load %arg7[%c0_55, %c1_56, %c1_57, %c0_58] : memref<2x10x10x16xf32, #tpu.memory_space<vmem>>, vector<2x8x8x16xf32>
    tpu.vector_store %arg7[%c0_55, %c1_56, %c1_57, %c0_58], %84 {strides = array<i32>} : memref<2x10x10x16xf32, #tpu.memory_space<vmem>>, vector<2x8x8x16xf32>,
    %cst_59 = arith.constant 0.000000e+00 : f32
    %86 = vector.broadcast %cst_59 : f32 to vector<128x32xf32>
    %c0_60 = arith.constant 0 : index
    %c0_61 = arith.constant 0 : index
    %c0_62 = arith.constant 0 : index
    %c0_63 = arith.constant 0 : index
    %87 = vector.load %arg7[%c0_60, %c0_61, %c0_62, %c0_63] : memref<2x10x10x16xf32, #tpu.memory_space<vmem>>, vector<2x8x8x16xf32>
    %88 = vector.shape_cast %87 : vector<2x8x8x16xf32> to vector<128x16xf32>
    %89 = vector.extract_strided_slice %1 {offsets = [0, 0, 0], sizes = [1, 16, 32], strides = [1, 1, 1]} : vector<9x16x32xf32> to vector<1x16x32xf32>
    %90 = vector.shape_cast %89 : vector<1x16x32xf32> to vector<16x32xf32>
    %cst_64 = arith.constant dense<0.000000e+00> : vector<128x32xf32>
    %91 = tpu.matmul %88, %90, %cst_64 {dimension_numbers = #tpu.dot_dimension_numbers<[1], [0], [0], [1], [0, 0, 1, 1], [], []>} : vector<128x16xf32>, vector<16x32xf32>, vector<128x32xf32> -> vector<128x32xf32>
    %92 = arith.addf %86, %91 : vector<128x32xf32>
    %c0_65 = arith.constant 0 : index
    %c0_66 = arith.constant 0 : index
    %c1_67 = arith.constant 1 : index
    %c0_68 = arith.constant 0 : index
    %93 = vector.load %arg7[%c0_65, %c0_66, %c1_67, %c0_68] : memref<2x10x10x16xf32, #tpu.memory_space<vmem>>, vector<2x8x8x16xf32>
    %94 = vector.shape_cast %93 : vector<2x8x8x16xf32> to vector<128x16xf32>
    %95 = vector.extract_strided_slice %1 {offsets = [1, 0, 0], sizes = [1, 16, 32], strides = [1, 1, 1]} : vector<9x16x32xf32> to vector<1x16x32xf32>
    %96 = vector.shape_cast %95 : vector<1x16x32xf32> to vector<16x32xf32>
    %cst_69 = arith.constant dense<0.000000e+00> : vector<128x32xf32>
    %97 = tpu.matmul %94, %96, %cst_69 {dimension_numbers = #tpu.dot_dimension_numbers<[1], [0], [0], [1], [0, 0, 1, 1], [], []>} : vector<128x16xf32>, vector<16x32xf32>, vector<128x32xf32> -> vector<128x32xf32>
    %98 = arith.addf %92, %97 : vector<128x32xf32>
    %c0_70 = arith.constant 0 : index
    %c0_71 = arith.constant 0 : index
    %c2_72 = arith.constant 2 : index
    %c0_73 = arith.constant 0 : index
    %99 = vector.load %arg7[%c0_70, %c0_71, %c2_72, %c0_73] : memref<2x10x10x16xf32, #tpu.memory_space<vmem>>, vector<2x8x8x16xf32>
    %100 = vector.shape_cast %99 : vector<2x8x8x16xf32> to vector<128x16xf32>
    %101 = vector.extract_strided_slice %1 {offsets = [2, 0, 0], sizes = [1, 16, 32], strides = [1, 1, 1]} : vector<9x16x32xf32> to vector<1x16x32xf32>
    %102 = vector.shape_cast %101 : vector<1x16x32xf32> to vector<16x32xf32>
    %cst_74 = arith.constant dense<0.000000e+00> : vector<128x32xf32>
    %103 = tpu.matmul %100, %102, %cst_74 {dimension_numbers = #tpu.dot_dimension_numbers<[1], [0], [0], [1], [0, 0, 1, 1], [], []>} : vector<128x16xf32>, vector<16x32xf32>, vector<128x32xf32> -> vector<128x32xf32>
    %104 = arith.addf %98, %103 : vector<128x32xf32>
    %c0_75 = arith.constant 0 : index
    %c1_76 = arith.constant 1 : index
    %c0_77 = arith.constant 0 : index
    %c0_78 = arith.constant 0 : index
    %105 = vector.load %arg7[%c0_75, %c1_76, %c0_77, %c0_78] : memref<2x10x10x16xf32, #tpu.memory_space<vmem>>, vector<2x8x8x16xf32>
    %106 = vector.shape_cast %105 : vector<2x8x8x16xf32> to vector<128x16xf32>
    %107 = vector.extract_strided_slice %1 {offsets = [3, 0, 0], sizes = [1, 16, 32], strides = [1, 1, 1]} : vector<9x16x32xf32> to vector<1x16x32xf32>
    %108 = vector.shape_cast %107 : vector<1x16x32xf32> to vector<16x32xf32>
    %cst_79 = arith.constant dense<0.000000e+00> : vector<128x32xf32>
    %109 = tpu.matmul %106, %108, %cst_79 {dimension_numbers = #tpu.dot_dimension_numbers<[1], [0], [0], [1], [0, 0, 1, 1], [], []>} : vector<128x16xf32>, vector<16x32xf32>, vector<128x32xf32> -> vector<128x32xf32>
    %110 = arith.addf %104, %109 : vector<128x32xf32>
    %c0_80 = arith.constant 0 : index
    %c1_81 = arith.constant 1 : index
    %c1_82 = arith.constant 1 : index
    %c0_83 = arith.constant 0 : index
    %111 = vector.load %arg7[%c0_80, %c1_81, %c1_82, %c0_83] : memref<2x10x10x16xf32, #tpu.memory_space<vmem>>, vector<2x8x8x16xf32>
    %112 = vector.shape_cast %111 : vector<2x8x8x16xf32> to vector<128x16xf32>
    %113 = vector.extract_strided_slice %1 {offsets = [4, 0, 0], sizes = [1, 16, 32], strides = [1, 1, 1]} : vector<9x16x32xf32> to vector<1x16x32xf32>
    %114 = vector.shape_cast %113 : vector<1x16x32xf32> to vector<16x32xf32>
    %cst_84 = arith.constant dense<0.000000e+00> : vector<128x32xf32>
    %115 = tpu.matmul %112, %114, %cst_84 {dimension_numbers = #tpu.dot_dimension_numbers<[1], [0], [0], [1], [0, 0, 1, 1], [], []>} : vector<128x16xf32>, vector<16x32xf32>, vector<128x32xf32> -> vector<128x32xf32>
    %116 = arith.addf %110, %115 : vector<128x32xf32>
    %c0_85 = arith.constant 0 : index
    %c1_86 = arith.constant 1 : index
    %c2_87 = arith.constant 2 : index
    %c0_88 = arith.constant 0 : index
    %117 = vector.load %arg7[%c0_85, %c1_86, %c2_87, %c0_88] : memref<2x10x10x16xf32, #tpu.memory_space<vmem>>, vector<2x8x8x16xf32>
    %118 = vector.shape_cast %117 : vector<2x8x8x16xf32> to vector<128x16xf32>
    %119 = vector.extract_strided_slice %1 {offsets = [5, 0, 0], sizes = [1, 16, 32], strides = [1, 1, 1]} : vector<9x16x32xf32> to vector<1x16x32xf32>
    %120 = vector.shape_cast %119 : vector<1x16x32xf32> to vector<16x32xf32>
    %cst_89 = arith.constant dense<0.000000e+00> : vector<128x32xf32>
    %121 = tpu.matmul %118, %120, %cst_89 {dimension_numbers = #tpu.dot_dimension_numbers<[1], [0], [0], [1], [0, 0, 1, 1], [], []>} : vector<128x16xf32>, vector<16x32xf32>, vector<128x32xf32> -> vector<128x32xf32>
    %122 = arith.addf %116, %121 : vector<128x32xf32>
    %c0_90 = arith.constant 0 : index
    %c2_91 = arith.constant 2 : index
    %c0_92 = arith.constant 0 : index
    %c0_93 = arith.constant 0 : index
    %123 = vector.load %arg7[%c0_90, %c2_91, %c0_92, %c0_93] : memref<2x10x10x16xf32, #tpu.memory_space<vmem>>, vector<2x8x8x16xf32>
    %124 = vector.shape_cast %123 : vector<2x8x8x16xf32> to vector<128x16xf32>
    %125 = vector.extract_strided_slice %1 {offsets = [6, 0, 0], sizes = [1, 16, 32], strides = [1, 1, 1]} : vector<9x16x32xf32> to vector<1x16x32xf32>
    %126 = vector.shape_cast %125 : vector<1x16x32xf32> to vector<16x32xf32>
    %cst_94 = arith.constant dense<0.000000e+00> : vector<128x32xf32>
    %127 = tpu.matmul %124, %126, %cst_94 {dimension_numbers = #tpu.dot_dimension_numbers<[1], [0], [0], [1], [0, 0, 1, 1], [], []>} : vector<128x16xf32>, vector<16x32xf32>, vector<128x32xf32> -> vector<128x32xf32>
    %128 = arith.addf %122, %127 : vector<128x32xf32>
    %c0_95 = arith.constant 0 : index
    %c2_96 = arith.constant 2 : index
    %c1_97 = arith.constant 1 : index
    %c0_98 = arith.constant 0 : index
    %129 = vector.load %arg7[%c0_95, %c2_96, %c1_97, %c0_98] : memref<2x10x10x16xf32, #tpu.memory_space<vmem>>, vector<2x8x8x16xf32>
    %130 = vector.shape_cast %129 : vector<2x8x8x16xf32> to vector<128x16xf32>
    %131 = vector.extract_strided_slice %1 {offsets = [7, 0, 0], sizes = [1, 16, 32], strides = [1, 1, 1]} : vector<9x16x32xf32> to vector<1x16x32xf32>
    %132 = vector.shape_cast %131 : vector<1x16x32xf32> to vector<16x32xf32>
    %cst_99 = arith.constant dense<0.000000e+00> : vector<128x32xf32>
    %133 = tpu.matmul %130, %132, %cst_99 {dimension_numbers = #tpu.dot_dimension_numbers<[1], [0], [0], [1], [0, 0, 1, 1], [], []>} : vector<128x16xf32>, vector<16x32xf32>, vector<128x32xf32> -> vector<128x32xf32>
    %134 = arith.addf %128, %133 : vector<128x32xf32>
    %c0_100 = arith.constant 0 : index
    %c2_101 = arith.constant 2 : index
    %c2_102 = arith.constant 2 : index
    %c0_103 = arith.constant 0 : index
    %135 = vector.load %arg7[%c0_100, %c2_101, %c2_102, %c0_103] : memref<2x10x10x16xf32, #tpu.memory_space<vmem>>, vector<2x8x8x16xf32>
    %136 = vector.shape_cast %135 : vector<2x8x8x16xf32> to vector<128x16xf32>
    %137 = vector.extract_strided_slice %1 {offsets = [8, 0, 0], sizes = [1, 16, 32], strides = [1, 1, 1]} : vector<9x16x32xf32> to vector<1x16x32xf32>
    %138 = vector.shape_cast %137 : vector<1x16x32xf32> to vector<16x32xf32>
    %cst_104 = arith.constant dense<0.000000e+00> : vector<128x32xf32>
    %139 = tpu.matmul %136, %138, %cst_104 {dimension_numbers = #tpu.dot_dimension_numbers<[1], [0], [0], [1], [0, 0, 1, 1], [], []>} : vector<128x16xf32>, vector<16x32xf32>, vector<128x32xf32> -> vector<128x32xf32>
    %140 = arith.addf %134, %139 : vector<128x32xf32>
    %c0_105 = arith.constant 0 : index
    %c0_106 = arith.constant 0 : index
    %141 = vector.load %arg5[%c0_105, %c0_106] : memref<1x32xf32, #tpu.memory_space<vmem>>, vector<1x32xf32>
    %142 = vector.broadcast %141 : vector<1x32xf32> to vector<128x32xf32>
    %143 = arith.addf %140, %142 : vector<128x32xf32>
    %c0_107 = arith.constant 0 : index
    %c0_108 = arith.constant 0 : index
    %144 = vector.load %arg6[%c0_107, %c0_108] : memref<128x32xf32, #tpu.memory_space<vmem>>, vector<128x32xf32>
    tpu.vector_store %arg6[%c0_107, %c0_108], %143 {strides = array<i32>} : memref<128x32xf32, #tpu.memory_space<vmem>>, vector<128x32xf32>,
    return
  }
  func.func @transform_0(%arg0: i32) -> (i32, i32, i32, i32, i32) {
    %c0_i32 = arith.constant 0 : i32
    %c0_i32_0 = arith.constant 0 : i32
    %c0_i32_1 = arith.constant 0 : i32
    %c0_i32_2 = arith.constant 0 : i32
    %c0_i32_3 = arith.constant 0 : i32
    return %c0_i32, %arg0, %c0_i32_0, %c0_i32_1, %c0_i32_2 : i32, i32, i32, i32, i32
  }
  func.func @transform_1(%arg0: i32) -> (i32, i32, i32) {
    %c0_i32 = arith.constant 0 : i32
    %c0_i32_0 = arith.constant 0 : i32
    %c0_i32_1 = arith.constant 0 : i32
    %c0_i32_2 = arith.constant 0 : i32
    return %c0_i32, %c0_i32_0, %c0_i32_1 : i32, i32, i32
  }
  func.func @transform_2(%arg0: i32) -> (i32, i32) {
    %c0_i32 = arith.constant 0 : i32
    %c0_i32_0 = arith.constant 0 : i32
    %c0_i32_1 = arith.constant 0 : i32
    return %c0_i32, %c0_i32_0 : i32, i32
  }
  func.func @transform_3(%arg0: i32) -> (i32, i32, i32) {
    %c0_i32 = arith.constant 0 : i32
    %c0_i32_0 = arith.constant 0 : i32
    %c0_i32_1 = arith.constant 0 : i32
    %c0_i32_2 = arith.constant 0 : i32
    return %c0_i32, %c0_i32_0, %c0_i32_1 : i32, i32, i32
  }
  func.func @transform_4(%arg0: i32) -> (i32, i32) {
    %c0_i32 = arith.constant 0 : i32
    %c0_i32_0 = arith.constant 0 : i32
    %c0_i32_1 = arith.constant 0 : i32
    return %c0_i32, %c0_i32_0 : i32, i32
  }
  func.func @transform_5(%arg0: i32) -> (i32, i32) {
    %c0_i32 = arith.constant 0 : i32
    %c0_i32_0 = arith.constant 0 : i32
    return %arg0, %c0_i32 : i32, i32
  }
}

</mosaic_0001>

<llo_original>
// kernel: dual_sep_conv.1
$region0: #{dual_sep_conv.1}
  #allocation0 [shape = 'u32[]', space=smem, size = 0x4, offset = 0x4, fixed_abs, tag = 'smem constant byte address 0x4 - core index']
  #allocation1 [shape = 'u32[144,128]{1,0:T(1,128)}', space=vmem, size = 0x12000, scoped, tag = 'internal scratch']
  #allocation2 [shape = 'f32[2,10,10,16]{3,2,1,0:T(8,128)}', space=vmem, size = 0x28000, scoped, tag = 'scratch operand']
  %s0 = inlined_call_operand.vmem [shape: f32[4,2,9,9,16], index: 0, kind: input, shape index: {}]
  %s1 = inlined_call_operand.vmem [shape: f32[9,16,16], index: 1, kind: input, shape index: {}]
  %s2 = inlined_call_operand.vmem [shape: f32[1,16], index: 2, kind: input, shape index: {}]
  %s3 = inlined_call_operand.vmem [shape: f32[9,16,32], index: 3, kind: input, shape index: {}]
  %s4 = inlined_call_operand.vmem [shape: f32[1,32], index: 4, kind: input, shape index: {}]
  %s5 = inlined_call_operand.hbm [shape: f32[128,32], index: 5, kind: output, shape index: {}]
  %s6 = sld [smem:[#allocation0]]
  $region30: #{dual_sep_conv.1} parent=0
    _
  %s8 = ssub.s32 1, %s6
  %s9 = scalar_select 0, %s8, %s6
  $region1: #{dual_sep_conv.1} parent=0
    #allocation3 [shape = 'u8[65536]{0}', space=vmem, size = 0x10000, scoped, tag = 'output window, operand 0, single buffered']
    #allocation4 [shape = 's32[1]{0}', space=sflag, size = 0x4, scoped, tag = 'scoped memory for dual_sep_conv.1']
    %10 = vsyncpa [#allocation4], 0
    // Predicated region
    $region2: #{dual_sep_conv.1} parent=1 // pred_check
      _
    $region3: #{dual_sep_conv.1} parent=1 // pred_check_branch
      %12 = sbr.rel (0) target = $region5
    $region4: #{dual_sep_conv.1} parent=1 // pred_region
      _
    $region5: #{dual_sep_conv.1} parent=1 // pred_fallthru
      _
    // Predicated region
    $region6: #{dual_sep_conv.1} parent=1 // pred_check
      _
    $region7: #{dual_sep_conv.1} parent=1 // pred_check_branch
      %14 = sbr.rel (0) target = $region9
    $region8: #{dual_sep_conv.1} parent=1 // pred_region
      _
    $region9: #{dual_sep_conv.1} parent=1 // pred_fallthru
      _
    // Predicated region
    $region10: #{dual_sep_conv.1} parent=1 // pred_check
      _
    $region11: #{dual_sep_conv.1} parent=1 // pred_check_branch
      %16 = sbr.rel (0) target = $region13
    $region12: #{dual_sep_conv.1} parent=1 // pred_region
      _
    $region13: #{dual_sep_conv.1} parent=1 // pred_fallthru
      _
    // Predicated region
    $region14: #{dual_sep_conv.1} parent=1 // pred_check
      _
    $region15: #{dual_sep_conv.1} parent=1 // pred_check_branch
      %18 = sbr.rel (0) target = $region17
    $region16: #{dual_sep_conv.1} parent=1 // pred_region
      _
    $region17: #{dual_sep_conv.1} parent=1 // pred_fallthru
      _
    // Predicated region
    $region18: #{dual_sep_conv.1} parent=1 // pred_check
      _
    $region19: #{dual_sep_conv.1} parent=1 // pred_check_branch
      %20 = sbr.rel (0) target = $region21
    $region20: #{dual_sep_conv.1} parent=1 // pred_region
      _
    $region21: #{dual_sep_conv.1} parent=1 // pred_fallthru
      _
    %v21 = vld [vmem:[%s1] sm:$0xff]
    %v22 = vld [vmem:[%s1 + $0x8] sm:$0xff]
    %v23 = vld [vmem:[%s1 + $0x10] sm:$0xff]
    %v24 = vld [vmem:[%s1 + $0x18] sm:$0xff]
    %v25 = vld [vmem:[%s1 + $0x20] sm:$0xff]
    %v26 = vld [vmem:[%s1 + $0x28] sm:$0xff]
    %v27 = vld [vmem:[%s1 + $0x30] sm:$0xff]
    %v28 = vld [vmem:[%s1 + $0x38] sm:$0xff]
    %v29 = vld [vmem:[%s1 + $0x40] sm:$0xff]
    %v30 = vld [vmem:[%s1 + $0x48] sm:$0xff]
    %v31 = vld [vmem:[%s1 + $0x50] sm:$0xff]
    %v32 = vld [vmem:[%s1 + $0x58] sm:$0xff]
    %v33 = vld [vmem:[%s1 + $0x60] sm:$0xff]
    %v34 = vld [vmem:[%s1 + $0x68] sm:$0xff]
    %v35 = vld [vmem:[%s1 + $0x70] sm:$0xff]
    %v36 = vld [vmem:[%s1 + $0x78] sm:$0xff]
    %v37 = vld [vmem:[%s1 + $0x80] sm:$0xff]
    %v38 = vld [vmem:[%s1 + $0x88] sm:$0xff]
    %v39 = vld [vmem:[%s3] sm:$0xff]
    %v40 = vld [vmem:[%s3 + $0x8] sm:$0xff]
    %v41 = vld [vmem:[%s3 + $0x10] sm:$0xff]
    %v42 = vld [vmem:[%s3 + $0x18] sm:$0xff]
    %v43 = vld [vmem:[%s3 + $0x20] sm:$0xff]
    %v44 = vld [vmem:[%s3 + $0x28] sm:$0xff]
    %v45 = vld [vmem:[%s3 + $0x30] sm:$0xff]
    %v46 = vld [vmem:[%s3 + $0x38] sm:$0xff]
    %v47 = vld [vmem:[%s3 + $0x40] sm:$0xff]
    %v48 = vld [vmem:[%s3 + $0x48] sm:$0xff]
    %v49 = vld [vmem:[%s3 + $0x50] sm:$0xff]
    %v50 = vld [vmem:[%s3 + $0x58] sm:$0xff]
    %v51 = vld [vmem:[%s3 + $0x60] sm:$0xff]
    %v52 = vld [vmem:[%s3 + $0x68] sm:$0xff]
    %v53 = vld [vmem:[%s3 + $0x70] sm:$0xff]
    %v54 = vld [vmem:[%s3 + $0x78] sm:$0xff]
    %v55 = vld [vmem:[%s3 + $0x80] sm:$0xff]
    %v56 = vld [vmem:[%s3 + $0x88] sm:$0xff]
    %v57 = vld [vmem:[%s0] sm:$0xff]
    %v58 = vld [vmem:[%s0 + $0x8] sm:$0x1]
    %v59 = vld [vmem:[%s0 + $0x10] sm:$0xff]
    %v60 = vld [vmem:[%s0 + $0x18] sm:$0x1]
    %v61 = vld [vmem:[%s0 + $0x20] sm:$0xff]
    %v62 = vld [vmem:[%s0 + $0x28] sm:$0x1]
    %v63 = vld [vmem:[%s0 + $0x30] sm:$0xff]
    %v64 = vld [vmem:[%s0 + $0x38] sm:$0x1]
    %v65 = vld [vmem:[%s0 + $0x40] sm:$0xff]
    %v66 = vld [vmem:[%s0 + $0x48] sm:$0x1]
    %v67 = vld [vmem:[%s0 + $0x50] sm:$0xff]
    %v68 = vld [vmem:[%s0 + $0x58] sm:$0x1]
    %v69 = vld [vmem:[%s0 + $0x60] sm:$0xff]
    %v70 = vld [vmem:[%s0 + $0x68] sm:$0x1]
    %v71 = vld [vmem:[%s0 + $0x70] sm:$0xff]
    %v72 = vld [vmem:[%s0 + $0x78] sm:$0x1]
    %v73 = vld [vmem:[%s0 + $0x80] sm:$0xff]
    %v74 = vld [vmem:[%s0 + $0x88] sm:$0x1]
    %v75 = vld [vmem:[%s0 + $0x90] sm:$0xff]
    %v76 = vld [vmem:[%s0 + $0x98] sm:$0x1]
    %v77 = vld [vmem:[%s0 + $0xa0] sm:$0xff]
    %v78 = vld [vmem:[%s0 + $0xa8] sm:$0x1]
    %v79 = vld [vmem:[%s0 + $0xb0] sm:$0xff]
    %v80 = vld [vmem:[%s0 + $0xb8] sm:$0x1]
    %v81 = vld [vmem:[%s0 + $0xc0] sm:$0xff]
    %v82 = vld [vmem:[%s0 + $0xc8] sm:$0x1]
    %v83 = vld [vmem:[%s0 + $0xd0] sm:$0xff]
    %v84 = vld [vmem:[%s0 + $0xd8] sm:$0x1]
    %v85 = vld [vmem:[%s0 + $0xe0] sm:$0xff]
    %v86 = vld [vmem:[%s0 + $0xe8] sm:$0x1]
    %v87 = vld [vmem:[%s0 + $0xf0] sm:$0xff]
    %v88 = vld [vmem:[%s0 + $0xf8] sm:$0x1]
    %v89 = vld [vmem:[%s0 + $0x100] sm:$0xff]
    %v90 = vld [vmem:[%s0 + $0x108] sm:$0x1]
    %v91 = vld [vmem:[%s0 + $0x110] sm:$0xff]
    %v92 = vld [vmem:[%s0 + $0x118] sm:$0x1]
    %v93 = vmax.f32 %v57, 0.0
    %v94 = vmax.f32 %v58, 0.0
    %v95 = vmax.f32 %v59, 0.0
    %v96 = vmax.f32 %v60, 0.0
    %v97 = vmax.f32 %v61, 0.0
    %v98 = vmax.f32 %v62, 0.0
    %v99 = vmax.f32 %v63, 0.0
    %v100 = vmax.f32 %v64, 0.0
    %v101 = vmax.f32 %v65, 0.0
    %v102 = vmax.f32 %v66, 0.0
    %v103 = vmax.f32 %v67, 0.0
    %v104 = vmax.f32 %v68, 0.0
    %v105 = vmax.f32 %v69, 0.0
    %v106 = vmax.f32 %v70, 0.0
    %v107 = vmax.f32 %v71, 0.0
    %v108 = vmax.f32 %v72, 0.0
    %v109 = vmax.f32 %v73, 0.0
    %v110 = vmax.f32 %v74, 0.0
    %v111 = vmax.f32 %v75, 0.0
    %v112 = vmax.f32 %v76, 0.0
    %v113 = vmax.f32 %v77, 0.0
    %v114 = vmax.f32 %v78, 0.0
    %v115 = vmax.f32 %v79, 0.0
    %v116 = vmax.f32 %v80, 0.0
    %v117 = vmax.f32 %v81, 0.0
    %v118 = vmax.f32 %v82, 0.0
    %v119 = vmax.f32 %v83, 0.0
    %v120 = vmax.f32 %v84, 0.0
    %v121 = vmax.f32 %v85, 0.0
    %v122 = vmax.f32 %v86, 0.0
    %v123 = vmax.f32 %v87, 0.0
    %v124 = vmax.f32 %v88, 0.0
    %v125 = vmax.f32 %v89, 0.0
    %v126 = vmax.f32 %v90, 0.0
    %v127 = vmax.f32 %v91, 0.0
    %v128 = vmax.f32 %v92, 0.0
    %vm161 = vcmask 1046528
    %v162 = vrot.slane %v93, 1
    %v163 = vrot.slane %v94, 1
    %v164 = vsel %vm161, %v162, %v163
    %v165 = vrot.slane %v95, 1
    %v166 = vrot.slane %v96, 1
    %v167 = vsel %vm161, %v165, %v166
    %v168 = vrot.slane %v97, 1
    %v169 = vrot.slane %v98, 1
    %v170 = vsel %vm161, %v168, %v169
    %v171 = vrot.slane %v99, 1
    %v172 = vrot.slane %v100, 1
    %v173 = vsel %vm161, %v171, %v172
    %v174 = vrot.slane %v101, 1
    %v175 = vrot.slane %v102, 1
    %v176 = vsel %vm161, %v174, %v175
    %v177 = vrot.slane %v103, 1
    %v178 = vrot.slane %v104, 1
    %v179 = vsel %vm161, %v177, %v178
    %v180 = vrot.slane %v105, 1
    %v181 = vrot.slane %v106, 1
    %v182 = vsel %vm161, %v180, %v181
    %v183 = vrot.slane %v107, 1
    %v184 = vrot.slane %v108, 1
    %v185 = vsel %vm161, %v183, %v184
    %v186 = vrot.slane %v111, 1
    %v187 = vrot.slane %v112, 1
    %v188 = vsel %vm161, %v186, %v187
    %v189 = vrot.slane %v113, 1
    %v190 = vrot.slane %v114, 1
    %v191 = vsel %vm161, %v189, %v190
    %v192 = vrot.slane %v115, 1
    %v193 = vrot.slane %v116, 1
    %v194 = vsel %vm161, %v192, %v193
    %v195 = vrot.slane %v117, 1
    %v196 = vrot.slane %v118, 1
    %v197 = vsel %vm161, %v195, %v196
    %v198 = vrot.slane %v119, 1
    %v199 = vrot.slane %v120, 1
    %v200 = vsel %vm161, %v198, %v199
    %v201 = vrot.slane %v121, 1
    %v202 = vrot.slane %v122, 1
    %v203 = vsel %vm161, %v201, %v202
    %v204 = vrot.slane %v123, 1
    %v205 = vrot.slane %v124, 1
    %v206 = vsel %vm161, %v204, %v205
    %v207 = vrot.slane %v125, 1
    %v208 = vrot.slane %v126, 1
    %v209 = vsel %vm161, %v207, %v208
    %vm210 = vcmask 130048
    %v211 = vsel %vm210, %v164, 0
    %v213 = vsel %vm210, %v167, 0
    %v215 = vsel %vm210, %v170, 0
    %v217 = vsel %vm210, %v173, 0
    %v219 = vsel %vm210, %v176, 0
    %v221 = vsel %vm210, %v179, 0
    %v223 = vsel %vm210, %v182, 0
    %v225 = vsel %vm210, %v185, 0
    %v227 = vsel %vm210, %v188, 0
    %v229 = vsel %vm210, %v191, 0
    %v231 = vsel %vm210, %v194, 0
    %v233 = vsel %vm210, %v197, 0
    %v235 = vsel %vm210, %v200, 0
    %v237 = vsel %vm210, %v203, 0
    %v239 = vsel %vm210, %v206, 0
    %v241 = vsel %vm210, %v209, 0
    %243 = vmatprep.subr.mxu0 0.0
    %244 = vmatpush1.msra.mxu0 %v25
    %245 = vmatprep.subr.mxu0 0.0
    %246 = vmatpush1.msra.mxu0 %v26
    %247 = vmatprep.subr.mxu0 0.0
    %248 = vmatpush1.msra.mxu0 0.0
    %249 = vmatprep.subr.mxu0 0.0
    %250 = vmatpush1.msra.mxu0 0.0
    %251 = vmatprep.subr.mxu0 0.0
    %252 = vmatpush1.msra.mxu0 0.0
    %253 = vmatprep.subr.mxu0 0.0
    %254 = vmatpush1.msra.mxu0 0.0
    %255 = vmatprep.subr.mxu0 0.0
    %256 = vmatpush1.msra.mxu0 0.0
    %257 = vmatprep.subr.mxu0 0.0
    %258 = vmatpush1.msra.mxu0 0.0
    %259 = vmatprep.subr.mxu0 0.0
    %260 = vmatpush1.msra.mxu0 0.0
    %261 = vmatprep.subr.mxu0 0.0
    %262 = vmatpush1.msra.mxu0 0.0
    %263 = vmatprep.subr.mxu0 0.0
    %264 = vmatpush1.msra.mxu0 0.0
    %265 = vmatprep.subr.mxu0 0.0
    %266 = vmatpush1.msra.mxu0 0.0
    %267 = vmatprep.subr.mxu0 0.0
    %268 = vmatpush1.msra.mxu0 0.0
    %269 = vmatprep.subr.mxu0 0.0
    %270 = vmatpush1.msra.mxu0 0.0
    %271 = vmatprep.subr.mxu0 0.0
    %272 = vmatpush1.msra.mxu0 0.0
    %273 = vmatprep.subr.mxu0 0.0
    %274 = vmatpush1.msra.mxu0 0.0
    %275 = vmatprep.subr.mxu0 0.0
    %276 = vmatpush1.msra.mxu0 0.0
    %277 = vmatprep.subr.mxu0 0.0
    %278 = vmatpush1.msra.mxu0 0.0
    %279 = vmatprep.subr.mxu0 0.0
    %280 = vmatpush1.msra.mxu0 0.0
    %281 = vmatprep.subr.mxu0 0.0
    %282 = vmatpush1.msra.mxu0 0.0
    %283 = vmatprep.subr.mxu0 0.0
    %284 = vmatpush1.msra.mxu0 0.0
    %285 = vmatprep.subr.mxu0 0.0
    %286 = vmatpush1.msra.mxu0 0.0
    %287 = vmatprep.subr.mxu0 0.0
    %288 = vmatpush1.msra.mxu0 0.0
    %289 = vmatprep.subr.mxu0 0.0
    %290 = vmatpush1.msra.mxu0 0.0
    %291 = vmatprep.subr.mxu0 0.0
    %292 = vmatpush1.msra.mxu0 0.0
    %293 = vmatprep.subr.mxu0 0.0
    %294 = vmatpush1.msra.mxu0 0.0
    %295 = vmatprep.subr.mxu0 0.0
    %296 = vmatpush1.msra.mxu0 0.0
    %297 = vmatprep.subr.mxu0 0.0
    %298 = vmatpush1.msra.mxu0 0.0
    %299 = vmatprep.subr.mxu0 0.0
    %300 = vmatpush1.msra.mxu0 0.0
    %301 = vmatprep.subr.mxu0 0.0
    %302 = vmatpush1.msra.mxu0 0.0
    %303 = vmatprep.subr.mxu0 0.0
    %304 = vmatpush1.msra.mxu0 0.0
    %305 = vmatprep.subr.mxu0 0.0
    %306 = vmatpush1.msra.mxu0 0.0
    %307 = vmatprep.mubr.f32.mxu0 0.0
    %308 = vmatmul.mubr.f32.gmra.mrb[0].mxu0 %v211
    %v309 = vpop.f32.mrb[0].mxu0
    %v310 = vadd.f32 0.0, %v309
    %v311 = vpop.f32.mrb[0].mxu0
    %312 = vmatprep.mubr.f32.mxu0 0.0
    %313 = vmatmul.mubr.f32.gmra.mrb[0].mxu0 %v213
    %v314 = vpop.f32.mrb[0].mxu0
    %v315 = vadd.f32 0.0, %v314
    %v316 = vpop.f32.mrb[0].mxu0
    %317 = vmatprep.mubr.f32.mxu0 0.0
    %318 = vmatmul.mubr.f32.gmra.mrb[0].mxu0 %v215
    %v319 = vpop.f32.mrb[0].mxu0
    %v320 = vadd.f32 0.0, %v319
    %v321 = vpop.f32.mrb[0].mxu0
    %322 = vmatprep.mubr.f32.mxu0 0.0
    %323 = vmatmul.mubr.f32.gmra.mrb[0].mxu0 %v217
    %v324 = vpop.f32.mrb[0].mxu0
    %v325 = vadd.f32 0.0, %v324
    %v326 = vpop.f32.mrb[0].mxu0
    %327 = vmatprep.mubr.f32.mxu0 0.0
    %328 = vmatmul.mubr.f32.gmra.mrb[0].mxu0 %v219
    %v329 = vpop.f32.mrb[0].mxu0
    %v330 = vadd.f32 0.0, %v329
    %v331 = vpop.f32.mrb[0].mxu0
    %332 = vmatprep.mubr.f32.mxu0 0.0
    %333 = vmatmul.mubr.f32.gmra.mrb[0].mxu0 %v221
    %v334 = vpop.f32.mrb[0].mxu0
    %v335 = vadd.f32 0.0, %v334
    %v336 = vpop.f32.mrb[0].mxu0
    %337 = vmatprep.mubr.f32.mxu0 0.0
    %338 = vmatmul.mubr.f32.gmra.mrb[0].mxu0 %v223
    %v339 = vpop.f32.mrb[0].mxu0
    %v340 = vadd.f32 0.0, %v339
    %v341 = vpop.f32.mrb[0].mxu0
    %342 = vmatprep.mubr.f32.mxu0 0.0
    %343 = vmatmul.mubr.f32.gmra.mrb[0].mxu0 %v225
    %v344 = vpop.f32.mrb[0].mxu0
    %v345 = vadd.f32 0.0, %v344
    %v346 = vpop.f32.mrb[0].mxu0
    %347 = vmatprep.mubr.f32.mxu0 0.0
    %348 = vmatmul.mubr.f32.gmra.mrb[0].mxu0 %v227
    %v349 = vpop.f32.mrb[0].mxu0
    %v350 = vadd.f32 0.0, %v349
    %v351 = vpop.f32.mrb[0].mxu0
    %352 = vmatprep.mubr.f32.mxu0 0.0
    %353 = vmatmul.mubr.f32.gmra.mrb[0].mxu0 %v229
    %v354 = vpop.f32.mrb[0].mxu0
    %v355 = vadd.f32 0.0, %v354
    %v356 = vpop.f32.mrb[0].mxu0
    %357 = vmatprep.mubr.f32.mxu0 0.0
    %358 = vmatmul.mubr.f32.gmra.mrb[0].mxu0 %v231
    %v359 = vpop.f32.mrb[0].mxu0
    %v360 = vadd.f32 0.0, %v359
    %v361 = vpop.f32.mrb[0].mxu0
    %362 = vmatprep.mubr.f32.mxu0 0.0
    %363 = vmatmul.mubr.f32.gmra.mrb[0].mxu0 %v233
    %v364 = vpop.f32.mrb[0].mxu0
    %v365 = vadd.f32 0.0, %v364
    %v366 = vpop.f32.mrb[0].mxu0
    %367 = vmatprep.mubr.f32.mxu0 0.0
    %368 = vmatmul.mubr.f32.gmra.mrb[0].mxu0 %v235
    %v369 = vpop.f32.mrb[0].mxu0
    %v370 = vadd.f32 0.0, %v369
    %v371 = vpop.f32.mrb[0].mxu0
    %372 = vmatprep.mubr.f32.mxu0 0.0
    %373 = vmatmul.mubr.f32.gmra.mrb[0].mxu0 %v237
    %v374 = vpop.f32.mrb[0].mxu0
    %v375 = vadd.f32 0.0, %v374
    %v376 = vpop.f32.mrb[0].mxu0
    %377 = vmatprep.mubr.f32.mxu0 0.0
    %378 = vmatmul.mubr.f32.gmra.mrb[0].mxu0 %v239
    %v379 = vpop.f32.mrb[0].mxu0
    %v380 = vadd.f32 0.0, %v379
    %v381 = vpop.f32.mrb[0].mxu0
    %382 = vmatprep.mubr.f32.mxu0 0.0
    %383 = vmatmul.mubr.f32.gmra.mrb[0].mxu0 %v241
    %v384 = vpop.f32.mrb[0].mxu0
    %v385 = vadd.f32 0.0, %v384
    %v386 = vpop.f32.mrb[0].mxu0
    %387 = vdwg.mxu0
    %v388 = vsel %vm210, %v93, 0
    %v390 = vsel %vm210, %v95, 0
    %v392 = vsel %vm210, %v97, 0
    %v394 = vsel %vm210, %v99, 0
    %v396 = vsel %vm210, %v101, 0
    %v398 = vsel %vm210, %v103, 0
    %v400 = vsel %vm210, %v105, 0
    %v402 = vsel %vm210, %v107, 0
    %v404 = vsel %vm210, %v111, 0
    %v406 = vsel %vm210, %v113, 0
    %v408 = vsel %vm210, %v115, 0
    %v410 = vsel %vm210, %v117, 0
    %v412 = vsel %vm210, %v119, 0
    %v414 = vsel %vm210, %v121, 0
    %v416 = vsel %vm210, %v123, 0
    %v418 = vsel %vm210, %v125, 0
    %420 = vmatprep.subr.mxu0 0.0
    %421 = vmatpush1.msra.mxu0 %v21
    %422 = vmatprep.subr.mxu0 0.0
    %423 = vmatpush1.msra.mxu0 %v22
    %424 = vmatprep.subr.mxu0 0.0
    %425 = vmatpush1.msra.mxu0 0.0
    %426 = vmatprep.subr.mxu0 0.0
    %427 = vmatpush1.msra.mxu0 0.0
    %428 = vmatprep.subr.mxu0 0.0
    %429 = vmatpush1.msra.mxu0 0.0
    %430 = vmatprep.subr.mxu0 0.0
    %431 = vmatpush1.msra.mxu0 0.0
    %432 = vmatprep.subr.mxu0 0.0
    %433 = vmatpush1.msra.mxu0 0.0
    %434 = vmatprep.subr.mxu0 0.0
    %435 = vmatpush1.msra.mxu0 0.0
    %436 = vmatprep.subr.mxu0 0.0
    %437 = vmatpush1.msra.mxu0 0.0
    %438 = vmatprep.subr.mxu0 0.0
    %439 = vmatpush1.msra.mxu0 0.0
    %440 = vmatprep.subr.mxu0 0.0
    %441 = vmatpush1.msra.mxu0 0.0
    %442 = vmatprep.subr.mxu0 0.0
    %443 = vmatpush1.msra.mxu0 0.0
    %444 = vmatprep.subr.mxu0 0.0
    %445 = vmatpush1.msra.mxu0 0.0
    %446 = vmatprep.subr.mxu0 0.0
    %447 = vmatpush1.msra.mxu0 0.0
    %448 = vmatprep.subr.mxu0 0.0
    %449 = vmatpush1.msra.mxu0 0.0
    %450 = vmatprep.subr.mxu0 0.0
    %451 = vmatpush1.msra.mxu0 0.0
    %452 = vmatprep.subr.mxu0 0.0
    %453 = vmatpush1.msra.mxu0 0.0
    %454 = vmatprep.subr.mxu0 0.0
    %455 = vmatpush1.msra.mxu0 0.0
    %456 = vmatprep.subr.mxu0 0.0
    %457 = vmatpush1.msra.mxu0 0.0
    %458 = vmatprep.subr.mxu0 0.0
    %459 = vmatpush1.msra.mxu0 0.0
    %460 = vmatprep.subr.mxu0 0.0
    %461 = vmatpush1.msra.mxu0 0.0
    %462 = vmatprep.subr.mxu0 0.0
    %463 = vmatpush1.msra.mxu0 0.0
    %464 = vmatprep.subr.mxu0 0.0
    %465 = vmatpush1.msra.mxu0 0.0
    %466 = vmatprep.subr.mxu0 0.0
    %467 = vmatpush1.msra.mxu0 0.0
    %468 = vmatprep.subr.mxu0 0.0
    %469 = vmatpush1.msra.mxu0 0.0
    %470 = vmatprep.subr.mxu0 0.0
    %471 = vmatpush1.msra.mxu0 0.0
    %472 = vmatprep.subr.mxu0 0.0
    %473 = vmatpush1.msra.mxu0 0.0
    %474 = vmatprep.subr.mxu0 0.0
    %475 = vmatpush1.msra.mxu0 0.0
    %476 = vmatprep.subr.mxu0 0.0
    %477 = vmatpush1.msra.mxu0 0.0
    %478 = vmatprep.subr.mxu0 0.0
    %479 = vmatpush1.msra.mxu0 0.0
    %480 = vmatprep.subr.mxu0 0.0
    %481 = vmatpush1.msra.mxu0 0.0
    %482 = vmatprep.subr.mxu0 0.0
    %483 = vmatpush1.msra.mxu0 0.0
    %484 = vmatprep.mubr.f32.mxu0 0.0
    %485 = vmatmul.mubr.f32.gmra.mrb[0].mxu0 %v388
    %v486 = vpop.f32.mrb[0].mxu0
    %v487 = vadd.f32 %v310, %v486
    %v488 = vpop.f32.mrb[0].mxu0
    %489 = vmatprep.mubr.f32.mxu0 0.0
    %490 = vmatmul.mubr.f32.gmra.mrb[0].mxu0 %v390
    %v491 = vpop.f32.mrb[0].mxu0
    %v492 = vadd.f32 %v315, %v491
    %v493 = vpop.f32.mrb[0].mxu0
    %494 = vmatprep.mubr.f32.mxu0 0.0
    %495 = vmatmul.mubr.f32.gmra.mrb[0].mxu0 %v392
    %v496 = vpop.f32.mrb[0].mxu0
    %v497 = vadd.f32 %v320, %v496
    %v498 = vpop.f32.mrb[0].mxu0
    %499 = vmatprep.mubr.f32.mxu0 0.0
    %500 = vmatmul.mubr.f32.gmra.mrb[0].mxu0 %v394
    %v501 = vpop.f32.mrb[0].mxu0
    %v502 = vadd.f32 %v325, %v501
    %v503 = vpop.f32.mrb[0].mxu0
    %504 = vmatprep.mubr.f32.mxu0 0.0
    %505 = vmatmul.mubr.f32.gmra.mrb[0].mxu0 %v396
    %v506 = vpop.f32.mrb[0].mxu0
    %v507 = vadd.f32 %v330, %v506
    %v508 = vpop.f32.mrb[0].mxu0
    %509 = vmatprep.mubr.f32.mxu0 0.0
    %510 = vmatmul.mubr.f32.gmra.mrb[0].mxu0 %v398
    %v511 = vpop.f32.mrb[0].mxu0
    %v512 = vadd.f32 %v335, %v511
    %v513 = vpop.f32.mrb[0].mxu0
    %514 = vmatprep.mubr.f32.mxu0 0.0
    %515 = vmatmul.mubr.f32.gmra.mrb[0].mxu0 %v400
    %v516 = vpop.f32.mrb[0].mxu0
    %v517 = vadd.f32 %v340, %v516
    %v518 = vpop.f32.mrb[0].mxu0
    %519 = vmatprep.mubr.f32.mxu0 0.0
    %520 = vmatmul.mubr.f32.gmra.mrb[0].mxu0 %v402
    %v521 = vpop.f32.mrb[0].mxu0
    %v522 = vadd.f32 %v345, %v521
    %v523 = vpop.f32.mrb[0].mxu0
    %524 = vmatprep.mubr.f32.mxu0 0.0
    %525 = vmatmul.mubr.f32.gmra.mrb[0].mxu0 %v404
    %v526 = vpop.f32.mrb[0].mxu0
    %v527 = vadd.f32 %v350, %v526
    %v528 = vpop.f32.mrb[0].mxu0
    %529 = vmatprep.mubr.f32.mxu0 0.0
    %530 = vmatmul.mubr.f32.gmra.mrb[0].mxu0 %v406
    %v531 = vpop.f32.mrb[0].mxu0
    %v532 = vadd.f32 %v355, %v531
    %v533 = vpop.f32.mrb[0].mxu0
    %534 = vmatprep.mubr.f32.mxu0 0.0
    %535 = vmatmul.mubr.f32.gmra.mrb[0].mxu0 %v408
    %v536 = vpop.f32.mrb[0].mxu0
    %v537 = vadd.f32 %v360, %v536
    %v538 = vpop.f32.mrb[0].mxu0
    %539 = vmatprep.mubr.f32.mxu0 0.0
    %540 = vmatmul.mubr.f32.gmra.mrb[0].mxu0 %v410
    %v541 = vpop.f32.mrb[0].mxu0
    %v542 = vadd.f32 %v365, %v541
    %v543 = vpop.f32.mrb[0].mxu0
    %544 = vmatprep.mubr.f32.mxu0 0.0
    %545 = vmatmul.mubr.f32.gmra.mrb[0].mxu0 %v412
    %v546 = vpop.f32.mrb[0].mxu0
    %v547 = vadd.f32 %v370, %v546
    %v548 = vpop.f32.mrb[0].mxu0
    %549 = vmatprep.mubr.f32.mxu0 0.0
    %550 = vmatmul.mubr.f32.gmra.mrb[0].mxu0 %v414
    %v551 = vpop.f32.mrb[0].mxu0
    %v552 = vadd.f32 %v375, %v551
    %v553 = vpop.f32.mrb[0].mxu0
    %554 = vmatprep.mubr.f32.mxu0 0.0
    %555 = vmatmul.mubr.f32.gmra.mrb[0].mxu0 %v416
    %v556 = vpop.f32.mrb[0].mxu0
    %v557 = vadd.f32 %v380, %v556
    %v558 = vpop.f32.mrb[0].mxu0
    %559 = vmatprep.mubr.f32.mxu0 0.0
    %560 = vmatmul.mubr.f32.gmra.mrb[0].mxu0 %v418
    %v561 = vpop.f32.mrb[0].mxu0
    %v562 = vadd.f32 %v385, %v561
    %v563 = vpop.f32.mrb[0].mxu0
    %564 = vdwg.mxu0
    %v566 = vsel %vm210, %v109, 0
    %v569 = vsel %vm210, %v127, 0
    %571 = vmatprep.subr.mxu0 0.0
    %572 = vmatpush1.msra.mxu0 %v33
    %573 = vmatprep.subr.mxu0 0.0
    %574 = vmatpush1.msra.mxu0 %v34
    %575 = vmatprep.subr.mxu0 0.0
    %576 = vmatpush1.msra.mxu0 0.0
    %577 = vmatprep.subr.mxu0 0.0
    %578 = vmatpush1.msra.mxu0 0.0
    %579 = vmatprep.subr.mxu0 0.0
    %580 = vmatpush1.msra.mxu0 0.0
    %581 = vmatprep.subr.mxu0 0.0
    %582 = vmatpush1.msra.mxu0 0.0
    %583 = vmatprep.subr.mxu0 0.0
    %584 = vmatpush1.msra.mxu0 0.0
    %585 = vmatprep.subr.mxu0 0.0
    %586 = vmatpush1.msra.mxu0 0.0
    %587 = vmatprep.subr.mxu0 0.0
    %588 = vmatpush1.msra.mxu0 0.0
    %589 = vmatprep.subr.mxu0 0.0
    %590 = vmatpush1.msra.mxu0 0.0
    %591 = vmatprep.subr.mxu0 0.0
    %592 = vmatpush1.msra.mxu0 0.0
    %593 = vmatprep.subr.mxu0 0.0
    %594 = vmatpush1.msra.mxu0 0.0
    %595 = vmatprep.subr.mxu0 0.0
    %596 = vmatpush1.msra.mxu0 0.0
    %597 = vmatprep.subr.mxu0 0.0
    %598 = vmatpush1.msra.mxu0 0.0
    %599 = vmatprep.subr.mxu0 0.0
    %600 = vmatpush1.msra.mxu0 0.0
    %601 = vmatprep.subr.mxu0 0.0
    %602 = vmatpush1.msra.mxu0 0.0
    %603 = vmatprep.subr.mxu0 0.0
    %604 = vmatpush1.msra.mxu0 0.0
    %605 = vmatprep.subr.mxu0 0.0
    %606 = vmatpush1.msra.mxu0 0.0
    %607 = vmatprep.subr.mxu0 0.0
    %608 = vmatpush1.msra.mxu0 0.0
    %609 = vmatprep.subr.mxu0 0.0
    %610 = vmatpush1.msra.mxu0 0.0
    %611 = vmatprep.subr.mxu0 0.0
    %612 = vmatpush1.msra.mxu0 0.0
    %613 = vmatprep.subr.mxu0 0.0
    %614 = vmatpush1.msra.mxu0 0.0
    %615 = vmatprep.subr.mxu0 0.0
    %616 = vmatpush1.msra.mxu0 0.0
    %617 = vmatprep.subr.mxu0 0.0
    %618 = vmatpush1.msra.mxu0 0.0
    %619 = vmatprep.subr.mxu0 0.0
    %620 = vmatpush1.msra.mxu0 0.0
    %621 = vmatprep.subr.mxu0 0.0
    %622 = vmatpush1.msra.mxu0 0.0
    %623 = vmatprep.subr.mxu0 0.0
    %624 = vmatpush1.msra.mxu0 0.0
    %625 = vmatprep.subr.mxu0 0.0
    %626 = vmatpush1.msra.mxu0 0.0
    %627 = vmatprep.subr.mxu0 0.0
    %628 = vmatpush1.msra.mxu0 0.0
    %629 = vmatprep.subr.mxu0 0.0
    %630 = vmatpush1.msra.mxu0 0.0
    %631 = vmatprep.subr.mxu0 0.0
    %632 = vmatpush1.msra.mxu0 0.0
    %633 = vmatprep.subr.mxu0 0.0
    %634 = vmatpush1.msra.mxu0 0.0
    %635 = vmatprep.mubr.f32.mxu0 0.0
    %636 = vmatmul.mubr.f32.gmra.mrb[0].mxu0 %v390
    %v637 = vpop.f32.mrb[0].mxu0
    %v638 = vadd.f32 0.0, %v637
    %v639 = vpop.f32.mrb[0].mxu0
    %640 = vmatprep.mubr.f32.mxu0 0.0
    %641 = vmatmul.mubr.f32.gmra.mrb[0].mxu0 %v392
    %v642 = vpop.f32.mrb[0].mxu0
    %v643 = vadd.f32 0.0, %v642
    %v644 = vpop.f32.mrb[0].mxu0
    %645 = vmatprep.mubr.f32.mxu0 0.0
    %646 = vmatmul.mubr.f32.gmra.mrb[0].mxu0 %v394
    %v647 = vpop.f32.mrb[0].mxu0
    %v648 = vadd.f32 0.0, %v647
    %v649 = vpop.f32.mrb[0].mxu0
    %650 = vmatprep.mubr.f32.mxu0 0.0
    %651 = vmatmul.mubr.f32.gmra.mrb[0].mxu0 %v396
    %v652 = vpop.f32.mrb[0].mxu0
    %v653 = vadd.f32 0.0, %v652
    %v654 = vpop.f32.mrb[0].mxu0
    %655 = vmatprep.mubr.f32.mxu0 0.0
    %656 = vmatmul.mubr.f32.gmra.mrb[0].mxu0 %v398
    %v657 = vpop.f32.mrb[0].mxu0
    %v658 = vadd.f32 0.0, %v657
    %v659 = vpop.f32.mrb[0].mxu0
    %660 = vmatprep.mubr.f32.mxu0 0.0
    %661 = vmatmul.mubr.f32.gmra.mrb[0].mxu0 %v400
    %v662 = vpop.f32.mrb[0].mxu0
    %v663 = vadd.f32 0.0, %v662
    %v664 = vpop.f32.mrb[0].mxu0
    %665 = vmatprep.mubr.f32.mxu0 0.0
    %666 = vmatmul.mubr.f32.gmra.mrb[0].mxu0 %v402
    %v667 = vpop.f32.mrb[0].mxu0
    %v668 = vadd.f32 0.0, %v667
    %v669 = vpop.f32.mrb[0].mxu0
    %670 = vmatprep.mubr.f32.mxu0 0.0
    %671 = vmatmul.mubr.f32.gmra.mrb[0].mxu0 %v566
    %v672 = vpop.f32.mrb[0].mxu0
    %v673 = vadd.f32 0.0, %v672
    %v674 = vpop.f32.mrb[0].mxu0
    %675 = vmatprep.mubr.f32.mxu0 0.0
    %676 = vmatmul.mubr.f32.gmra.mrb[0].mxu0 %v406
    %v677 = vpop.f32.mrb[0].mxu0
    %v678 = vadd.f32 0.0, %v677
    %v679 = vpop.f32.mrb[0].mxu0
    %680 = vmatprep.mubr.f32.mxu0 0.0
    %681 = vmatmul.mubr.f32.gmra.mrb[0].mxu0 %v408
    %v682 = vpop.f32.mrb[0].mxu0
    %v683 = vadd.f32 0.0, %v682
    %v684 = vpop.f32.mrb[0].mxu0
    %685 = vmatprep.mubr.f32.mxu0 0.0
    %686 = vmatmul.mubr.f32.gmra.mrb[0].mxu0 %v410
    %v687 = vpop.f32.mrb[0].mxu0
    %v688 = vadd.f32 0.0, %v687
    %v689 = vpop.f32.mrb[0].mxu0
    %690 = vmatprep.mubr.f32.mxu0 0.0
    %691 = vmatmul.mubr.f32.gmra.mrb[0].mxu0 %v412
    %v692 = vpop.f32.mrb[0].mxu0
    %v693 = vadd.f32 0.0, %v692
    %v694 = vpop.f32.mrb[0].mxu0
    %695 = vmatprep.mubr.f32.mxu0 0.0
    %696 = vmatmul.mubr.f32.gmra.mrb[0].mxu0 %v414
    %v697 = vpop.f32.mrb[0].mxu0
    %v698 = vadd.f32 0.0, %v697
    %v699 = vpop.f32.mrb[0].mxu0
    %700 = vmatprep.mubr.f32.mxu0 0.0
    %701 = vmatmul.mubr.f32.gmra.mrb[0].mxu0 %v416
    %v702 = vpop.f32.mrb[0].mxu0
    %v703 = vadd.f32 0.0, %v702
    %v704 = vpop.f32.mrb[0].mxu0
    %705 = vmatprep.mubr.f32.mxu0 0.0
    %706 = vmatmul.mubr.f32.gmra.mrb[0].mxu0 %v418
    %v707 = vpop.f32.mrb[0].mxu0
    %v708 = vadd.f32 0.0, %v707
    %v709 = vpop.f32.mrb[0].mxu0
    %710 = vmatprep.mubr.f32.mxu0 0.0
    %711 = vmatmul.mubr.f32.gmra.mrb[0].mxu0 %v569
    %v712 = vpop.f32.mrb[0].mxu0
    %v713 = vadd.f32 0.0, %v712
    %v714 = vpop.f32.mrb[0].mxu0
    %715 = vdwg.mxu0
    %v716 = vadd.f32 %v487, %v638
    %v717 = vadd.f32 %v492, %v643
    %v718 = vadd.f32 %v497, %v648
    %v719 = vadd.f32 %v502, %v653
    %v720 = vadd.f32 %v507, %v658
    %v721 = vadd.f32 %v512, %v663
    %v722 = vadd.f32 %v517, %v668
    %v723 = vadd.f32 %v522, %v673
    %v724 = vadd.f32 %v527, %v678
    %v725 = vadd.f32 %v532, %v683
    %v726 = vadd.f32 %v537, %v688
    %v727 = vadd.f32 %v542, %v693
    %v728 = vadd.f32 %v547, %v698
    %v729 = vadd.f32 %v552, %v703
    %v730 = vadd.f32 %v557, %v708
    %v731 = vadd.f32 %v562, %v713
    %v734 = vrot.slane %v109, 1
    %v735 = vrot.slane %v110, 1
    %v736 = vsel %vm161, %v734, %v735
    %v737 = vrot.slane %v127, 1
    %v738 = vrot.slane %v128, 1
    %v739 = vsel %vm161, %v737, %v738
    %v740 = vsel %vm210, %v736, 0
    %v742 = vsel %vm210, %v739, 0
    %744 = vmatprep.subr.mxu0 0.0
    %745 = vmatpush1.msra.mxu0 %v37
    %746 = vmatprep.subr.mxu0 0.0
    %747 = vmatpush1.msra.mxu0 %v38
    %748 = vmatprep.subr.mxu0 0.0
    %749 = vmatpush1.msra.mxu0 0.0
    %750 = vmatprep.subr.mxu0 0.0
    %751 = vmatpush1.msra.mxu0 0.0
    %752 = vmatprep.subr.mxu0 0.0
    %753 = vmatpush1.msra.mxu0 0.0
    %754 = vmatprep.subr.mxu0 0.0
    %755 = vmatpush1.msra.mxu0 0.0
    %756 = vmatprep.subr.mxu0 0.0
    %757 = vmatpush1.msra.mxu0 0.0
    %758 = vmatprep.subr.mxu0 0.0
    %759 = vmatpush1.msra.mxu0 0.0
    %760 = vmatprep.subr.mxu0 0.0
    %761 = vmatpush1.msra.mxu0 0.0
    %762 = vmatprep.subr.mxu0 0.0
    %763 = vmatpush1.msra.mxu0 0.0
    %764 = vmatprep.subr.mxu0 0.0
    %765 = vmatpush1.msra.mxu0 0.0
    %766 = vmatprep.subr.mxu0 0.0
    %767 = vmatpush1.msra.mxu0 0.0
    %768 = vmatprep.subr.mxu0 0.0
    %769 = vmatpush1.msra.mxu0 0.0
    %770 = vmatprep.subr.mxu0 0.0
    %771 = vmatpush1.msra.mxu0 0.0
    %772 = vmatprep.subr.mxu0 0.0
    %773 = vmatpush1.msra.mxu0 0.0
    %774 = vmatprep.subr.mxu0 0.0
    %775 = vmatpush1.msra.mxu0 0.0
    %776 = vmatprep.subr.mxu0 0.0
    %777 = vmatpush1.msra.mxu0 0.0
    %778 = vmatprep.subr.mxu0 0.0
    %779 = vmatpush1.msra.mxu0 0.0
    %780 = vmatprep.subr.mxu0 0.0
    %781 = vmatpush1.msra.mxu0 0.0
    %782 = vmatprep.subr.mxu0 0.0
    %783 = vmatpush1.msra.mxu0 0.0
    %784 = vmatprep.subr.mxu0 0.0
    %785 = vmatpush1.msra.mxu0 0.0
    %786 = vmatprep.subr.mxu0 0.0
    %787 = vmatpush1.msra.mxu0 0.0
    %788 = vmatprep.subr.mxu0 0.0
    %789 = vmatpush1.msra.mxu0 0.0
    %790 = vmatprep.subr.mxu0 0.0
    %791 = vmatpush1.msra.mxu0 0.0
    %792 = vmatprep.subr.mxu0 0.0
    %793 = vmatpush1.msra.mxu0 0.0
    %794 = vmatprep.subr.mxu0 0.0
    %795 = vmatpush1.msra.mxu0 0.0
    %796 = vmatprep.subr.mxu0 0.0
    %797 = vmatpush1.msra.mxu0 0.0
    %798 = vmatprep.subr.mxu0 0.0
    %799 = vmatpush1.msra.mxu0 0.0
    %800 = vmatprep.subr.mxu0 0.0
    %801 = vmatpush1.msra.mxu0 0.0
    %802 = vmatprep.subr.mxu0 0.0
    %803 = vmatpush1.msra.mxu0 0.0
    %804 = vmatprep.subr.mxu0 0.0
    %805 = vmatpush1.msra.mxu0 0.0
    %806 = vmatprep.subr.mxu0 0.0
    %807 = vmatpush1.msra.mxu0 0.0
    %808 = vmatprep.mubr.f32.mxu0 0.0
    %809 = vmatmul.mubr.f32.gmra.mrb[0].mxu0 %v213
    %v810 = vpop.f32.mrb[0].mxu0
    %v811 = vadd.f32 0.0, %v810
    %v812 = vpop.f32.mrb[0].mxu0
    %813 = vmatprep.mubr.f32.mxu0 0.0
    %814 = vmatmul.mubr.f32.gmra.mrb[0].mxu0 %v215
    %v815 = vpop.f32.mrb[0].mxu0
    %v816 = vadd.f32 0.0, %v815
    %v817 = vpop.f32.mrb[0].mxu0
    %818 = vmatprep.mubr.f32.mxu0 0.0
    %819 = vmatmul.mubr.f32.gmra.mrb[0].mxu0 %v217
    %v820 = vpop.f32.mrb[0].mxu0
    %v821 = vadd.f32 0.0, %v820
    %v822 = vpop.f32.mrb[0].mxu0
    %823 = vmatprep.mubr.f32.mxu0 0.0
    %824 = vmatmul.mubr.f32.gmra.mrb[0].mxu0 %v219
    %v825 = vpop.f32.mrb[0].mxu0
    %v826 = vadd.f32 0.0, %v825
    %v827 = vpop.f32.mrb[0].mxu0
    %828 = vmatprep.mubr.f32.mxu0 0.0
    %829 = vmatmul.mubr.f32.gmra.mrb[0].mxu0 %v221
    %v830 = vpop.f32.mrb[0].mxu0
    %v831 = vadd.f32 0.0, %v830
    %v832 = vpop.f32.mrb[0].mxu0
    %833 = vmatprep.mubr.f32.mxu0 0.0
    %834 = vmatmul.mubr.f32.gmra.mrb[0].mxu0 %v223
    %v835 = vpop.f32.mrb[0].mxu0
    %v836 = vadd.f32 0.0, %v835
    %v837 = vpop.f32.mrb[0].mxu0
    %838 = vmatprep.mubr.f32.mxu0 0.0
    %839 = vmatmul.mubr.f32.gmra.mrb[0].mxu0 %v225
    %v840 = vpop.f32.mrb[0].mxu0
    %v841 = vadd.f32 0.0, %v840
    %v842 = vpop.f32.mrb[0].mxu0
    %843 = vmatprep.mubr.f32.mxu0 0.0
    %844 = vmatmul.mubr.f32.gmra.mrb[0].mxu0 %v740
    %v845 = vpop.f32.mrb[0].mxu0
    %v846 = vadd.f32 0.0, %v845
    %v847 = vpop.f32.mrb[0].mxu0
    %848 = vmatprep.mubr.f32.mxu0 0.0
    %849 = vmatmul.mubr.f32.gmra.mrb[0].mxu0 %v229
    %v850 = vpop.f32.mrb[0].mxu0
    %v851 = vadd.f32 0.0, %v850
    %v852 = vpop.f32.mrb[0].mxu0
    %853 = vmatprep.mubr.f32.mxu0 0.0
    %854 = vmatmul.mubr.f32.gmra.mrb[0].mxu0 %v231
    %v855 = vpop.f32.mrb[0].mxu0
    %v856 = vadd.f32 0.0, %v855
    %v857 = vpop.f32.mrb[0].mxu0
    %858 = vmatprep.mubr.f32.mxu0 0.0
    %859 = vmatmul.mubr.f32.gmra.mrb[0].mxu0 %v233
    %v860 = vpop.f32.mrb[0].mxu0
    %v861 = vadd.f32 0.0, %v860
    %v862 = vpop.f32.mrb[0].mxu0
    %863 = vmatprep.mubr.f32.mxu0 0.0
    %864 = vmatmul.mubr.f32.gmra.mrb[0].mxu0 %v235
    %v865 = vpop.f32.mrb[0].mxu0
    %v866 = vadd.f32 0.0, %v865
    %v867 = vpop.f32.mrb[0].mxu0
    %868 = vmatprep.mubr.f32.mxu0 0.0
    %869 = vmatmul.mubr.f32.gmra.mrb[0].mxu0 %v237
    %v870 = vpop.f32.mrb[0].mxu0
    %v871 = vadd.f32 0.0, %v870
    %v872 = vpop.f32.mrb[0].mxu0
    %873 = vmatprep.mubr.f32.mxu0 0.0
    %874 = vmatmul.mubr.f32.gmra.mrb[0].mxu0 %v239
    %v875 = vpop.f32.mrb[0].mxu0
    %v876 = vadd.f32 0.0, %v875
    %v877 = vpop.f32.mrb[0].mxu0
    %878 = vmatprep.mubr.f32.mxu0 0.0
    %879 = vmatmul.mubr.f32.gmra.mrb[0].mxu0 %v241
    %v880 = vpop.f32.mrb[0].mxu0
    %v881 = vadd.f32 0.0, %v880
    %v882 = vpop.f32.mrb[0].mxu0
    %883 = vmatprep.mubr.f32.mxu0 0.0
    %884 = vmatmul.mubr.f32.gmra.mrb[0].mxu0 %v742
    %v885 = vpop.f32.mrb[0].mxu0
    %v886 = vadd.f32 0.0, %v885
    %v887 = vpop.f32.mrb[0].mxu0
    %888 = vdwg.mxu0
    %v889 = vadd.f32 %v716, %v811
    %v890 = vadd.f32 %v717, %v816
    %v891 = vadd.f32 %v718, %v821
    %v892 = vadd.f32 %v719, %v826
    %v893 = vadd.f32 %v720, %v831
    %v894 = vadd.f32 %v721, %v836
    %v895 = vadd.f32 %v722, %v841
    %v896 = vadd.f32 %v723, %v846
    %v897 = vadd.f32 %v724, %v851
    %v898 = vadd.f32 %v725, %v856
    %v899 = vadd.f32 %v726, %v861
    %v900 = vadd.f32 %v727, %v866
    %v901 = vadd.f32 %v728, %v871
    %v902 = vadd.f32 %v729, %v876
    %v903 = vadd.f32 %v730, %v881
    %v904 = vadd.f32 %v731, %v886
    %s905 = scalar_lea.vmem %s0, 288
    %v906 = vld [vmem:[%s905] sm:$0xff]
    %v907 = vld [vmem:[%s905 + $0x10] sm:$0xff]
    %v908 = vld [vmem:[%s905 + $0x20] sm:$0xff]
    %v909 = vld [vmem:[%s905 + $0x30] sm:$0xff]
    %v910 = vld [vmem:[%s905 + $0x40] sm:$0xff]
    %v911 = vld [vmem:[%s905 + $0x50] sm:$0xff]
    %v912 = vld [vmem:[%s905 + $0x60] sm:$0xff]
    %v913 = vld [vmem:[%s905 + $0x70] sm:$0xff]
    %v914 = vld [vmem:[%s905 + $0x80] sm:$0xff]
    %v915 = vld [vmem:[%s905 + $0x90] sm:$0xff]
    %v916 = vld [vmem:[%s905 + $0xa0] sm:$0xff]
    %v917 = vld [vmem:[%s905 + $0xb0] sm:$0xff]
    %v918 = vld [vmem:[%s905 + $0xc0] sm:$0xff]
    %v919 = vld [vmem:[%s905 + $0xd0] sm:$0xff]
    %v920 = vld [vmem:[%s905 + $0xe0] sm:$0xff]
    %v921 = vld [vmem:[%s905 + $0xf0] sm:$0xff]
    %v922 = vld [vmem:[%s905 + $0x100] sm:$0xff]
    %v923 = vld [vmem:[%s905 + $0x110] sm:$0xff]
    %v924 = vmax.f32 %v906, 0.0
    %v925 = vmax.f32 %v907, 0.0
    %v926 = vmax.f32 %v908, 0.0
    %v927 = vmax.f32 %v909, 0.0
    %v928 = vmax.f32 %v910, 0.0
    %v929 = vmax.f32 %v911, 0.0
    %v930 = vmax.f32 %v912, 0.0
    %v931 = vmax.f32 %v913, 0.0
    %v932 = vmax.f32 %v914, 0.0
    %v933 = vmax.f32 %v915, 0.0
    %v934 = vmax.f32 %v916, 0.0
    %v935 = vmax.f32 %v917, 0.0
    %v936 = vmax.f32 %v918, 0.0
    %v937 = vmax.f32 %v919, 0.0
    %v938 = vmax.f32 %v920, 0.0
    %v939 = vmax.f32 %v921, 0.0
    %v940 = vmax.f32 %v922, 0.0
    %v941 = vmax.f32 %v923, 0.0
    %v943 = vsel %vm210, %v924, 0
    %v946 = vsel %vm210, %v925, 0
    %v949 = vsel %vm210, %v926, 0
    %v952 = vsel %vm210, %v927, 0
    %v955 = vsel %vm210, %v928, 0
    %v958 = vsel %vm210, %v929, 0
    %v961 = vsel %vm210, %v930, 0
    %v964 = vsel %vm210, %v931, 0
    %v967 = vsel %vm210, %v933, 0
    %v970 = vsel %vm210, %v934, 0
    %v973 = vsel %vm210, %v935, 0
    %v976 = vsel %vm210, %v936, 0
    %v979 = vsel %vm210, %v937, 0
    %v982 = vsel %vm210, %v938, 0
    %v985 = vsel %vm210, %v939, 0
    %v988 = vsel %vm210, %v940, 0
    %990 = vmatprep.subr.mxu0 0.0
    %991 = vmatpush1.msra.mxu0 %v23
    %992 = vmatprep.subr.mxu0 0.0
    %993 = vmatpush1.msra.mxu0 %v24
    %994 = vmatprep.subr.mxu0 0.0
    %995 = vmatpush1.msra.mxu0 0.0
    %996 = vmatprep.subr.mxu0 0.0
    %997 = vmatpush1.msra.mxu0 0.0
    %998 = vmatprep.subr.mxu0 0.0
    %999 = vmatpush1.msra.mxu0 0.0
    %1000 = vmatprep.subr.mxu0 0.0
    %1001 = vmatpush1.msra.mxu0 0.0
    %1002 = vmatprep.subr.mxu0 0.0
    %1003 = vmatpush1.msra.mxu0 0.0
    %1004 = vmatprep.subr.mxu0 0.0
    %1005 = vmatpush1.msra.mxu0 0.0
    %1006 = vmatprep.subr.mxu0 0.0
    %1007 = vmatpush1.msra.mxu0 0.0
    %1008 = vmatprep.subr.mxu0 0.0
    %1009 = vmatpush1.msra.mxu0 0.0
    %1010 = vmatprep.subr.mxu0 0.0
    %1011 = vmatpush1.msra.mxu0 0.0
    %1012 = vmatprep.subr.mxu0 0.0
    %1013 = vmatpush1.msra.mxu0 0.0
    %1014 = vmatprep.subr.mxu0 0.0
    %1015 = vmatpush1.msra.mxu0 0.0
    %1016 = vmatprep.subr.mxu0 0.0
    %1017 = vmatpush1.msra.mxu0 0.0
    %1018 = vmatprep.subr.mxu0 0.0
    %1019 = vmatpush1.msra.mxu0 0.0
    %1020 = vmatprep.subr.mxu0 0.0
    %1021 = vmatpush1.msra.mxu0 0.0
    %1022 = vmatprep.subr.mxu0 0.0
    %1023 = vmatpush1.msra.mxu0 0.0
    %1024 = vmatprep.subr.mxu0 0.0
    %1025 = vmatpush1.msra.mxu0 0.0
    %1026 = vmatprep.subr.mxu0 0.0
    %1027 = vmatpush1.msra.mxu0 0.0
    %1028 = vmatprep.subr.mxu0 0.0
    %1029 = vmatpush1.msra.mxu0 0.0
    %1030 = vmatprep.subr.mxu0 0.0
    %1031 = vmatpush1.msra.mxu0 0.0
    %1032 = vmatprep.subr.mxu0 0.0
    %1033 = vmatpush1.msra.mxu0 0.0
    %1034 = vmatprep.subr.mxu0 0.0
    %1035 = vmatpush1.msra.mxu0 0.0
    %1036 = vmatprep.subr.mxu0 0.0
    %1037 = vmatpush1.msra.mxu0 0.0
    %1038 = vmatprep.subr.mxu0 0.0
    %1039 = vmatpush1.msra.mxu0 0.0
    %1040 = vmatprep.subr.mxu0 0.0
    %1041 = vmatpush1.msra.mxu0 0.0
    %1042 = vmatprep.subr.mxu0 0.0
    %1043 = vmatpush1.msra.mxu0 0.0
    %1044 = vmatprep.subr.mxu0 0.0
    %1045 = vmatpush1.msra.mxu0 0.0
    %1046 = vmatprep.subr.mxu0 0.0
    %1047 = vmatpush1.msra.mxu0 0.0
    %1048 = vmatprep.subr.mxu0 0.0
    %1049 = vmatpush1.msra.mxu0 0.0
    %1050 = vmatprep.subr.mxu0 0.0
    %1051 = vmatpush1.msra.mxu0 0.0
    %1052 = vmatprep.subr.mxu0 0.0
    %1053 = vmatpush1.msra.mxu0 0.0
    %1054 = vmatprep.mubr.f32.mxu0 0.0
    %1055 = vmatmul.mubr.f32.gmra.mrb[0].mxu0 %v943
    %v1056 = vpop.f32.mrb[0].mxu0
    %v1057 = vadd.f32 0.0, %v1056
    %v1058 = vpop.f32.mrb[0].mxu0
    %1059 = vmatprep.mubr.f32.mxu0 0.0
    %1060 = vmatmul.mubr.f32.gmra.mrb[0].mxu0 %v946
    %v1061 = vpop.f32.mrb[0].mxu0
    %v1062 = vadd.f32 0.0, %v1061
    %v1063 = vpop.f32.mrb[0].mxu0
    %1064 = vmatprep.mubr.f32.mxu0 0.0
    %1065 = vmatmul.mubr.f32.gmra.mrb[0].mxu0 %v949
    %v1066 = vpop.f32.mrb[0].mxu0
    %v1067 = vadd.f32 0.0, %v1066
    %v1068 = vpop.f32.mrb[0].mxu0
    %1069 = vmatprep.mubr.f32.mxu0 0.0
    %1070 = vmatmul.mubr.f32.gmra.mrb[0].mxu0 %v952
    %v1071 = vpop.f32.mrb[0].mxu0
    %v1072 = vadd.f32 0.0, %v1071
    %v1073 = vpop.f32.mrb[0].mxu0
    %1074 = vmatprep.mubr.f32.mxu0 0.0
    %1075 = vmatmul.mubr.f32.gmra.mrb[0].mxu0 %v955
    %v1076 = vpop.f32.mrb[0].mxu0
    %v1077 = vadd.f32 0.0, %v1076
    %v1078 = vpop.f32.mrb[0].mxu0
    %1079 = vmatprep.mubr.f32.mxu0 0.0
    %1080 = vmatmul.mubr.f32.gmra.mrb[0].mxu0 %v958
    %v1081 = vpop.f32.mrb[0].mxu0
    %v1082 = vadd.f32 0.0, %v1081
    %v1083 = vpop.f32.mrb[0].mxu0
    %1084 = vmatprep.mubr.f32.mxu0 0.0
    %1085 = vmatmul.mubr.f32.gmra.mrb[0].mxu0 %v961
    %v1086 = vpop.f32.mrb[0].mxu0
    %v1087 = vadd.f32 0.0, %v1086
    %v1088 = vpop.f32.mrb[0].mxu0
    %1089 = vmatprep.mubr.f32.mxu0 0.0
    %1090 = vmatmul.mubr.f32.gmra.mrb[0].mxu0 %v964
    %v1091 = vpop.f32.mrb[0].mxu0
    %v1092 = vadd.f32 0.0, %v1091
    %v1093 = vpop.f32.mrb[0].mxu0
    %1094 = vmatprep.mubr.f32.mxu0 0.0
    %1095 = vmatmul.mubr.f32.gmra.mrb[0].mxu0 %v967
    %v1096 = vpop.f32.mrb[0].mxu0
    %v1097 = vadd.f32 0.0, %v1096
    %v1098 = vpop.f32.mrb[0].mxu0
    %1099 = vmatprep.mubr.f32.mxu0 0.0
    %1100 = vmatmul.mubr.f32.gmra.mrb[0].mxu0 %v970
    %v1101 = vpop.f32.mrb[0].mxu0
    %v1102 = vadd.f32 0.0, %v1101
    %v1103 = vpop.f32.mrb[0].mxu0
    %1104 = vmatprep.mubr.f32.mxu0 0.0
    %1105 = vmatmul.mubr.f32.gmra.mrb[0].mxu0 %v973
    %v1106 = vpop.f32.mrb[0].mxu0
    %v1107 = vadd.f32 0.0, %v1106
    %v1108 = vpop.f32.mrb[0].mxu0
    %1109 = vmatprep.mubr.f32.mxu0 0.0
    %1110 = vmatmul.mubr.f32.gmra.mrb[0].mxu0 %v976
    %v1111 = vpop.f32.mrb[0].mxu0
    %v1112 = vadd.f32 0.0, %v1111
    %v1113 = vpop.f32.mrb[0].mxu0
    %1114 = vmatprep.mubr.f32.mxu0 0.0
    %1115 = vmatmul.mubr.f32.gmra.mrb[0].mxu0 %v979
    %v1116 = vpop.f32.mrb[0].mxu0
    %v1117 = vadd.f32 0.0, %v1116
    %v1118 = vpop.f32.mrb[0].mxu0
    %1119 = vmatprep.mubr.f32.mxu0 0.0
    %1120 = vmatmul.mubr.f32.gmra.mrb[0].mxu0 %v982
    %v1121 = vpop.f32.mrb[0].mxu0
    %v1122 = vadd.f32 0.0, %v1121
    %v1123 = vpop.f32.mrb[0].mxu0
    %1124 = vmatprep.mubr.f32.mxu0 0.0
    %1125 = vmatmul.mubr.f32.gmra.mrb[0].mxu0 %v985
    %v1126 = vpop.f32.mrb[0].mxu0
    %v1127 = vadd.f32 0.0, %v1126
    %v1128 = vpop.f32.mrb[0].mxu0
    %1129 = vmatprep.mubr.f32.mxu0 0.0
    %1130 = vmatmul.mubr.f32.gmra.mrb[0].mxu0 %v988
    %v1131 = vpop.f32.mrb[0].mxu0
    %v1132 = vadd.f32 0.0, %v1131
    %v1133 = vpop.f32.mrb[0].mxu0
    %1134 = vdwg.mxu0
    %v1135 = vadd.f32 %v889, %v1057
    %v1136 = vadd.f32 %v890, %v1062
    %v1137 = vadd.f32 %v891, %v1067
    %v1138 = vadd.f32 %v892, %v1072
    %v1139 = vadd.f32 %v893, %v1077
    %v1140 = vadd.f32 %v894, %v1082
    %v1141 = vadd.f32 %v895, %v1087
    %v1142 = vadd.f32 %v896, %v1092
    %v1143 = vadd.f32 %v897, %v1097
    %v1144 = vadd.f32 %v898, %v1102
    %v1145 = vadd.f32 %v899, %v1107
    %v1146 = vadd.f32 %v900, %v1112
    %v1147 = vadd.f32 %v901, %v1117
    %v1148 = vadd.f32 %v902, %v1122
    %v1149 = vadd.f32 %v903, %v1127
    %v1150 = vadd.f32 %v904, %v1132
    %v1152 = vsel %vm210, %v932, 0
    %v1155 = vsel %vm210, %v941, 0
    %1157 = vmatprep.subr.mxu0 0.0
    %1158 = vmatpush1.msra.mxu0 %v35
    %1159 = vmatprep.subr.mxu0 0.0
    %1160 = vmatpush1.msra.mxu0 %v36
    %1161 = vmatprep.subr.mxu0 0.0
    %1162 = vmatpush1.msra.mxu0 0.0
    %1163 = vmatprep.subr.mxu0 0.0
    %1164 = vmatpush1.msra.mxu0 0.0
    %1165 = vmatprep.subr.mxu0 0.0
    %1166 = vmatpush1.msra.mxu0 0.0
    %1167 = vmatprep.subr.mxu0 0.0
    %1168 = vmatpush1.msra.mxu0 0.0
    %1169 = vmatprep.subr.mxu0 0.0
    %1170 = vmatpush1.msra.mxu0 0.0
    %1171 = vmatprep.subr.mxu0 0.0
    %1172 = vmatpush1.msra.mxu0 0.0
    %1173 = vmatprep.subr.mxu0 0.0
    %1174 = vmatpush1.msra.mxu0 0.0
    %1175 = vmatprep.subr.mxu0 0.0
    %1176 = vmatpush1.msra.mxu0 0.0
    %1177 = vmatprep.subr.mxu0 0.0
    %1178 = vmatpush1.msra.mxu0 0.0
    %1179 = vmatprep.subr.mxu0 0.0
    %1180 = vmatpush1.msra.mxu0 0.0
    %1181 = vmatprep.subr.mxu0 0.0
    %1182 = vmatpush1.msra.mxu0 0.0
    %1183 = vmatprep.subr.mxu0 0.0
    %1184 = vmatpush1.msra.mxu0 0.0
    %1185 = vmatprep.subr.mxu0 0.0
    %1186 = vmatpush1.msra.mxu0 0.0
    %1187 = vmatprep.subr.mxu0 0.0
    %1188 = vmatpush1.msra.mxu0 0.0
    %1189 = vmatprep.subr.mxu0 0.0
    %1190 = vmatpush1.msra.mxu0 0.0
    %1191 = vmatprep.subr.mxu0 0.0
    %1192 = vmatpush1.msra.mxu0 0.0
    %1193 = vmatprep.subr.mxu0 0.0
    %1194 = vmatpush1.msra.mxu0 0.0
    %1195 = vmatprep.subr.mxu0 0.0
    %1196 = vmatpush1.msra.mxu0 0.0
    %1197 = vmatprep.subr.mxu0 0.0
    %1198 = vmatpush1.msra.mxu0 0.0
    %1199 = vmatprep.subr.mxu0 0.0
    %1200 = vmatpush1.msra.mxu0 0.0
    %1201 = vmatprep.subr.mxu0 0.0
    %1202 = vmatpush1.msra.mxu0 0.0
    %1203 = vmatprep.subr.mxu0 0.0
    %1204 = vmatpush1.msra.mxu0 0.0
    %1205 = vmatprep.subr.mxu0 0.0
    %1206 = vmatpush1.msra.mxu0 0.0
    %1207 = vmatprep.subr.mxu0 0.0
    %1208 = vmatpush1.msra.mxu0 0.0
    %1209 = vmatprep.subr.mxu0 0.0
    %1210 = vmatpush1.msra.mxu0 0.0
    %1211 = vmatprep.subr.mxu0 0.0
    %1212 = vmatpush1.msra.mxu0 0.0
    %1213 = vmatprep.subr.mxu0 0.0
    %1214 = vmatpush1.msra.mxu0 0.0
    %1215 = vmatprep.subr.mxu0 0.0
    %1216 = vmatpush1.msra.mxu0 0.0
    %1217 = vmatprep.subr.mxu0 0.0
    %1218 = vmatpush1.msra.mxu0 0.0
    %1219 = vmatprep.subr.mxu0 0.0
    %1220 = vmatpush1.msra.mxu0 0.0
    %1221 = vmatprep.mubr.f32.mxu0 0.0
    %1222 = vmatmul.mubr.f32.gmra.mrb[0].mxu0 %v946
    %v1223 = vpop.f32.mrb[0].mxu0
    %v1224 = vadd.f32 0.0, %v1223
    %v1225 = vpop.f32.mrb[0].mxu0
    %1226 = vmatprep.mubr.f32.mxu0 0.0
    %1227 = vmatmul.mubr.f32.gmra.mrb[0].mxu0 %v949
    %v1228 = vpop.f32.mrb[0].mxu0
    %v1229 = vadd.f32 0.0, %v1228
    %v1230 = vpop.f32.mrb[0].mxu0
    %1231 = vmatprep.mubr.f32.mxu0 0.0
    %1232 = vmatmul.mubr.f32.gmra.mrb[0].mxu0 %v952
    %v1233 = vpop.f32.mrb[0].mxu0
    %v1234 = vadd.f32 0.0, %v1233
    %v1235 = vpop.f32.mrb[0].mxu0
    %1236 = vmatprep.mubr.f32.mxu0 0.0
    %1237 = vmatmul.mubr.f32.gmra.mrb[0].mxu0 %v955
    %v1238 = vpop.f32.mrb[0].mxu0
    %v1239 = vadd.f32 0.0, %v1238
    %v1240 = vpop.f32.mrb[0].mxu0
    %1241 = vmatprep.mubr.f32.mxu0 0.0
    %1242 = vmatmul.mubr.f32.gmra.mrb[0].mxu0 %v958
    %v1243 = vpop.f32.mrb[0].mxu0
    %v1244 = vadd.f32 0.0, %v1243
    %v1245 = vpop.f32.mrb[0].mxu0
    %1246 = vmatprep.mubr.f32.mxu0 0.0
    %1247 = vmatmul.mubr.f32.gmra.mrb[0].mxu0 %v961
    %v1248 = vpop.f32.mrb[0].mxu0
    %v1249 = vadd.f32 0.0, %v1248
    %v1250 = vpop.f32.mrb[0].mxu0
    %1251 = vmatprep.mubr.f32.mxu0 0.0
    %1252 = vmatmul.mubr.f32.gmra.mrb[0].mxu0 %v964
    %v1253 = vpop.f32.mrb[0].mxu0
    %v1254 = vadd.f32 0.0, %v1253
    %v1255 = vpop.f32.mrb[0].mxu0
    %1256 = vmatprep.mubr.f32.mxu0 0.0
    %1257 = vmatmul.mubr.f32.gmra.mrb[0].mxu0 %v1152
    %v1258 = vpop.f32.mrb[0].mxu0
    %v1259 = vadd.f32 0.0, %v1258
    %v1260 = vpop.f32.mrb[0].mxu0
    %1261 = vmatprep.mubr.f32.mxu0 0.0
    %1262 = vmatmul.mubr.f32.gmra.mrb[0].mxu0 %v970
    %v1263 = vpop.f32.mrb[0].mxu0
    %v1264 = vadd.f32 0.0, %v1263
    %v1265 = vpop.f32.mrb[0].mxu0
    %1266 = vmatprep.mubr.f32.mxu0 0.0
    %1267 = vmatmul.mubr.f32.gmra.mrb[0].mxu0 %v973
    %v1268 = vpop.f32.mrb[0].mxu0
    %v1269 = vadd.f32 0.0, %v1268
    %v1270 = vpop.f32.mrb[0].mxu0
    %1271 = vmatprep.mubr.f32.mxu0 0.0
    %1272 = vmatmul.mubr.f32.gmra.mrb[0].mxu0 %v976
    %v1273 = vpop.f32.mrb[0].mxu0
    %v1274 = vadd.f32 0.0, %v1273
    %v1275 = vpop.f32.mrb[0].mxu0
    %1276 = vmatprep.mubr.f32.mxu0 0.0
    %1277 = vmatmul.mubr.f32.gmra.mrb[0].mxu0 %v979
    %v1278 = vpop.f32.mrb[0].mxu0
    %v1279 = vadd.f32 0.0, %v1278
    %v1280 = vpop.f32.mrb[0].mxu0
    %1281 = vmatprep.mubr.f32.mxu0 0.0
    %1282 = vmatmul.mubr.f32.gmra.mrb[0].mxu0 %v982
    %v1283 = vpop.f32.mrb[0].mxu0
    %v1284 = vadd.f32 0.0, %v1283
    %v1285 = vpop.f32.mrb[0].mxu0
    %1286 = vmatprep.mubr.f32.mxu0 0.0
    %1287 = vmatmul.mubr.f32.gmra.mrb[0].mxu0 %v985
    %v1288 = vpop.f32.mrb[0].mxu0
    %v1289 = vadd.f32 0.0, %v1288
    %v1290 = vpop.f32.mrb[0].mxu0
    %1291 = vmatprep.mubr.f32.mxu0 0.0
    %1292 = vmatmul.mubr.f32.gmra.mrb[0].mxu0 %v988
    %v1293 = vpop.f32.mrb[0].mxu0
    %v1294 = vadd.f32 0.0, %v1293
    %v1295 = vpop.f32.mrb[0].mxu0
    %1296 = vmatprep.mubr.f32.mxu0 0.0
    %1297 = vmatmul.mubr.f32.gmra.mrb[0].mxu0 %v1155
    %v1298 = vpop.f32.mrb[0].mxu0
    %v1299 = vadd.f32 0.0, %v1298
    %v1300 = vpop.f32.mrb[0].mxu0
    %1301 = vdwg.mxu0
    %v1302 = vadd.f32 %v1135, %v1224
    %v1303 = vadd.f32 %v1136, %v1229
    %v1304 = vadd.f32 %v1137, %v1234
    %v1305 = vadd.f32 %v1138, %v1239
    %v1306 = vadd.f32 %v1139, %v1244
    %v1307 = vadd.f32 %v1140, %v1249
    %v1308 = vadd.f32 %v1141, %v1254
    %v1309 = vadd.f32 %v1142, %v1259
    %v1310 = vadd.f32 %v1143, %v1264
    %v1311 = vadd.f32 %v1144, %v1269
    %v1312 = vadd.f32 %v1145, %v1274
    %v1313 = vadd.f32 %v1146, %v1279
    %v1314 = vadd.f32 %v1147, %v1284
    %v1315 = vadd.f32 %v1148, %v1289
    %v1316 = vadd.f32 %v1149, %v1294
    %v1317 = vadd.f32 %v1150, %v1299
    %s1318 = scalar_lea.vmem %s0, 576
    %v1319 = vld [vmem:[%s1318] sm:$0xff]
    %v1320 = vld [vmem:[%s1318 + $0x8] sm:$0x1]
    %v1321 = vld [vmem:[%s1318 + $0x10] sm:$0xff]
    %v1322 = vld [vmem:[%s1318 + $0x18] sm:$0x1]
    %v1323 = vld [vmem:[%s1318 + $0x20] sm:$0xff]
    %v1324 = vld [vmem:[%s1318 + $0x28] sm:$0x1]
    %v1325 = vld [vmem:[%s1318 + $0x30] sm:$0xff]
    %v1326 = vld [vmem:[%s1318 + $0x38] sm:$0x1]
    %v1327 = vld [vmem:[%s1318 + $0x40] sm:$0xff]
    %v1328 = vld [vmem:[%s1318 + $0x48] sm:$0x1]
    %v1329 = vld [vmem:[%s1318 + $0x50] sm:$0xff]
    %v1330 = vld [vmem:[%s1318 + $0x58] sm:$0x1]
    %v1331 = vld [vmem:[%s1318 + $0x60] sm:$0xff]
    %v1332 = vld [vmem:[%s1318 + $0x68] sm:$0x1]
    %v1333 = vld [vmem:[%s1318 + $0x70] sm:$0xff]
    %v1334 = vld [vmem:[%s1318 + $0x78] sm:$0x1]
    %v1335 = vld [vmem:[%s1318 + $0x90] sm:$0xff]
    %v1336 = vld [vmem:[%s1318 + $0x98] sm:$0x1]
    %v1337 = vld [vmem:[%s1318 + $0xa0] sm:$0xff]
    %v1338 = vld [vmem:[%s1318 + $0xa8] sm:$0x1]
    %v1339 = vld [vmem:[%s1318 + $0xb0] sm:$0xff]
    %v1340 = vld [vmem:[%s1318 + $0xb8] sm:$0x1]
    %v1341 = vld [vmem:[%s1318 + $0xc0] sm:$0xff]
    %v1342 = vld [vmem:[%s1318 + $0xc8] sm:$0x1]
    %v1343 = vld [vmem:[%s1318 + $0xd0] sm:$0xff]
    %v1344 = vld [vmem:[%s1318 + $0xd8] sm:$0x1]
    %v1345 = vld [vmem:[%s1318 + $0xe0] sm:$0xff]
    %v1346 = vld [vmem:[%s1318 + $0xe8] sm:$0x1]
    %v1347 = vld [vmem:[%s1318 + $0xf0] sm:$0xff]
    %v1348 = vld [vmem:[%s1318 + $0xf8] sm:$0x1]
    %v1349 = vld [vmem:[%s1318 + $0x100] sm:$0xff]
    %v1350 = vld [vmem:[%s1318 + $0x108] sm:$0x1]
    %v1351 = vmax.f32 %v1319, 0.0
    %v1352 = vmax.f32 %v1320, 0.0
    %v1353 = vmax.f32 %v1321, 0.0
    %v1354 = vmax.f32 %v1322, 0.0
    %v1355 = vmax.f32 %v1323, 0.0
    %v1356 = vmax.f32 %v1324, 0.0
    %v1357 = vmax.f32 %v1325, 0.0
    %v1358 = vmax.f32 %v1326, 0.0
    %v1359 = vmax.f32 %v1327, 0.0
    %v1360 = vmax.f32 %v1328, 0.0
    %v1361 = vmax.f32 %v1329, 0.0
    %v1362 = vmax.f32 %v1330, 0.0
    %v1363 = vmax.f32 %v1331, 0.0
    %v1364 = vmax.f32 %v1332, 0.0
    %v1365 = vmax.f32 %v1333, 0.0
    %v1366 = vmax.f32 %v1334, 0.0
    %v1367 = vmax.f32 %v1335, 0.0
    %v1368 = vmax.f32 %v1336, 0.0
    %v1369 = vmax.f32 %v1337, 0.0
    %v1370 = vmax.f32 %v1338, 0.0
    %v1371 = vmax.f32 %v1339, 0.0
    %v1372 = vmax.f32 %v1340, 0.0
    %v1373 = vmax.f32 %v1341, 0.0
    %v1374 = vmax.f32 %v1342, 0.0
    %v1375 = vmax.f32 %v1343, 0.0
    %v1376 = vmax.f32 %v1344, 0.0
    %v1377 = vmax.f32 %v1345, 0.0
    %v1378 = vmax.f32 %v1346, 0.0
    %v1379 = vmax.f32 %v1347, 0.0
    %v1380 = vmax.f32 %v1348, 0.0
    %v1381 = vmax.f32 %v1349, 0.0
    %v1382 = vmax.f32 %v1350, 0.0
    %v1384 = vsel %vm210, %v1351, 0
    %v1387 = vsel %vm210, %v1353, 0
    %v1390 = vsel %vm210, %v1355, 0
    %v1393 = vsel %vm210, %v1357, 0
    %v1396 = vsel %vm210, %v1359, 0
    %v1399 = vsel %vm210, %v1361, 0
    %v1402 = vsel %vm210, %v1363, 0
    %v1405 = vsel %vm210, %v1365, 0
    %v1408 = vsel %vm210, %v1367, 0
    %v1411 = vsel %vm210, %v1369, 0
    %v1414 = vsel %vm210, %v1371, 0
    %v1417 = vsel %vm210, %v1373, 0
    %v1420 = vsel %vm210, %v1375, 0
    %v1423 = vsel %vm210, %v1377, 0
    %v1426 = vsel %vm210, %v1379, 0
    %v1429 = vsel %vm210, %v1381, 0
    %1431 = vmatprep.subr.mxu0 0.0
    %1432 = vmatpush1.msra.mxu0 %v27
    %1433 = vmatprep.subr.mxu0 0.0
    %1434 = vmatpush1.msra.mxu0 %v28
    %1435 = vmatprep.subr.mxu0 0.0
    %1436 = vmatpush1.msra.mxu0 0.0
    %1437 = vmatprep.subr.mxu0 0.0
    %1438 = vmatpush1.msra.mxu0 0.0
    %1439 = vmatprep.subr.mxu0 0.0
    %1440 = vmatpush1.msra.mxu0 0.0
    %1441 = vmatprep.subr.mxu0 0.0
    %1442 = vmatpush1.msra.mxu0 0.0
    %1443 = vmatprep.subr.mxu0 0.0
    %1444 = vmatpush1.msra.mxu0 0.0
    %1445 = vmatprep.subr.mxu0 0.0
    %1446 = vmatpush1.msra.mxu0 0.0
    %1447 = vmatprep.subr.mxu0 0.0
    %1448 = vmatpush1.msra.mxu0 0.0
    %1449 = vmatprep.subr.mxu0 0.0
    %1450 = vmatpush1.msra.mxu0 0.0
    %1451 = vmatprep.subr.mxu0 0.0
    %1452 = vmatpush1.msra.mxu0 0.0
    %1453 = vmatprep.subr.mxu0 0.0
    %1454 = vmatpush1.msra.mxu0 0.0
    %1455 = vmatprep.subr.mxu0 0.0
    %1456 = vmatpush1.msra.mxu0 0.0
    %1457 = vmatprep.subr.mxu0 0.0
    %1458 = vmatpush1.msra.mxu0 0.0
    %1459 = vmatprep.subr.mxu0 0.0
    %1460 = vmatpush1.msra.mxu0 0.0
    %1461 = vmatprep.subr.mxu0 0.0
    %1462 = vmatpush1.msra.mxu0 0.0
    %1463 = vmatprep.subr.mxu0 0.0
    %1464 = vmatpush1.msra.mxu0 0.0
    %1465 = vmatprep.subr.mxu0 0.0
    %1466 = vmatpush1.msra.mxu0 0.0
    %1467 = vmatprep.subr.mxu0 0.0
    %1468 = vmatpush1.msra.mxu0 0.0
    %1469 = vmatprep.subr.mxu0 0.0
    %1470 = vmatpush1.msra.mxu0 0.0
    %1471 = vmatprep.subr.mxu0 0.0
    %1472 = vmatpush1.msra.mxu0 0.0
    %1473 = vmatprep.subr.mxu0 0.0
    %1474 = vmatpush1.msra.mxu0 0.0
    %1475 = vmatprep.subr.mxu0 0.0
    %1476 = vmatpush1.msra.mxu0 0.0
    %1477 = vmatprep.subr.mxu0 0.0
    %1478 = vmatpush1.msra.mxu0 0.0
    %1479 = vmatprep.subr.mxu0 0.0
    %1480 = vmatpush1.msra.mxu0 0.0
    %1481 = vmatprep.subr.mxu0 0.0
    %1482 = vmatpush1.msra.mxu0 0.0
    %1483 = vmatprep.subr.mxu0 0.0
    %1484 = vmatpush1.msra.mxu0 0.0
    %1485 = vmatprep.subr.mxu0 0.0
    %1486 = vmatpush1.msra.mxu0 0.0
    %1487 = vmatprep.subr.mxu0 0.0
    %1488 = vmatpush1.msra.mxu0 0.0
    %1489 = vmatprep.subr.mxu0 0.0
    %1490 = vmatpush1.msra.mxu0 0.0
    %1491 = vmatprep.subr.mxu0 0.0
    %1492 = vmatpush1.msra.mxu0 0.0
    %1493 = vmatprep.subr.mxu0 0.0
    %1494 = vmatpush1.msra.mxu0 0.0
    %1495 = vmatprep.mubr.f32.mxu0 0.0
    %1496 = vmatmul.mubr.f32.gmra.mrb[0].mxu0 %v1384
    %v1497 = vpop.f32.mrb[0].mxu0
    %v1498 = vadd.f32 0.0, %v1497
    %v1499 = vpop.f32.mrb[0].mxu0
    %1500 = vmatprep.mubr.f32.mxu0 0.0
    %1501 = vmatmul.mubr.f32.gmra.mrb[0].mxu0 %v1387
    %v1502 = vpop.f32.mrb[0].mxu0
    %v1503 = vadd.f32 0.0, %v1502
    %v1504 = vpop.f32.mrb[0].mxu0
    %1505 = vmatprep.mubr.f32.mxu0 0.0
    %1506 = vmatmul.mubr.f32.gmra.mrb[0].mxu0 %v1390
    %v1507 = vpop.f32.mrb[0].mxu0
    %v1508 = vadd.f32 0.0, %v1507
    %v1509 = vpop.f32.mrb[0].mxu0
    %1510 = vmatprep.mubr.f32.mxu0 0.0
    %1511 = vmatmul.mubr.f32.gmra.mrb[0].mxu0 %v1393
    %v1512 = vpop.f32.mrb[0].mxu0
    %v1513 = vadd.f32 0.0, %v1512
    %v1514 = vpop.f32.mrb[0].mxu0
    %1515 = vmatprep.mubr.f32.mxu0 0.0
    %1516 = vmatmul.mubr.f32.gmra.mrb[0].mxu0 %v1396
    %v1517 = vpop.f32.mrb[0].mxu0
    %v1518 = vadd.f32 0.0, %v1517
    %v1519 = vpop.f32.mrb[0].mxu0
    %1520 = vmatprep.mubr.f32.mxu0 0.0
    %1521 = vmatmul.mubr.f32.gmra.mrb[0].mxu0 %v1399
    %v1522 = vpop.f32.mrb[0].mxu0
    %v1523 = vadd.f32 0.0, %v1522
    %v1524 = vpop.f32.mrb[0].mxu0
    %1525 = vmatprep.mubr.f32.mxu0 0.0
    %1526 = vmatmul.mubr.f32.gmra.mrb[0].mxu0 %v1402
    %v1527 = vpop.f32.mrb[0].mxu0
    %v1528 = vadd.f32 0.0, %v1527
    %v1529 = vpop.f32.mrb[0].mxu0
    %1530 = vmatprep.mubr.f32.mxu0 0.0
    %1531 = vmatmul.mubr.f32.gmra.mrb[0].mxu0 %v1405
    %v1532 = vpop.f32.mrb[0].mxu0
    %v1533 = vadd.f32 0.0, %v1532
    %v1534 = vpop.f32.mrb[0].mxu0
    %1535 = vmatprep.mubr.f32.mxu0 0.0
    %1536 = vmatmul.mubr.f32.gmra.mrb[0].mxu0 %v1408
    %v1537 = vpop.f32.mrb[0].mxu0
    %v1538 = vadd.f32 0.0, %v1537
    %v1539 = vpop.f32.mrb[0].mxu0
    %1540 = vmatprep.mubr.f32.mxu0 0.0
    %1541 = vmatmul.mubr.f32.gmra.mrb[0].mxu0 %v1411
    %v1542 = vpop.f32.mrb[0].mxu0
    %v1543 = vadd.f32 0.0, %v1542
    %v1544 = vpop.f32.mrb[0].mxu0
    %1545 = vmatprep.mubr.f32.mxu0 0.0
    %1546 = vmatmul.mubr.f32.gmra.mrb[0].mxu0 %v1414
    %v1547 = vpop.f32.mrb[0].mxu0
    %v1548 = vadd.f32 0.0, %v1547
    %v1549 = vpop.f32.mrb[0].mxu0
    %1550 = vmatprep.mubr.f32.mxu0 0.0
    %1551 = vmatmul.mubr.f32.gmra.mrb[0].mxu0 %v1417
    %v1552 = vpop.f32.mrb[0].mxu0
    %v1553 = vadd.f32 0.0, %v1552
    %v1554 = vpop.f32.mrb[0].mxu0
    %1555 = vmatprep.mubr.f32.mxu0 0.0
    %1556 = vmatmul.mubr.f32.gmra.mrb[0].mxu0 %v1420
    %v1557 = vpop.f32.mrb[0].mxu0
    %v1558 = vadd.f32 0.0, %v1557
    %v1559 = vpop.f32.mrb[0].mxu0
    %1560 = vmatprep.mubr.f32.mxu0 0.0
    %1561 = vmatmul.mubr.f32.gmra.mrb[0].mxu0 %v1423
    %v1562 = vpop.f32.mrb[0].mxu0
    %v1563 = vadd.f32 0.0, %v1562
    %v1564 = vpop.f32.mrb[0].mxu0
    %1565 = vmatprep.mubr.f32.mxu0 0.0
    %1566 = vmatmul.mubr.f32.gmra.mrb[0].mxu0 %v1426
    %v1567 = vpop.f32.mrb[0].mxu0
    %v1568 = vadd.f32 0.0, %v1567
    %v1569 = vpop.f32.mrb[0].mxu0
    %1570 = vmatprep.mubr.f32.mxu0 0.0
    %1571 = vmatmul.mubr.f32.gmra.mrb[0].mxu0 %v1429
    %v1572 = vpop.f32.mrb[0].mxu0
    %v1573 = vadd.f32 0.0, %v1572
    %v1574 = vpop.f32.mrb[0].mxu0
    %1575 = vdwg.mxu0
    %v1576 = vadd.f32 %v1302, %v1498
    %v1577 = vadd.f32 %v1303, %v1503
    %v1578 = vadd.f32 %v1304, %v1508
    %v1579 = vadd.f32 %v1305, %v1513
    %v1580 = vadd.f32 %v1306, %v1518
    %v1581 = vadd.f32 %v1307, %v1523
    %v1582 = vadd.f32 %v1308, %v1528
    %v1583 = vadd.f32 %v1309, %v1533
    %v1584 = vadd.f32 %v1310, %v1538
    %v1585 = vadd.f32 %v1311, %v1543
    %v1586 = vadd.f32 %v1312, %v1548
    %v1587 = vadd.f32 %v1313, %v1553
    %v1588 = vadd.f32 %v1314, %v1558
    %v1589 = vadd.f32 %v1315, %v1563
    %v1590 = vadd.f32 %v1316, %v1568
    %v1591 = vadd.f32 %v1317, %v1573
    %v1608 = vrot.slane %v1351, 1
    %v1609 = vrot.slane %v1352, 1
    %v1610 = vsel %vm161, %v1608, %v1609
    %v1611 = vrot.slane %v1353, 1
    %v1612 = vrot.slane %v1354, 1
    %v1613 = vsel %vm161, %v1611, %v1612
    %v1614 = vrot.slane %v1355, 1
    %v1615 = vrot.slane %v1356, 1
    %v1616 = vsel %vm161, %v1614, %v1615
    %v1617 = vrot.slane %v1357, 1
    %v1618 = vrot.slane %v1358, 1
    %v1619 = vsel %vm161, %v1617, %v1618
    %v1620 = vrot.slane %v1359, 1
    %v1621 = vrot.slane %v1360, 1
    %v1622 = vsel %vm161, %v1620, %v1621
    %v1623 = vrot.slane %v1361, 1
    %v1624 = vrot.slane %v1362, 1
    %v1625 = vsel %vm161, %v1623, %v1624
    %v1626 = vrot.slane %v1363, 1
    %v1627 = vrot.slane %v1364, 1
    %v1628 = vsel %vm161, %v1626, %v1627
    %v1629 = vrot.slane %v1365, 1
    %v1630 = vrot.slane %v1366, 1
    %v1631 = vsel %vm161, %v1629, %v1630
    %v1632 = vrot.slane %v1367, 1
    %v1633 = vrot.slane %v1368, 1
    %v1634 = vsel %vm161, %v1632, %v1633
    %v1635 = vrot.slane %v1369, 1
    %v1636 = vrot.slane %v1370, 1
    %v1637 = vsel %vm161, %v1635, %v1636
    %v1638 = vrot.slane %v1371, 1
    %v1639 = vrot.slane %v1372, 1
    %v1640 = vsel %vm161, %v1638, %v1639
    %v1641 = vrot.slane %v1373, 1
    %v1642 = vrot.slane %v1374, 1
    %v1643 = vsel %vm161, %v1641, %v1642
    %v1644 = vrot.slane %v1375, 1
    %v1645 = vrot.slane %v1376, 1
    %v1646 = vsel %vm161, %v1644, %v1645
    %v1647 = vrot.slane %v1377, 1
    %v1648 = vrot.slane %v1378, 1
    %v1649 = vsel %vm161, %v1647, %v1648
    %v1650 = vrot.slane %v1379, 1
    %v1651 = vrot.slane %v1380, 1
    %v1652 = vsel %vm161, %v1650, %v1651
    %v1653 = vrot.slane %v1381, 1
    %v1654 = vrot.slane %v1382, 1
    %v1655 = vsel %vm161, %v1653, %v1654
    %v1656 = vsel %vm210, %v1610, 0
    %v1658 = vsel %vm210, %v1613, 0
    %v1660 = vsel %vm210, %v1616, 0
    %v1662 = vsel %vm210, %v1619, 0
    %v1664 = vsel %vm210, %v1622, 0
    %v1666 = vsel %vm210, %v1625, 0
    %v1668 = vsel %vm210, %v1628, 0
    %v1670 = vsel %vm210, %v1631, 0
    %v1672 = vsel %vm210, %v1634, 0
    %v1674 = vsel %vm210, %v1637, 0
    %v1676 = vsel %vm210, %v1640, 0
    %v1678 = vsel %vm210, %v1643, 0
    %v1680 = vsel %vm210, %v1646, 0
    %v1682 = vsel %vm210, %v1649, 0
    %v1684 = vsel %vm210, %v1652, 0
    %v1686 = vsel %vm210, %v1655, 0
    %1688 = vmatprep.subr.mxu0 0.0
    %1689 = vmatpush1.msra.mxu0 %v31
    %1690 = vmatprep.subr.mxu0 0.0
    %1691 = vmatpush1.msra.mxu0 %v32
    %1692 = vmatprep.subr.mxu0 0.0
    %1693 = vmatpush1.msra.mxu0 0.0
    %1694 = vmatprep.subr.mxu0 0.0
    %1695 = vmatpush1.msra.mxu0 0.0
    %1696 = vmatprep.subr.mxu0 0.0
    %1697 = vmatpush1.msra.mxu0 0.0
    %1698 = vmatprep.subr.mxu0 0.0
    %1699 = vmatpush1.msra.mxu0 0.0
    %1700 = vmatprep.subr.mxu0 0.0
    %1701 = vmatpush1.msra.mxu0 0.0
    %1702 = vmatprep.subr.mxu0 0.0
    %1703 = vmatpush1.msra.mxu0 0.0
    %1704 = vmatprep.subr.mxu0 0.0
    %1705 = vmatpush1.msra.mxu0 0.0
    %1706 = vmatprep.subr.mxu0 0.0
    %1707 = vmatpush1.msra.mxu0 0.0
    %1708 = vmatprep.subr.mxu0 0.0
    %1709 = vmatpush1.msra.mxu0 0.0
    %1710 = vmatprep.subr.mxu0 0.0
    %1711 = vmatpush1.msra.mxu0 0.0
    %1712 = vmatprep.subr.mxu0 0.0
    %1713 = vmatpush1.msra.mxu0 0.0
    %1714 = vmatprep.subr.mxu0 0.0
    %1715 = vmatpush1.msra.mxu0 0.0
    %1716 = vmatprep.subr.mxu0 0.0
    %1717 = vmatpush1.msra.mxu0 0.0
    %1718 = vmatprep.subr.mxu0 0.0
    %1719 = vmatpush1.msra.mxu0 0.0
    %1720 = vmatprep.subr.mxu0 0.0
    %1721 = vmatpush1.msra.mxu0 0.0
    %1722 = vmatprep.subr.mxu0 0.0
    %1723 = vmatpush1.msra.mxu0 0.0
    %1724 = vmatprep.subr.mxu0 0.0
    %1725 = vmatpush1.msra.mxu0 0.0
    %1726 = vmatprep.subr.mxu0 0.0
    %1727 = vmatpush1.msra.mxu0 0.0
    %1728 = vmatprep.subr.mxu0 0.0
    %1729 = vmatpush1.msra.mxu0 0.0
    %1730 = vmatprep.subr.mxu0 0.0
    %1731 = vmatpush1.msra.mxu0 0.0
    %1732 = vmatprep.subr.mxu0 0.0
    %1733 = vmatpush1.msra.mxu0 0.0
    %1734 = vmatprep.subr.mxu0 0.0
    %1735 = vmatpush1.msra.mxu0 0.0
    %1736 = vmatprep.subr.mxu0 0.0
    %1737 = vmatpush1.msra.mxu0 0.0
    %1738 = vmatprep.subr.mxu0 0.0
    %1739 = vmatpush1.msra.mxu0 0.0
    %1740 = vmatprep.subr.mxu0 0.0
    %1741 = vmatpush1.msra.mxu0 0.0
    %1742 = vmatprep.subr.mxu0 0.0
    %1743 = vmatpush1.msra.mxu0 0.0
    %1744 = vmatprep.subr.mxu0 0.0
    %1745 = vmatpush1.msra.mxu0 0.0
    %1746 = vmatprep.subr.mxu0 0.0
    %1747 = vmatpush1.msra.mxu0 0.0
    %1748 = vmatprep.subr.mxu0 0.0
    %1749 = vmatpush1.msra.mxu0 0.0
    %1750 = vmatprep.subr.mxu0 0.0
    %1751 = vmatpush1.msra.mxu0 0.0
    %1752 = vmatprep.mubr.f32.mxu0 0.0
    %1753 = vmatmul.mubr.f32.gmra.mrb[0].mxu0 %v1656
    %v1754 = vpop.f32.mrb[0].mxu0
    %v1755 = vadd.f32 0.0, %v1754
    %v1756 = vpop.f32.mrb[0].mxu0
    %1757 = vmatprep.mubr.f32.mxu0 0.0
    %1758 = vmatmul.mubr.f32.gmra.mrb[0].mxu0 %v1658
    %v1759 = vpop.f32.mrb[0].mxu0
    %v1760 = vadd.f32 0.0, %v1759
    %v1761 = vpop.f32.mrb[0].mxu0
    %1762 = vmatprep.mubr.f32.mxu0 0.0
    %1763 = vmatmul.mubr.f32.gmra.mrb[0].mxu0 %v1660
    %v1764 = vpop.f32.mrb[0].mxu0
    %v1765 = vadd.f32 0.0, %v1764
    %v1766 = vpop.f32.mrb[0].mxu0
    %1767 = vmatprep.mubr.f32.mxu0 0.0
    %1768 = vmatmul.mubr.f32.gmra.mrb[0].mxu0 %v1662
    %v1769 = vpop.f32.mrb[0].mxu0
    %v1770 = vadd.f32 0.0, %v1769
    %v1771 = vpop.f32.mrb[0].mxu0
    %1772 = vmatprep.mubr.f32.mxu0 0.0
    %1773 = vmatmul.mubr.f32.gmra.mrb[0].mxu0 %v1664
    %v1774 = vpop.f32.mrb[0].mxu0
    %v1775 = vadd.f32 0.0, %v1774
    %v1776 = vpop.f32.mrb[0].mxu0
    %1777 = vmatprep.mubr.f32.mxu0 0.0
    %1778 = vmatmul.mubr.f32.gmra.mrb[0].mxu0 %v1666
    %v1779 = vpop.f32.mrb[0].mxu0
    %v1780 = vadd.f32 0.0, %v1779
    %v1781 = vpop.f32.mrb[0].mxu0
    %1782 = vmatprep.mubr.f32.mxu0 0.0
    %1783 = vmatmul.mubr.f32.gmra.mrb[0].mxu0 %v1668
    %v1784 = vpop.f32.mrb[0].mxu0
    %v1785 = vadd.f32 0.0, %v1784
    %v1786 = vpop.f32.mrb[0].mxu0
    %1787 = vmatprep.mubr.f32.mxu0 0.0
    %1788 = vmatmul.mubr.f32.gmra.mrb[0].mxu0 %v1670
    %v1789 = vpop.f32.mrb[0].mxu0
    %v1790 = vadd.f32 0.0, %v1789
    %v1791 = vpop.f32.mrb[0].mxu0
    %1792 = vmatprep.mubr.f32.mxu0 0.0
    %1793 = vmatmul.mubr.f32.gmra.mrb[0].mxu0 %v1672
    %v1794 = vpop.f32.mrb[0].mxu0
    %v1795 = vadd.f32 0.0, %v1794
    %v1796 = vpop.f32.mrb[0].mxu0
    %1797 = vmatprep.mubr.f32.mxu0 0.0
    %1798 = vmatmul.mubr.f32.gmra.mrb[0].mxu0 %v1674
    %v1799 = vpop.f32.mrb[0].mxu0
    %v1800 = vadd.f32 0.0, %v1799
    %v1801 = vpop.f32.mrb[0].mxu0
    %1802 = vmatprep.mubr.f32.mxu0 0.0
    %1803 = vmatmul.mubr.f32.gmra.mrb[0].mxu0 %v1676
    %v1804 = vpop.f32.mrb[0].mxu0
    %v1805 = vadd.f32 0.0, %v1804
    %v1806 = vpop.f32.mrb[0].mxu0
    %1807 = vmatprep.mubr.f32.mxu0 0.0
    %1808 = vmatmul.mubr.f32.gmra.mrb[0].mxu0 %v1678
    %v1809 = vpop.f32.mrb[0].mxu0
    %v1810 = vadd.f32 0.0, %v1809
    %v1811 = vpop.f32.mrb[0].mxu0
    %1812 = vmatprep.mubr.f32.mxu0 0.0
    %1813 = vmatmul.mubr.f32.gmra.mrb[0].mxu0 %v1680
    %v1814 = vpop.f32.mrb[0].mxu0
    %v1815 = vadd.f32 0.0, %v1814
    %v1816 = vpop.f32.mrb[0].mxu0
    %1817 = vmatprep.mubr.f32.mxu0 0.0
    %1818 = vmatmul.mubr.f32.gmra.mrb[0].mxu0 %v1682
    %v1819 = vpop.f32.mrb[0].mxu0
    %v1820 = vadd.f32 0.0, %v1819
    %v1821 = vpop.f32.mrb[0].mxu0
    %1822 = vmatprep.mubr.f32.mxu0 0.0
    %1823 = vmatmul.mubr.f32.gmra.mrb[0].mxu0 %v1684
    %v1824 = vpop.f32.mrb[0].mxu0
    %v1825 = vadd.f32 0.0, %v1824
    %v1826 = vpop.f32.mrb[0].mxu0
    %1827 = vmatprep.mubr.f32.mxu0 0.0
    %1828 = vmatmul.mubr.f32.gmra.mrb[0].mxu0 %v1686
    %v1829 = vpop.f32.mrb[0].mxu0
    %v1830 = vadd.f32 0.0, %v1829
    %v1831 = vpop.f32.mrb[0].mxu0
    %1832 = vdwg.mxu0
    %v1833 = vadd.f32 %v1576, %v1755
    %v1834 = vadd.f32 %v1577, %v1760
    %v1835 = vadd.f32 %v1578, %v1765
    %v1836 = vadd.f32 %v1579, %v1770
    %v1837 = vadd.f32 %v1580, %v1775
    %v1838 = vadd.f32 %v1581, %v1780
    %v1839 = vadd.f32 %v1582, %v1785
    %v1840 = vadd.f32 %v1583, %v1790
    %v1841 = vadd.f32 %v1584, %v1795
    %v1842 = vadd.f32 %v1585, %v1800
    %v1843 = vadd.f32 %v1586, %v1805
    %v1844 = vadd.f32 %v1587, %v1810
    %v1845 = vadd.f32 %v1588, %v1815
    %v1846 = vadd.f32 %v1589, %v1820
    %v1847 = vadd.f32 %v1590, %v1825
    %v1848 = vadd.f32 %v1591, %v1830
    %s1849 = scalar_lea.vmem %s0, 864
    %v1850 = vld [vmem:[%s1849] sm:$0xff]
    %v1851 = vld [vmem:[%s1849 + $0x10] sm:$0xff]
    %v1852 = vld [vmem:[%s1849 + $0x20] sm:$0xff]
    %v1853 = vld [vmem:[%s1849 + $0x30] sm:$0xff]
    %v1854 = vld [vmem:[%s1849 + $0x40] sm:$0xff]
    %v1855 = vld [vmem:[%s1849 + $0x50] sm:$0xff]
    %v1856 = vld [vmem:[%s1849 + $0x60] sm:$0xff]
    %v1857 = vld [vmem:[%s1849 + $0x70] sm:$0xff]
    %v1858 = vld [vmem:[%s1849 + $0x90] sm:$0xff]
    %v1859 = vld [vmem:[%s1849 + $0xa0] sm:$0xff]
    %v1860 = vld [vmem:[%s1849 + $0xb0] sm:$0xff]
    %v1861 = vld [vmem:[%s1849 + $0xc0] sm:$0xff]
    %v1862 = vld [vmem:[%s1849 + $0xd0] sm:$0xff]
    %v1863 = vld [vmem:[%s1849 + $0xe0] sm:$0xff]
    %v1864 = vld [vmem:[%s1849 + $0xf0] sm:$0xff]
    %v1865 = vld [vmem:[%s1849 + $0x100] sm:$0xff]
    %v1866 = vmax.f32 %v1850, 0.0
    %v1867 = vmax.f32 %v1851, 0.0
    %v1868 = vmax.f32 %v1852, 0.0
    %v1869 = vmax.f32 %v1853, 0.0
    %v1870 = vmax.f32 %v1854, 0.0
    %v1871 = vmax.f32 %v1855, 0.0
    %v1872 = vmax.f32 %v1856, 0.0
    %v1873 = vmax.f32 %v1857, 0.0
    %v1874 = vmax.f32 %v1858, 0.0
    %v1875 = vmax.f32 %v1859, 0.0
    %v1876 = vmax.f32 %v1860, 0.0
    %v1877 = vmax.f32 %v1861, 0.0
    %v1878 = vmax.f32 %v1862, 0.0
    %v1879 = vmax.f32 %v1863, 0.0
    %v1880 = vmax.f32 %v1864, 0.0
    %v1881 = vmax.f32 %v1865, 0.0
    %v1883 = vsel %vm210, %v1866, 0
    %v1886 = vsel %vm210, %v1867, 0
    %v1889 = vsel %vm210, %v1868, 0
    %v1892 = vsel %vm210, %v1869, 0
    %v1895 = vsel %vm210, %v1870, 0
    %v1898 = vsel %vm210, %v1871, 0
    %v1901 = vsel %vm210, %v1872, 0
    %v1904 = vsel %vm210, %v1873, 0
    %v1907 = vsel %vm210, %v1874, 0
    %v1910 = vsel %vm210, %v1875, 0
    %v1913 = vsel %vm210, %v1876, 0
    %v1916 = vsel %vm210, %v1877, 0
    %v1919 = vsel %vm210, %v1878, 0
    %v1922 = vsel %vm210, %v1879, 0
    %v1925 = vsel %vm210, %v1880, 0
    %v1928 = vsel %vm210, %v1881, 0
    %1930 = vmatprep.subr.mxu0 0.0
    %1931 = vmatpush1.msra.mxu0 %v29
    %1932 = vmatprep.subr.mxu0 0.0
    %1933 = vmatpush1.msra.mxu0 %v30
    %1934 = vmatprep.subr.mxu0 0.0
    %1935 = vmatpush1.msra.mxu0 0.0
    %1936 = vmatprep.subr.mxu0 0.0
    %1937 = vmatpush1.msra.mxu0 0.0
    %1938 = vmatprep.subr.mxu0 0.0
    %1939 = vmatpush1.msra.mxu0 0.0
    %1940 = vmatprep.subr.mxu0 0.0
    %1941 = vmatpush1.msra.mxu0 0.0
    %1942 = vmatprep.subr.mxu0 0.0
    %1943 = vmatpush1.msra.mxu0 0.0
    %1944 = vmatprep.subr.mxu0 0.0
    %1945 = vmatpush1.msra.mxu0 0.0
    %1946 = vmatprep.subr.mxu0 0.0
    %1947 = vmatpush1.msra.mxu0 0.0
    %1948 = vmatprep.subr.mxu0 0.0
    %1949 = vmatpush1.msra.mxu0 0.0
    %1950 = vmatprep.subr.mxu0 0.0
    %1951 = vmatpush1.msra.mxu0 0.0
    %1952 = vmatprep.subr.mxu0 0.0
    %1953 = vmatpush1.msra.mxu0 0.0
    %1954 = vmatprep.subr.mxu0 0.0
    %1955 = vmatpush1.msra.mxu0 0.0
    %1956 = vmatprep.subr.mxu0 0.0
    %1957 = vmatpush1.msra.mxu0 0.0
    %1958 = vmatprep.subr.mxu0 0.0
    %1959 = vmatpush1.msra.mxu0 0.0
    %1960 = vmatprep.subr.mxu0 0.0
    %1961 = vmatpush1.msra.mxu0 0.0
    %1962 = vmatprep.subr.mxu0 0.0
    %1963 = vmatpush1.msra.mxu0 0.0
    %1964 = vmatprep.subr.mxu0 0.0
    %1965 = vmatpush1.msra.mxu0 0.0
    %1966 = vmatprep.subr.mxu0 0.0
    %1967 = vmatpush1.msra.mxu0 0.0
    %1968 = vmatprep.subr.mxu0 0.0
    %1969 = vmatpush1.msra.mxu0 0.0
    %1970 = vmatprep.subr.mxu0 0.0
    %1971 = vmatpush1.msra.mxu0 0.0
    %1972 = vmatprep.subr.mxu0 0.0
    %1973 = vmatpush1.msra.mxu0 0.0
    %1974 = vmatprep.subr.mxu0 0.0
    %1975 = vmatpush1.msra.mxu0 0.0
    %1976 = vmatprep.subr.mxu0 0.0
    %1977 = vmatpush1.msra.mxu0 0.0
    %1978 = vmatprep.subr.mxu0 0.0
    %1979 = vmatpush1.msra.mxu0 0.0
    %1980 = vmatprep.subr.mxu0 0.0
    %1981 = vmatpush1.msra.mxu0 0.0
    %1982 = vmatprep.subr.mxu0 0.0
    %1983 = vmatpush1.msra.mxu0 0.0
    %1984 = vmatprep.subr.mxu0 0.0
    %1985 = vmatpush1.msra.mxu0 0.0
    %1986 = vmatprep.subr.mxu0 0.0
    %1987 = vmatpush1.msra.mxu0 0.0
    %1988 = vmatprep.subr.mxu0 0.0
    %1989 = vmatpush1.msra.mxu0 0.0
    %1990 = vmatprep.subr.mxu0 0.0
    %1991 = vmatpush1.msra.mxu0 0.0
    %1992 = vmatprep.subr.mxu0 0.0
    %1993 = vmatpush1.msra.mxu0 0.0
    %1994 = vmatprep.mubr.f32.mxu0 0.0
    %1995 = vmatmul.mubr.f32.gmra.mrb[0].mxu0 %v1883
    %v1996 = vpop.f32.mrb[0].mxu0
    %v1997 = vadd.f32 0.0, %v1996
    %v1998 = vpop.f32.mrb[0].mxu0
    %1999 = vmatprep.mubr.f32.mxu0 0.0
    %2000 = vmatmul.mubr.f32.gmra.mrb[0].mxu0 %v1886
    %v2001 = vpop.f32.mrb[0].mxu0
    %v2002 = vadd.f32 0.0, %v2001
    %v2003 = vpop.f32.mrb[0].mxu0
    %2004 = vmatprep.mubr.f32.mxu0 0.0
    %2005 = vmatmul.mubr.f32.gmra.mrb[0].mxu0 %v1889
    %v2006 = vpop.f32.mrb[0].mxu0
    %v2007 = vadd.f32 0.0, %v2006
    %v2008 = vpop.f32.mrb[0].mxu0
    %2009 = vmatprep.mubr.f32.mxu0 0.0
    %2010 = vmatmul.mubr.f32.gmra.mrb[0].mxu0 %v1892
    %v2011 = vpop.f32.mrb[0].mxu0
    %v2012 = vadd.f32 0.0, %v2011
    %v2013 = vpop.f32.mrb[0].mxu0
    %2014 = vmatprep.mubr.f32.mxu0 0.0
    %2015 = vmatmul.mubr.f32.gmra.mrb[0].mxu0 %v1895
    %v2016 = vpop.f32.mrb[0].mxu0
    %v2017 = vadd.f32 0.0, %v2016
    %v2018 = vpop.f32.mrb[0].mxu0
    %2019 = vmatprep.mubr.f32.mxu0 0.0
    %2020 = vmatmul.mubr.f32.gmra.mrb[0].mxu0 %v1898
    %v2021 = vpop.f32.mrb[0].mxu0
    %v2022 = vadd.f32 0.0, %v2021
    %v2023 = vpop.f32.mrb[0].mxu0
    %2024 = vmatprep.mubr.f32.mxu0 0.0
    %2025 = vmatmul.mubr.f32.gmra.mrb[0].mxu0 %v1901
    %v2026 = vpop.f32.mrb[0].mxu0
    %v2027 = vadd.f32 0.0, %v2026
    %v2028 = vpop.f32.mrb[0].mxu0
    %2029 = vmatprep.mubr.f32.mxu0 0.0
    %2030 = vmatmul.mubr.f32.gmra.mrb[0].mxu0 %v1904
    %v2031 = vpop.f32.mrb[0].mxu0
    %v2032 = vadd.f32 0.0, %v2031
    %v2033 = vpop.f32.mrb[0].mxu0
    %2034 = vmatprep.mubr.f32.mxu0 0.0
    %2035 = vmatmul.mubr.f32.gmra.mrb[0].mxu0 %v1907
    %v2036 = vpop.f32.mrb[0].mxu0
    %v2037 = vadd.f32 0.0, %v2036
    %v2038 = vpop.f32.mrb[0].mxu0
    %2039 = vmatprep.mubr.f32.mxu0 0.0
    %2040 = vmatmul.mubr.f32.gmra.mrb[0].mxu0 %v1910
    %v2041 = vpop.f32.mrb[0].mxu0
    %v2042 = vadd.f32 0.0, %v2041
    %v2043 = vpop.f32.mrb[0].mxu0
    %2044 = vmatprep.mubr.f32.mxu0 0.0
    %2045 = vmatmul.mubr.f32.gmra.mrb[0].mxu0 %v1913
    %v2046 = vpop.f32.mrb[0].mxu0
    %v2047 = vadd.f32 0.0, %v2046
    %v2048 = vpop.f32.mrb[0].mxu0
    %2049 = vmatprep.mubr.f32.mxu0 0.0
    %2050 = vmatmul.mubr.f32.gmra.mrb[0].mxu0 %v1916
    %v2051 = vpop.f32.mrb[0].mxu0
    %v2052 = vadd.f32 0.0, %v2051
    %v2053 = vpop.f32.mrb[0].mxu0
    %2054 = vmatprep.mubr.f32.mxu0 0.0
    %2055 = vmatmul.mubr.f32.gmra.mrb[0].mxu0 %v1919
    %v2056 = vpop.f32.mrb[0].mxu0
    %v2057 = vadd.f32 0.0, %v2056
    %v2058 = vpop.f32.mrb[0].mxu0
    %2059 = vmatprep.mubr.f32.mxu0 0.0
    %2060 = vmatmul.mubr.f32.gmra.mrb[0].mxu0 %v1922
    %v2061 = vpop.f32.mrb[0].mxu0
    %v2062 = vadd.f32 0.0, %v2061
    %v2063 = vpop.f32.mrb[0].mxu0
    %2064 = vmatprep.mubr.f32.mxu0 0.0
    %2065 = vmatmul.mubr.f32.gmra.mrb[0].mxu0 %v1925
    %v2066 = vpop.f32.mrb[0].mxu0
    %v2067 = vadd.f32 0.0, %v2066
    %v2068 = vpop.f32.mrb[0].mxu0
    %2069 = vmatprep.mubr.f32.mxu0 0.0
    %2070 = vmatmul.mubr.f32.gmra.mrb[0].mxu0 %v1928
    %v2071 = vpop.f32.mrb[0].mxu0
    %v2072 = vadd.f32 0.0, %v2071
    %v2073 = vpop.f32.mrb[0].mxu0
    %2074 = vdwg.mxu0
    %v2075 = vadd.f32 %v1833, %v1997
    %v2076 = vadd.f32 %v1834, %v2002
    %v2077 = vadd.f32 %v1835, %v2007
    %v2078 = vadd.f32 %v1836, %v2012
    %v2079 = vadd.f32 %v1837, %v2017
    %v2080 = vadd.f32 %v1838, %v2022
    %v2081 = vadd.f32 %v1839, %v2027
    %v2082 = vadd.f32 %v1840, %v2032
    %v2083 = vadd.f32 %v1841, %v2037
    %v2084 = vadd.f32 %v1842, %v2042
    %v2085 = vadd.f32 %v1843, %v2047
    %v2086 = vadd.f32 %v1844, %v2052
    %v2087 = vadd.f32 %v1845, %v2057
    %v2088 = vadd.f32 %v1846, %v2062
    %v2089 = vadd.f32 %v1847, %v2067
    %v2090 = vadd.f32 %v1848, %v2072
    %v2091 = vld [vmem:[%s2] sm:$0x1]
    %v2093 = vlaneseq
    %v2094 = vshrl.u32 %v2093, 7
    %v2095 = vsub.s32 0, %v2094
    %v2096 = vrot.slane %v2091, %v2095
    %v2098 = vadd.f32 %v2075, %v2096
    %v2099 = vadd.f32 %v2076, %v2096
    %v2100 = vadd.f32 %v2077, %v2096
    %v2101 = vadd.f32 %v2078, %v2096
    %v2102 = vadd.f32 %v2079, %v2096
    %v2103 = vadd.f32 %v2080, %v2096
    %v2104 = vadd.f32 %v2081, %v2096
    %v2105 = vadd.f32 %v2082, %v2096
    %v2106 = vadd.f32 %v2083, %v2096
    %v2107 = vadd.f32 %v2084, %v2096
    %v2108 = vadd.f32 %v2085, %v2096
    %v2109 = vadd.f32 %v2086, %v2096
    %v2110 = vadd.f32 %v2087, %v2096
    %v2111 = vadd.f32 %v2088, %v2096
    %v2112 = vadd.f32 %v2089, %v2096
    %v2113 = vadd.f32 %v2090, %v2096
    %2114 = vst.msk [vmem:[#allocation2] sm:$0xff] %vm210, 0.0
    %vm2115 = vcmask 123904
    %2116 = vst.msk [vmem:[#allocation2 + $0x8] sm:$0x3] %vm2115, 0.0
    %2117 = vst.msk [vmem:[#allocation2 + $0xa0] sm:$0xff] %vm210, 0.0
    %2118 = vst.msk [vmem:[#allocation2 + $0xa8] sm:$0x3] %vm2115, 0.0
    %s2119 = scalar_lea.vmem [#allocation2], 144
    %2120 = vst.msk [vmem:[%s2119] sm:$0xff] %vm210, 0.0
    %2121 = vst.msk [vmem:[%s2119 + $0x8] sm:$0x3] %vm2115, 0.0
    %2122 = vst.msk [vmem:[%s2119 + $0xa0] sm:$0xff] %vm210, 0.0
    %2123 = vst.msk [vmem:[%s2119 + $0xa8] sm:$0x3] %vm2115, 0.0
    %vm2124 = vcmask 122880
    %2125 = vst.msk [vmem:[#allocation2] sm:$0x1] %vm2124, 0.0
    %2126 = vst.msk [vmem:[#allocation2 + $0x10] sm:$0x1] %vm2124, 0.0
    %2127 = vst.msk [vmem:[#allocation2 + $0x20] sm:$0x1] %vm2124, 0.0
    %2128 = vst.msk [vmem:[#allocation2 + $0x30] sm:$0x1] %vm2124, 0.0
    %2129 = vst.msk [vmem:[#allocation2 + $0x40] sm:$0x1] %vm2124, 0.0
    %2130 = vst.msk [vmem:[#allocation2 + $0x50] sm:$0x1] %vm2124, 0.0
    %2131 = vst.msk [vmem:[#allocation2 + $0x60] sm:$0x1] %vm2124, 0.0
    %2132 = vst.msk [vmem:[#allocation2 + $0x70] sm:$0x1] %vm2124, 0.0
    %2133 = vst.msk [vmem:[#allocation2 + $0x80] sm:$0x1] %vm2124, 0.0
    %2134 = vst.msk [vmem:[#allocation2 + $0x90] sm:$0x1] %vm2124, 0.0
    %2135 = vst.msk [vmem:[#allocation2 + $0xa0] sm:$0x1] %vm2124, 0.0
    %2136 = vst.msk [vmem:[#allocation2 + $0xb0] sm:$0x1] %vm2124, 0.0
    %2137 = vst.msk [vmem:[#allocation2 + $0xc0] sm:$0x1] %vm2124, 0.0
    %2138 = vst.msk [vmem:[#allocation2 + $0xd0] sm:$0x1] %vm2124, 0.0
    %2139 = vst.msk [vmem:[#allocation2 + $0xe0] sm:$0x1] %vm2124, 0.0
    %2140 = vst.msk [vmem:[#allocation2 + $0xf0] sm:$0x1] %vm2124, 0.0
    %2141 = vst.msk [vmem:[#allocation2 + $0x100] sm:$0x1] %vm2124, 0.0
    %2142 = vst.msk [vmem:[#allocation2 + $0x110] sm:$0x1] %vm2124, 0.0
    %2143 = vst.msk [vmem:[#allocation2 + $0x120] sm:$0x1] %vm2124, 0.0
    %2144 = vst.msk [vmem:[#allocation2 + $0x130] sm:$0x1] %vm2124, 0.0
    %2145 = vst.msk [vmem:[#allocation2 + $0x9] sm:$0x1] %vm2124, 0.0
    %2146 = vst.msk [vmem:[#allocation2 + $0x19] sm:$0x1] %vm2124, 0.0
    %2147 = vst.msk [vmem:[#allocation2 + $0x29] sm:$0x1] %vm2124, 0.0
    %2148 = vst.msk [vmem:[#allocation2 + $0x39] sm:$0x1] %vm2124, 0.0
    %2149 = vst.msk [vmem:[#allocation2 + $0x49] sm:$0x1] %vm2124, 0.0
    %2150 = vst.msk [vmem:[#allocation2 + $0x59] sm:$0x1] %vm2124, 0.0
    %2151 = vst.msk [vmem:[#allocation2 + $0x69] sm:$0x1] %vm2124, 0.0
    %2152 = vst.msk [vmem:[#allocation2 + $0x79] sm:$0x1] %vm2124, 0.0
    %2153 = vst.msk [vmem:[#allocation2 + $0x89] sm:$0x1] %vm2124, 0.0
    %2154 = vst.msk [vmem:[#allocation2 + $0x99] sm:$0x1] %vm2124, 0.0
    %2155 = vst.msk [vmem:[#allocation2 + $0xa9] sm:$0x1] %vm2124, 0.0
    %2156 = vst.msk [vmem:[#allocation2 + $0xb9] sm:$0x1] %vm2124, 0.0
    %2157 = vst.msk [vmem:[#allocation2 + $0xc9] sm:$0x1] %vm2124, 0.0
    %2158 = vst.msk [vmem:[#allocation2 + $0xd9] sm:$0x1] %vm2124, 0.0
    %2159 = vst.msk [vmem:[#allocation2 + $0xe9] sm:$0x1] %vm2124, 0.0
    %2160 = vst.msk [vmem:[#allocation2 + $0xf9] sm:$0x1] %vm2124, 0.0
    %2161 = vst.msk [vmem:[#allocation2 + $0x109] sm:$0x1] %vm2124, 0.0
    %2162 = vst.msk [vmem:[#allocation2 + $0x119] sm:$0x1] %vm2124, 0.0
    %2163 = vst.msk [vmem:[#allocation2 + $0x129] sm:$0x1] %vm2124, 0.0
    %2164 = vst.msk [vmem:[#allocation2 + $0x139] sm:$0x1] %vm2124, 0.0
    %v2165 = vmax.f32 %v2098, 0.0
    %v2166 = vmax.f32 %v2099, 0.0
    %v2167 = vmax.f32 %v2100, 0.0
    %v2168 = vmax.f32 %v2101, 0.0
    %v2169 = vmax.f32 %v2102, 0.0
    %v2170 = vmax.f32 %v2103, 0.0
    %v2171 = vmax.f32 %v2104, 0.0
    %v2172 = vmax.f32 %v2105, 0.0
    %v2173 = vmax.f32 %v2106, 0.0
    %v2174 = vmax.f32 %v2107, 0.0
    %v2175 = vmax.f32 %v2108, 0.0
    %v2176 = vmax.f32 %v2109, 0.0
    %v2177 = vmax.f32 %v2110, 0.0
    %v2178 = vmax.f32 %v2111, 0.0
    %v2179 = vmax.f32 %v2112, 0.0
    %v2180 = vmax.f32 %v2113, 0.0
    %s2181 = scalar_lea.vmem [#allocation2], 16
    %2182 = vst.msk [vmem:[%s2181 + $0x1] sm:$0xff] %vm210, %v2165
    %2183 = vst.msk [vmem:[%s2181 + $0x11] sm:$0xff] %vm210, %v2166
    %2184 = vst.msk [vmem:[%s2181 + $0x21] sm:$0xff] %vm210, %v2167
    %2185 = vst.msk [vmem:[%s2181 + $0x31] sm:$0xff] %vm210, %v2168
    %2186 = vst.msk [vmem:[%s2181 + $0x41] sm:$0xff] %vm210, %v2169
    %2187 = vst.msk [vmem:[%s2181 + $0x51] sm:$0xff] %vm210, %v2170
    %2188 = vst.msk [vmem:[%s2181 + $0x61] sm:$0xff] %vm210, %v2171
    %2189 = vst.msk [vmem:[%s2181 + $0x71] sm:$0xff] %vm210, %v2172
    %2190 = vst.msk [vmem:[%s2181 + $0xa1] sm:$0xff] %vm210, %v2173
    %2191 = vst.msk [vmem:[%s2181 + $0xb1] sm:$0xff] %vm210, %v2174
    %2192 = vst.msk [vmem:[%s2181 + $0xc1] sm:$0xff] %vm210, %v2175
    %2193 = vst.msk [vmem:[%s2181 + $0xd1] sm:$0xff] %vm210, %v2176
    %2194 = vst.msk [vmem:[%s2181 + $0xe1] sm:$0xff] %vm210, %v2177
    %2195 = vst.msk [vmem:[%s2181 + $0xf1] sm:$0xff] %vm210, %v2178
    %2196 = vst.msk [vmem:[%s2181 + $0x101] sm:$0xff] %vm210, %v2179
    %2197 = vst.msk [vmem:[%s2181 + $0x111] sm:$0xff] %vm210, %v2180
    %v2198 = vld [vmem:[#allocation2] sm:$0xff]
    %v2199 = vld [vmem:[#allocation2 + $0x10] sm:$0xff]
    %v2200 = vld [vmem:[#allocation2 + $0x20] sm:$0xff]
    %v2201 = vld [vmem:[#allocation2 + $0x30] sm:$0xff]
    %v2202 = vld [vmem:[#allocation2 + $0x40] sm:$0xff]
    %v2203 = vld [vmem:[#allocation2 + $0x50] sm:$0xff]
    %v2204 = vld [vmem:[#allocation2 + $0x60] sm:$0xff]
    %v2205 = vld [vmem:[#allocation2 + $0x70] sm:$0xff]
    %v2206 = vld [vmem:[#allocation2 + $0xa0] sm:$0xff]
    %v2207 = vld [vmem:[#allocation2 + $0xb0] sm:$0xff]
    %v2208 = vld [vmem:[#allocation2 + $0xc0] sm:$0xff]
    %v2209 = vld [vmem:[#allocation2 + $0xd0] sm:$0xff]
    %v2210 = vld [vmem:[#allocation2 + $0xe0] sm:$0xff]
    %v2211 = vld [vmem:[#allocation2 + $0xf0] sm:$0xff]
    %v2212 = vld [vmem:[#allocation2 + $0x100] sm:$0xff]
    %v2213 = vld [vmem:[#allocation2 + $0x110] sm:$0xff]
    %v2214 = vld [vmem:[#allocation2 + $0x1] sm:$0xff]
    %v2215 = vld [vmem:[#allocation2 + $0x11] sm:$0xff]
    %v2216 = vld [vmem:[#allocation2 + $0x21] sm:$0xff]
    %v2217 = vld [vmem:[#allocation2 + $0x31] sm:$0xff]
    %v2218 = vld [vmem:[#allocation2 + $0x41] sm:$0xff]
    %v2219 = vld [vmem:[#allocation2 + $0x51] sm:$0xff]
    %v2220 = vld [vmem:[#allocation2 + $0x61] sm:$0xff]
    %v2221 = vld [vmem:[#allocation2 + $0x71] sm:$0xff]
    %v2222 = vld [vmem:[#allocation2 + $0xa1] sm:$0xff]
    %v2223 = vld [vmem:[#allocation2 + $0xb1] sm:$0xff]
    %v2224 = vld [vmem:[#allocation2 + $0xc1] sm:$0xff]
    %v2225 = vld [vmem:[#allocation2 + $0xd1] sm:$0xff]
    %v2226 = vld [vmem:[#allocation2 + $0xe1] sm:$0xff]
    %v2227 = vld [vmem:[#allocation2 + $0xf1] sm:$0xff]
    %v2228 = vld [vmem:[#allocation2 + $0x101] sm:$0xff]
    %v2229 = vld [vmem:[#allocation2 + $0x111] sm:$0xff]
    %v2231 = vsel %vm210, %v2214, 0
    %v2234 = vsel %vm210, %v2215, 0
    %v2237 = vsel %vm210, %v2216, 0
    %v2240 = vsel %vm210, %v2217, 0
    %v2243 = vsel %vm210, %v2218, 0
    %v2246 = vsel %vm210, %v2219, 0
    %v2249 = vsel %vm210, %v2220, 0
    %v2252 = vsel %vm210, %v2221, 0
    %v2255 = vsel %vm210, %v2222, 0
    %v2258 = vsel %vm210, %v2223, 0
    %v2261 = vsel %vm210, %v2224, 0
    %v2264 = vsel %vm210, %v2225, 0
    %v2267 = vsel %vm210, %v2226, 0
    %v2270 = vsel %vm210, %v2227, 0
    %v2273 = vsel %vm210, %v2228, 0
    %v2276 = vsel %vm210, %v2229, 0
    %2278 = vmatprep.subr.mxu0 0.0
    %2279 = vmatpush1.msra.mxu0 %v41
    %2280 = vmatprep.subr.mxu0 0.0
    %2281 = vmatpush1.msra.mxu0 %v42
    %2282 = vmatprep.subr.mxu0 0.0
    %2283 = vmatpush1.msra.mxu0 0.0
    %2284 = vmatprep.subr.mxu0 0.0
    %2285 = vmatpush1.msra.mxu0 0.0
    %2286 = vmatprep.subr.mxu0 0.0
    %2287 = vmatpush1.msra.mxu0 0.0
    %2288 = vmatprep.subr.mxu0 0.0
    %2289 = vmatpush1.msra.mxu0 0.0
    %2290 = vmatprep.subr.mxu0 0.0
    %2291 = vmatpush1.msra.mxu0 0.0
    %2292 = vmatprep.subr.mxu0 0.0
    %2293 = vmatpush1.msra.mxu0 0.0
    %2294 = vmatprep.subr.mxu0 0.0
    %2295 = vmatpush1.msra.mxu0 0.0
    %2296 = vmatprep.subr.mxu0 0.0
    %2297 = vmatpush1.msra.mxu0 0.0
    %2298 = vmatprep.subr.mxu0 0.0
    %2299 = vmatpush1.msra.mxu0 0.0
    %2300 = vmatprep.subr.mxu0 0.0
    %2301 = vmatpush1.msra.mxu0 0.0
    %2302 = vmatprep.subr.mxu0 0.0
    %2303 = vmatpush1.msra.mxu0 0.0
    %2304 = vmatprep.subr.mxu0 0.0
    %2305 = vmatpush1.msra.mxu0 0.0
    %2306 = vmatprep.subr.mxu0 0.0
    %2307 = vmatpush1.msra.mxu0 0.0
    %2308 = vmatprep.subr.mxu0 0.0
    %2309 = vmatpush1.msra.mxu0 0.0
    %2310 = vmatprep.subr.mxu0 0.0
    %2311 = vmatpush1.msra.mxu0 0.0
    %2312 = vmatprep.subr.mxu0 0.0
    %2313 = vmatpush1.msra.mxu0 0.0
    %2314 = vmatprep.subr.mxu0 0.0
    %2315 = vmatpush1.msra.mxu0 0.0
    %2316 = vmatprep.subr.mxu0 0.0
    %2317 = vmatpush1.msra.mxu0 0.0
    %2318 = vmatprep.subr.mxu0 0.0
    %2319 = vmatpush1.msra.mxu0 0.0
    %2320 = vmatprep.subr.mxu0 0.0
    %2321 = vmatpush1.msra.mxu0 0.0
    %2322 = vmatprep.subr.mxu0 0.0
    %2323 = vmatpush1.msra.mxu0 0.0
    %2324 = vmatprep.subr.mxu0 0.0
    %2325 = vmatpush1.msra.mxu0 0.0
    %2326 = vmatprep.subr.mxu0 0.0
    %2327 = vmatpush1.msra.mxu0 0.0
    %2328 = vmatprep.subr.mxu0 0.0
    %2329 = vmatpush1.msra.mxu0 0.0
    %2330 = vmatprep.subr.mxu0 0.0
    %2331 = vmatpush1.msra.mxu0 0.0
    %2332 = vmatprep.subr.mxu0 0.0
    %2333 = vmatpush1.msra.mxu0 0.0
    %2334 = vmatprep.subr.mxu0 0.0
    %2335 = vmatpush1.msra.mxu0 0.0
    %2336 = vmatprep.subr.mxu0 0.0
    %2337 = vmatpush1.msra.mxu0 0.0
    %2338 = vmatprep.subr.mxu0 0.0
    %2339 = vmatpush1.msra.mxu0 0.0
    %2340 = vmatprep.subr.mxu0 0.0
    %2341 = vmatpush1.msra.mxu0 0.0
    %2342 = vmatprep.mubr.f32.mxu0 0.0
    %2343 = vmatmul.mubr.f32.gmra.mrb[0].mxu0 %v2231
    %v2344 = vpop.f32.mrb[0].mxu0
    %v2345 = vadd.f32 0.0, %v2344
    %v2346 = vpop.f32.mrb[0].mxu0
    %2347 = vmatprep.mubr.f32.mxu0 0.0
    %2348 = vmatmul.mubr.f32.gmra.mrb[0].mxu0 %v2234
    %v2349 = vpop.f32.mrb[0].mxu0
    %v2350 = vadd.f32 0.0, %v2349
    %v2351 = vpop.f32.mrb[0].mxu0
    %2352 = vmatprep.mubr.f32.mxu0 0.0
    %2353 = vmatmul.mubr.f32.gmra.mrb[0].mxu0 %v2237
    %v2354 = vpop.f32.mrb[0].mxu0
    %v2355 = vadd.f32 0.0, %v2354
    %v2356 = vpop.f32.mrb[0].mxu0
    %2357 = vmatprep.mubr.f32.mxu0 0.0
    %2358 = vmatmul.mubr.f32.gmra.mrb[0].mxu0 %v2240
    %v2359 = vpop.f32.mrb[0].mxu0
    %v2360 = vadd.f32 0.0, %v2359
    %v2361 = vpop.f32.mrb[0].mxu0
    %2362 = vmatprep.mubr.f32.mxu0 0.0
    %2363 = vmatmul.mubr.f32.gmra.mrb[0].mxu0 %v2243
    %v2364 = vpop.f32.mrb[0].mxu0
    %v2365 = vadd.f32 0.0, %v2364
    %v2366 = vpop.f32.mrb[0].mxu0
    %2367 = vmatprep.mubr.f32.mxu0 0.0
    %2368 = vmatmul.mubr.f32.gmra.mrb[0].mxu0 %v2246
    %v2369 = vpop.f32.mrb[0].mxu0
    %v2370 = vadd.f32 0.0, %v2369
    %v2371 = vpop.f32.mrb[0].mxu0
    %2372 = vmatprep.mubr.f32.mxu0 0.0
    %2373 = vmatmul.mubr.f32.gmra.mrb[0].mxu0 %v2249
    %v2374 = vpop.f32.mrb[0].mxu0
    %v2375 = vadd.f32 0.0, %v2374
    %v2376 = vpop.f32.mrb[0].mxu0
    %2377 = vmatprep.mubr.f32.mxu0 0.0
    %2378 = vmatmul.mubr.f32.gmra.mrb[0].mxu0 %v2252
    %v2379 = vpop.f32.mrb[0].mxu0
    %v2380 = vadd.f32 0.0, %v2379
    %v2381 = vpop.f32.mrb[0].mxu0
    %2382 = vmatprep.mubr.f32.mxu0 0.0
    %2383 = vmatmul.mubr.f32.gmra.mrb[0].mxu0 %v2255
    %v2384 = vpop.f32.mrb[0].mxu0
    %v2385 = vadd.f32 0.0, %v2384
    %v2386 = vpop.f32.mrb[0].mxu0
    %2387 = vmatprep.mubr.f32.mxu0 0.0
    %2388 = vmatmul.mubr.f32.gmra.mrb[0].mxu0 %v2258
    %v2389 = vpop.f32.mrb[0].mxu0
    %v2390 = vadd.f32 0.0, %v2389
    %v2391 = vpop.f32.mrb[0].mxu0
    %2392 = vmatprep.mubr.f32.mxu0 0.0
    %2393 = vmatmul.mubr.f32.gmra.mrb[0].mxu0 %v2261
    %v2394 = vpop.f32.mrb[0].mxu0
    %v2395 = vadd.f32 0.0, %v2394
    %v2396 = vpop.f32.mrb[0].mxu0
    %2397 = vmatprep.mubr.f32.mxu0 0.0
    %2398 = vmatmul.mubr.f32.gmra.mrb[0].mxu0 %v2264
    %v2399 = vpop.f32.mrb[0].mxu0
    %v2400 = vadd.f32 0.0, %v2399
    %v2401 = vpop.f32.mrb[0].mxu0
    %2402 = vmatprep.mubr.f32.mxu0 0.0
    %2403 = vmatmul.mubr.f32.gmra.mrb[0].mxu0 %v2267
    %v2404 = vpop.f32.mrb[0].mxu0
    %v2405 = vadd.f32 0.0, %v2404
    %v2406 = vpop.f32.mrb[0].mxu0
    %2407 = vmatprep.mubr.f32.mxu0 0.0
    %2408 = vmatmul.mubr.f32.gmra.mrb[0].mxu0 %v2270
    %v2409 = vpop.f32.mrb[0].mxu0
    %v2410 = vadd.f32 0.0, %v2409
    %v2411 = vpop.f32.mrb[0].mxu0
    %2412 = vmatprep.mubr.f32.mxu0 0.0
    %2413 = vmatmul.mubr.f32.gmra.mrb[0].mxu0 %v2273
    %v2414 = vpop.f32.mrb[0].mxu0
    %v2415 = vadd.f32 0.0, %v2414
    %v2416 = vpop.f32.mrb[0].mxu0
    %2417 = vmatprep.mubr.f32.mxu0 0.0
    %2418 = vmatmul.mubr.f32.gmra.mrb[0].mxu0 %v2276
    %v2419 = vpop.f32.mrb[0].mxu0
    %v2420 = vadd.f32 0.0, %v2419
    %v2421 = vpop.f32.mrb[0].mxu0
    %2422 = vdwg.mxu0
    %v2424 = vsel %vm210, %v2198, 0
    %v2427 = vsel %vm210, %v2199, 0
    %v2430 = vsel %vm210, %v2200, 0
    %v2433 = vsel %vm210, %v2201, 0
    %v2436 = vsel %vm210, %v2202, 0
    %v2439 = vsel %vm210, %v2203, 0
    %v2442 = vsel %vm210, %v2204, 0
    %v2445 = vsel %vm210, %v2205, 0
    %v2448 = vsel %vm210, %v2206, 0
    %v2451 = vsel %vm210, %v2207, 0
    %v2454 = vsel %vm210, %v2208, 0
    %v2457 = vsel %vm210, %v2209, 0
    %v2460 = vsel %vm210, %v2210, 0
    %v2463 = vsel %vm210, %v2211, 0
    %v2466 = vsel %vm210, %v2212, 0
    %v2469 = vsel %vm210, %v2213, 0
    %2471 = vmatprep.subr.mxu0 0.0
    %2472 = vmatpush1.msra.mxu0 %v39
    %2473 = vmatprep.subr.mxu0 0.0
    %2474 = vmatpush1.msra.mxu0 %v40
    %2475 = vmatprep.subr.mxu0 0.0
    %2476 = vmatpush1.msra.mxu0 0.0
    %2477 = vmatprep.subr.mxu0 0.0
    %2478 = vmatpush1.msra.mxu0 0.0
    %2479 = vmatprep.subr.mxu0 0.0
    %2480 = vmatpush1.msra.mxu0 0.0
    %2481 = vmatprep.subr.mxu0 0.0
    %2482 = vmatpush1.msra.mxu0 0.0
    %2483 = vmatprep.subr.mxu0 0.0
    %2484 = vmatpush1.msra.mxu0 0.0
    %2485 = vmatprep.subr.mxu0 0.0
    %2486 = vmatpush1.msra.mxu0 0.0
    %2487 = vmatprep.subr.mxu0 0.0
    %2488 = vmatpush1.msra.mxu0 0.0
    %2489 = vmatprep.subr.mxu0 0.0
    %2490 = vmatpush1.msra.mxu0 0.0
    %2491 = vmatprep.subr.mxu0 0.0
    %2492 = vmatpush1.msra.mxu0 0.0
    %2493 = vmatprep.subr.mxu0 0.0
    %2494 = vmatpush1.msra.mxu0 0.0
    %2495 = vmatprep.subr.mxu0 0.0
    %2496 = vmatpush1.msra.mxu0 0.0
    %2497 = vmatprep.subr.mxu0 0.0
    %2498 = vmatpush1.msra.mxu0 0.0
    %2499 = vmatprep.subr.mxu0 0.0
    %2500 = vmatpush1.msra.mxu0 0.0
    %2501 = vmatprep.subr.mxu0 0.0
    %2502 = vmatpush1.msra.mxu0 0.0
    %2503 = vmatprep.subr.mxu0 0.0
    %2504 = vmatpush1.msra.mxu0 0.0
    %2505 = vmatprep.subr.mxu0 0.0
    %2506 = vmatpush1.msra.mxu0 0.0
    %2507 = vmatprep.subr.mxu0 0.0
    %2508 = vmatpush1.msra.mxu0 0.0
    %2509 = vmatprep.subr.mxu0 0.0
    %2510 = vmatpush1.msra.mxu0 0.0
    %2511 = vmatprep.subr.mxu0 0.0
    %2512 = vmatpush1.msra.mxu0 0.0
    %2513 = vmatprep.subr.mxu0 0.0
    %2514 = vmatpush1.msra.mxu0 0.0
    %2515 = vmatprep.subr.mxu0 0.0
    %2516 = vmatpush1.msra.mxu0 0.0
    %2517 = vmatprep.subr.mxu0 0.0
    %2518 = vmatpush1.msra.mxu0 0.0
    %2519 = vmatprep.subr.mxu0 0.0
    %2520 = vmatpush1.msra.mxu0 0.0
    %2521 = vmatprep.subr.mxu0 0.0
    %2522 = vmatpush1.msra.mxu0 0.0
    %2523 = vmatprep.subr.mxu0 0.0
    %2524 = vmatpush1.msra.mxu0 0.0
    %2525 = vmatprep.subr.mxu0 0.0
    %2526 = vmatpush1.msra.mxu0 0.0
    %2527 = vmatprep.subr.mxu0 0.0
    %2528 = vmatpush1.msra.mxu0 0.0
    %2529 = vmatprep.subr.mxu0 0.0
    %2530 = vmatpush1.msra.mxu0 0.0
    %2531 = vmatprep.subr.mxu0 0.0
    %2532 = vmatpush1.msra.mxu0 0.0
    %2533 = vmatprep.subr.mxu0 0.0
    %2534 = vmatpush1.msra.mxu0 0.0
    %2535 = vmatprep.mubr.f32.mxu0 0.0
    %2536 = vmatmul.mubr.f32.gmra.mrb[0].mxu0 %v2424
    %v2537 = vpop.f32.mrb[0].mxu0
    %v2538 = vadd.f32 %v2345, %v2537
    %v2539 = vpop.f32.mrb[0].mxu0
    %2540 = vmatprep.mubr.f32.mxu0 0.0
    %2541 = vmatmul.mubr.f32.gmra.mrb[0].mxu0 %v2427
    %v2542 = vpop.f32.mrb[0].mxu0
    %v2543 = vadd.f32 %v2350, %v2542
    %v2544 = vpop.f32.mrb[0].mxu0
    %2545 = vmatprep.mubr.f32.mxu0 0.0
    %2546 = vmatmul.mubr.f32.gmra.mrb[0].mxu0 %v2430
    %v2547 = vpop.f32.mrb[0].mxu0
    %v2548 = vadd.f32 %v2355, %v2547
    %v2549 = vpop.f32.mrb[0].mxu0
    %2550 = vmatprep.mubr.f32.mxu0 0.0
    %2551 = vmatmul.mubr.f32.gmra.mrb[0].mxu0 %v2433
    %v2552 = vpop.f32.mrb[0].mxu0
    %v2553 = vadd.f32 %v2360, %v2552
    %v2554 = vpop.f32.mrb[0].mxu0
    %2555 = vmatprep.mubr.f32.mxu0 0.0
    %2556 = vmatmul.mubr.f32.gmra.mrb[0].mxu0 %v2436
    %v2557 = vpop.f32.mrb[0].mxu0
    %v2558 = vadd.f32 %v2365, %v2557
    %v2559 = vpop.f32.mrb[0].mxu0
    %2560 = vmatprep.mubr.f32.mxu0 0.0
    %2561 = vmatmul.mubr.f32.gmra.mrb[0].mxu0 %v2439
    %v2562 = vpop.f32.mrb[0].mxu0
    %v2563 = vadd.f32 %v2370, %v2562
    %v2564 = vpop.f32.mrb[0].mxu0
    %2565 = vmatprep.mubr.f32.mxu0 0.0
    %2566 = vmatmul.mubr.f32.gmra.mrb[0].mxu0 %v2442
    %v2567 = vpop.f32.mrb[0].mxu0
    %v2568 = vadd.f32 %v2375, %v2567
    %v2569 = vpop.f32.mrb[0].mxu0
    %2570 = vmatprep.mubr.f32.mxu0 0.0
    %2571 = vmatmul.mubr.f32.gmra.mrb[0].mxu0 %v2445
    %v2572 = vpop.f32.mrb[0].mxu0
    %v2573 = vadd.f32 %v2380, %v2572
    %v2574 = vpop.f32.mrb[0].mxu0
    %2575 = vmatprep.mubr.f32.mxu0 0.0
    %2576 = vmatmul.mubr.f32.gmra.mrb[0].mxu0 %v2448
    %v2577 = vpop.f32.mrb[0].mxu0
    %v2578 = vadd.f32 %v2385, %v2577
    %v2579 = vpop.f32.mrb[0].mxu0
    %2580 = vmatprep.mubr.f32.mxu0 0.0
    %2581 = vmatmul.mubr.f32.gmra.mrb[0].mxu0 %v2451
    %v2582 = vpop.f32.mrb[0].mxu0
    %v2583 = vadd.f32 %v2390, %v2582
    %v2584 = vpop.f32.mrb[0].mxu0
    %2585 = vmatprep.mubr.f32.mxu0 0.0
    %2586 = vmatmul.mubr.f32.gmra.mrb[0].mxu0 %v2454
    %v2587 = vpop.f32.mrb[0].mxu0
    %v2588 = vadd.f32 %v2395, %v2587
    %v2589 = vpop.f32.mrb[0].mxu0
    %2590 = vmatprep.mubr.f32.mxu0 0.0
    %2591 = vmatmul.mubr.f32.gmra.mrb[0].mxu0 %v2457
    %v2592 = vpop.f32.mrb[0].mxu0
    %v2593 = vadd.f32 %v2400, %v2592
    %v2594 = vpop.f32.mrb[0].mxu0
    %2595 = vmatprep.mubr.f32.mxu0 0.0
    %2596 = vmatmul.mubr.f32.gmra.mrb[0].mxu0 %v2460
    %v2597 = vpop.f32.mrb[0].mxu0
    %v2598 = vadd.f32 %v2405, %v2597
    %v2599 = vpop.f32.mrb[0].mxu0
    %2600 = vmatprep.mubr.f32.mxu0 0.0
    %2601 = vmatmul.mubr.f32.gmra.mrb[0].mxu0 %v2463
    %v2602 = vpop.f32.mrb[0].mxu0
    %v2603 = vadd.f32 %v2410, %v2602
    %v2604 = vpop.f32.mrb[0].mxu0
    %2605 = vmatprep.mubr.f32.mxu0 0.0
    %2606 = vmatmul.mubr.f32.gmra.mrb[0].mxu0 %v2466
    %v2607 = vpop.f32.mrb[0].mxu0
    %v2608 = vadd.f32 %v2415, %v2607
    %v2609 = vpop.f32.mrb[0].mxu0
    %2610 = vmatprep.mubr.f32.mxu0 0.0
    %2611 = vmatmul.mubr.f32.gmra.mrb[0].mxu0 %v2469
    %v2612 = vpop.f32.mrb[0].mxu0
    %v2613 = vadd.f32 %v2420, %v2612
    %v2614 = vpop.f32.mrb[0].mxu0
    %2615 = vdwg.mxu0
    %v2616 = vld [vmem:[#allocation2 + $0x2] sm:$0xff]
    %v2617 = vld [vmem:[#allocation2 + $0x12] sm:$0xff]
    %v2618 = vld [vmem:[#allocation2 + $0x22] sm:$0xff]
    %v2619 = vld [vmem:[#allocation2 + $0x32] sm:$0xff]
    %v2620 = vld [vmem:[#allocation2 + $0x42] sm:$0xff]
    %v2621 = vld [vmem:[#allocation2 + $0x52] sm:$0xff]
    %v2622 = vld [vmem:[#allocation2 + $0x62] sm:$0xff]
    %v2623 = vld [vmem:[#allocation2 + $0x72] sm:$0xff]
    %v2624 = vld [vmem:[#allocation2 + $0xa2] sm:$0xff]
    %v2625 = vld [vmem:[#allocation2 + $0xb2] sm:$0xff]
    %v2626 = vld [vmem:[#allocation2 + $0xc2] sm:$0xff]
    %v2627 = vld [vmem:[#allocation2 + $0xd2] sm:$0xff]
    %v2628 = vld [vmem:[#allocation2 + $0xe2] sm:$0xff]
    %v2629 = vld [vmem:[#allocation2 + $0xf2] sm:$0xff]
    %v2630 = vld [vmem:[#allocation2 + $0x102] sm:$0xff]
    %v2631 = vld [vmem:[#allocation2 + $0x112] sm:$0xff]
    %v2633 = vsel %vm210, %v2616, 0
    %v2636 = vsel %vm210, %v2617, 0
    %v2639 = vsel %vm210, %v2618, 0
    %v2642 = vsel %vm210, %v2619, 0
    %v2645 = vsel %vm210, %v2620, 0
    %v2648 = vsel %vm210, %v2621, 0
    %v2651 = vsel %vm210, %v2622, 0
    %v2654 = vsel %vm210, %v2623, 0
    %v2657 = vsel %vm210, %v2624, 0
    %v2660 = vsel %vm210, %v2625, 0
    %v2663 = vsel %vm210, %v2626, 0
    %v2666 = vsel %vm210, %v2627, 0
    %v2669 = vsel %vm210, %v2628, 0
    %v2672 = vsel %vm210, %v2629, 0
    %v2675 = vsel %vm210, %v2630, 0
    %v2678 = vsel %vm210, %v2631, 0
    %2680 = vmatprep.subr.mxu0 0.0
    %2681 = vmatpush1.msra.mxu0 %v43
    %2682 = vmatprep.subr.mxu0 0.0
    %2683 = vmatpush1.msra.mxu0 %v44
    %2684 = vmatprep.subr.mxu0 0.0
    %2685 = vmatpush1.msra.mxu0 0.0
    %2686 = vmatprep.subr.mxu0 0.0
    %2687 = vmatpush1.msra.mxu0 0.0
    %2688 = vmatprep.subr.mxu0 0.0
    %2689 = vmatpush1.msra.mxu0 0.0
    %2690 = vmatprep.subr.mxu0 0.0
    %2691 = vmatpush1.msra.mxu0 0.0
    %2692 = vmatprep.subr.mxu0 0.0
    %2693 = vmatpush1.msra.mxu0 0.0
    %2694 = vmatprep.subr.mxu0 0.0
    %2695 = vmatpush1.msra.mxu0 0.0
    %2696 = vmatprep.subr.mxu0 0.0
    %2697 = vmatpush1.msra.mxu0 0.0
    %2698 = vmatprep.subr.mxu0 0.0
    %2699 = vmatpush1.msra.mxu0 0.0
    %2700 = vmatprep.subr.mxu0 0.0
    %2701 = vmatpush1.msra.mxu0 0.0
    %2702 = vmatprep.subr.mxu0 0.0
    %2703 = vmatpush1.msra.mxu0 0.0
    %2704 = vmatprep.subr.mxu0 0.0
    %2705 = vmatpush1.msra.mxu0 0.0
    %2706 = vmatprep.subr.mxu0 0.0
    %2707 = vmatpush1.msra.mxu0 0.0
    %2708 = vmatprep.subr.mxu0 0.0
    %2709 = vmatpush1.msra.mxu0 0.0
    %2710 = vmatprep.subr.mxu0 0.0
    %2711 = vmatpush1.msra.mxu0 0.0
    %2712 = vmatprep.subr.mxu0 0.0
    %2713 = vmatpush1.msra.mxu0 0.0
    %2714 = vmatprep.subr.mxu0 0.0
    %2715 = vmatpush1.msra.mxu0 0.0
    %2716 = vmatprep.subr.mxu0 0.0
    %2717 = vmatpush1.msra.mxu0 0.0
    %2718 = vmatprep.subr.mxu0 0.0
    %2719 = vmatpush1.msra.mxu0 0.0
    %2720 = vmatprep.subr.mxu0 0.0
    %2721 = vmatpush1.msra.mxu0 0.0
    %2722 = vmatprep.subr.mxu0 0.0
    %2723 = vmatpush1.msra.mxu0 0.0
    %2724 = vmatprep.subr.mxu0 0.0
    %2725 = vmatpush1.msra.mxu0 0.0
    %2726 = vmatprep.subr.mxu0 0.0
    %2727 = vmatpush1.msra.mxu0 0.0
    %2728 = vmatprep.subr.mxu0 0.0
    %2729 = vmatpush1.msra.mxu0 0.0
    %2730 = vmatprep.subr.mxu0 0.0
    %2731 = vmatpush1.msra.mxu0 0.0
    %2732 = vmatprep.subr.mxu0 0.0
    %2733 = vmatpush1.msra.mxu0 0.0
    %2734 = vmatprep.subr.mxu0 0.0
    %2735 = vmatpush1.msra.mxu0 0.0
    %2736 = vmatprep.subr.mxu0 0.0
    %2737 = vmatpush1.msra.mxu0 0.0
    %2738 = vmatprep.subr.mxu0 0.0
    %2739 = vmatpush1.msra.mxu0 0.0
    %2740 = vmatprep.subr.mxu0 0.0
    %2741 = vmatpush1.msra.mxu0 0.0
    %2742 = vmatprep.subr.mxu0 0.0
    %2743 = vmatpush1.msra.mxu0 0.0
    %2744 = vmatprep.mubr.f32.mxu0 0.0
    %2745 = vmatmul.mubr.f32.gmra.mrb[0].mxu0 %v2633
    %v2746 = vpop.f32.mrb[0].mxu0
    %v2747 = vadd.f32 0.0, %v2746
    %v2748 = vpop.f32.mrb[0].mxu0
    %2749 = vmatprep.mubr.f32.mxu0 0.0
    %2750 = vmatmul.mubr.f32.gmra.mrb[0].mxu0 %v2636
    %v2751 = vpop.f32.mrb[0].mxu0
    %v2752 = vadd.f32 0.0, %v2751
    %v2753 = vpop.f32.mrb[0].mxu0
    %2754 = vmatprep.mubr.f32.mxu0 0.0
    %2755 = vmatmul.mubr.f32.gmra.mrb[0].mxu0 %v2639
    %v2756 = vpop.f32.mrb[0].mxu0
    %v2757 = vadd.f32 0.0, %v2756
    %v2758 = vpop.f32.mrb[0].mxu0
    %2759 = vmatprep.mubr.f32.mxu0 0.0
    %2760 = vmatmul.mubr.f32.gmra.mrb[0].mxu0 %v2642
    %v2761 = vpop.f32.mrb[0].mxu0
    %v2762 = vadd.f32 0.0, %v2761
    %v2763 = vpop.f32.mrb[0].mxu0
    %2764 = vmatprep.mubr.f32.mxu0 0.0
    %2765 = vmatmul.mubr.f32.gmra.mrb[0].mxu0 %v2645
    %v2766 = vpop.f32.mrb[0].mxu0
    %v2767 = vadd.f32 0.0, %v2766
    %v2768 = vpop.f32.mrb[0].mxu0
    %2769 = vmatprep.mubr.f32.mxu0 0.0
    %2770 = vmatmul.mubr.f32.gmra.mrb[0].mxu0 %v2648
    %v2771 = vpop.f32.mrb[0].mxu0
    %v2772 = vadd.f32 0.0, %v2771
    %v2773 = vpop.f32.mrb[0].mxu0
    %2774 = vmatprep.mubr.f32.mxu0 0.0
    %2775 = vmatmul.mubr.f32.gmra.mrb[0].mxu0 %v2651
    %v2776 = vpop.f32.mrb[0].mxu0
    %v2777 = vadd.f32 0.0, %v2776
    %v2778 = vpop.f32.mrb[0].mxu0
    %2779 = vmatprep.mubr.f32.mxu0 0.0
    %2780 = vmatmul.mubr.f32.gmra.mrb[0].mxu0 %v2654
    %v2781 = vpop.f32.mrb[0].mxu0
    %v2782 = vadd.f32 0.0, %v2781
    %v2783 = vpop.f32.mrb[0].mxu0
    %2784 = vmatprep.mubr.f32.mxu0 0.0
    %2785 = vmatmul.mubr.f32.gmra.mrb[0].mxu0 %v2657
    %v2786 = vpop.f32.mrb[0].mxu0
    %v2787 = vadd.f32 0.0, %v2786
    %v2788 = vpop.f32.mrb[0].mxu0
    %2789 = vmatprep.mubr.f32.mxu0 0.0
    %2790 = vmatmul.mubr.f32.gmra.mrb[0].mxu0 %v2660
    %v2791 = vpop.f32.mrb[0].mxu0
    %v2792 = vadd.f32 0.0, %v2791
    %v2793 = vpop.f32.mrb[0].mxu0
    %2794 = vmatprep.mubr.f32.mxu0 0.0
    %2795 = vmatmul.mubr.f32.gmra.mrb[0].mxu0 %v2663
    %v2796 = vpop.f32.mrb[0].mxu0
    %v2797 = vadd.f32 0.0, %v2796
    %v2798 = vpop.f32.mrb[0].mxu0
    %2799 = vmatprep.mubr.f32.mxu0 0.0
    %2800 = vmatmul.mubr.f32.gmra.mrb[0].mxu0 %v2666
    %v2801 = vpop.f32.mrb[0].mxu0
    %v2802 = vadd.f32 0.0, %v2801
    %v2803 = vpop.f32.mrb[0].mxu0
    %2804 = vmatprep.mubr.f32.mxu0 0.0
    %2805 = vmatmul.mubr.f32.gmra.mrb[0].mxu0 %v2669
    %v2806 = vpop.f32.mrb[0].mxu0
    %v2807 = vadd.f32 0.0, %v2806
    %v2808 = vpop.f32.mrb[0].mxu0
    %2809 = vmatprep.mubr.f32.mxu0 0.0
    %2810 = vmatmul.mubr.f32.gmra.mrb[0].mxu0 %v2672
    %v2811 = vpop.f32.mrb[0].mxu0
    %v2812 = vadd.f32 0.0, %v2811
    %v2813 = vpop.f32.mrb[0].mxu0
    %2814 = vmatprep.mubr.f32.mxu0 0.0
    %2815 = vmatmul.mubr.f32.gmra.mrb[0].mxu0 %v2675
    %v2816 = vpop.f32.mrb[0].mxu0
    %v2817 = vadd.f32 0.0, %v2816
    %v2818 = vpop.f32.mrb[0].mxu0
    %2819 = vmatprep.mubr.f32.mxu0 0.0
    %2820 = vmatmul.mubr.f32.gmra.mrb[0].mxu0 %v2678
    %v2821 = vpop.f32.mrb[0].mxu0
    %v2822 = vadd.f32 0.0, %v2821
    %v2823 = vpop.f32.mrb[0].mxu0
    %2824 = vdwg.mxu0
    %v2825 = vadd.f32 %v2538, %v2747
    %v2826 = vadd.f32 %v2543, %v2752
    %v2827 = vadd.f32 %v2548, %v2757
    %v2828 = vadd.f32 %v2553, %v2762
    %v2829 = vadd.f32 %v2558, %v2767
    %v2830 = vadd.f32 %v2563, %v2772
    %v2831 = vadd.f32 %v2568, %v2777
    %v2832 = vadd.f32 %v2573, %v2782
    %v2833 = vadd.f32 %v2578, %v2787
    %v2834 = vadd.f32 %v2583, %v2792
    %v2835 = vadd.f32 %v2588, %v2797
    %v2836 = vadd.f32 %v2593, %v2802
    %v2837 = vadd.f32 %v2598, %v2807
    %v2838 = vadd.f32 %v2603, %v2812
    %v2839 = vadd.f32 %v2608, %v2817
    %v2840 = vadd.f32 %v2613, %v2822
    %v2841 = vld [vmem:[%s2181] sm:$0xff]
    %v2842 = vld [vmem:[%s2181 + $0x10] sm:$0xff]
    %v2843 = vld [vmem:[%s2181 + $0x20] sm:$0xff]
    %v2844 = vld [vmem:[%s2181 + $0x30] sm:$0xff]
    %v2845 = vld [vmem:[%s2181 + $0x40] sm:$0xff]
    %v2846 = vld [vmem:[%s2181 + $0x50] sm:$0xff]
    %v2847 = vld [vmem:[%s2181 + $0x60] sm:$0xff]
    %v2848 = vld [vmem:[%s2181 + $0x70] sm:$0xff]
    %v2849 = vld [vmem:[%s2181 + $0xa0] sm:$0xff]
    %v2850 = vld [vmem:[%s2181 + $0xb0] sm:$0xff]
    %v2851 = vld [vmem:[%s2181 + $0xc0] sm:$0xff]
    %v2852 = vld [vmem:[%s2181 + $0xd0] sm:$0xff]
    %v2853 = vld [vmem:[%s2181 + $0xe0] sm:$0xff]
    %v2854 = vld [vmem:[%s2181 + $0xf0] sm:$0xff]
    %v2855 = vld [vmem:[%s2181 + $0x100] sm:$0xff]
    %v2856 = vld [vmem:[%s2181 + $0x110] sm:$0xff]
    %v2858 = vsel %vm210, %v2841, 0
    %v2861 = vsel %vm210, %v2842, 0
    %v2864 = vsel %vm210, %v2843, 0
    %v2867 = vsel %vm210, %v2844, 0
    %v2870 = vsel %vm210, %v2845, 0
    %v2873 = vsel %vm210, %v2846, 0
    %v2876 = vsel %vm210, %v2847, 0
    %v2879 = vsel %vm210, %v2848, 0
    %v2882 = vsel %vm210, %v2849, 0
    %v2885 = vsel %vm210, %v2850, 0
    %v2888 = vsel %vm210, %v2851, 0
    %v2891 = vsel %vm210, %v2852, 0
    %v2894 = vsel %vm210, %v2853, 0
    %v2897 = vsel %vm210, %v2854, 0
    %v2900 = vsel %vm210, %v2855, 0
    %v2903 = vsel %vm210, %v2856, 0
    %2905 = vmatprep.subr.mxu0 0.0
    %2906 = vmatpush1.msra.mxu0 %v45
    %2907 = vmatprep.subr.mxu0 0.0
    %2908 = vmatpush1.msra.mxu0 %v46
    %2909 = vmatprep.subr.mxu0 0.0
    %2910 = vmatpush1.msra.mxu0 0.0
    %2911 = vmatprep.subr.mxu0 0.0
    %2912 = vmatpush1.msra.mxu0 0.0
    %2913 = vmatprep.subr.mxu0 0.0
    %2914 = vmatpush1.msra.mxu0 0.0
    %2915 = vmatprep.subr.mxu0 0.0
    %2916 = vmatpush1.msra.mxu0 0.0
    %2917 = vmatprep.subr.mxu0 0.0
    %2918 = vmatpush1.msra.mxu0 0.0
    %2919 = vmatprep.subr.mxu0 0.0
    %2920 = vmatpush1.msra.mxu0 0.0
    %2921 = vmatprep.subr.mxu0 0.0
    %2922 = vmatpush1.msra.mxu0 0.0
    %2923 = vmatprep.subr.mxu0 0.0
    %2924 = vmatpush1.msra.mxu0 0.0
    %2925 = vmatprep.subr.mxu0 0.0
    %2926 = vmatpush1.msra.mxu0 0.0
    %2927 = vmatprep.subr.mxu0 0.0
    %2928 = vmatpush1.msra.mxu0 0.0
    %2929 = vmatprep.subr.mxu0 0.0
    %2930 = vmatpush1.msra.mxu0 0.0
    %2931 = vmatprep.subr.mxu0 0.0
    %2932 = vmatpush1.msra.mxu0 0.0
    %2933 = vmatprep.subr.mxu0 0.0
    %2934 = vmatpush1.msra.mxu0 0.0
    %2935 = vmatprep.subr.mxu0 0.0
    %2936 = vmatpush1.msra.mxu0 0.0
    %2937 = vmatprep.subr.mxu0 0.0
    %2938 = vmatpush1.msra.mxu0 0.0
    %2939 = vmatprep.subr.mxu0 0.0
    %2940 = vmatpush1.msra.mxu0 0.0
    %2941 = vmatprep.subr.mxu0 0.0
    %2942 = vmatpush1.msra.mxu0 0.0
    %2943 = vmatprep.subr.mxu0 0.0
    %2944 = vmatpush1.msra.mxu0 0.0
    %2945 = vmatprep.subr.mxu0 0.0
    %2946 = vmatpush1.msra.mxu0 0.0
    %2947 = vmatprep.subr.mxu0 0.0
    %2948 = vmatpush1.msra.mxu0 0.0
    %2949 = vmatprep.subr.mxu0 0.0
    %2950 = vmatpush1.msra.mxu0 0.0
    %2951 = vmatprep.subr.mxu0 0.0
    %2952 = vmatpush1.msra.mxu0 0.0
    %2953 = vmatprep.subr.mxu0 0.0
    %2954 = vmatpush1.msra.mxu0 0.0
    %2955 = vmatprep.subr.mxu0 0.0
    %2956 = vmatpush1.msra.mxu0 0.0
    %2957 = vmatprep.subr.mxu0 0.0
    %2958 = vmatpush1.msra.mxu0 0.0
    %2959 = vmatprep.subr.mxu0 0.0
    %2960 = vmatpush1.msra.mxu0 0.0
    %2961 = vmatprep.subr.mxu0 0.0
    %2962 = vmatpush1.msra.mxu0 0.0
    %2963 = vmatprep.subr.mxu0 0.0
    %2964 = vmatpush1.msra.mxu0 0.0
    %2965 = vmatprep.subr.mxu0 0.0
    %2966 = vmatpush1.msra.mxu0 0.0
    %2967 = vmatprep.subr.mxu0 0.0
    %2968 = vmatpush1.msra.mxu0 0.0
    %2969 = vmatprep.mubr.f32.mxu0 0.0
    %2970 = vmatmul.mubr.f32.gmra.mrb[0].mxu0 %v2858
    %v2971 = vpop.f32.mrb[0].mxu0
    %v2972 = vadd.f32 0.0, %v2971
    %v2973 = vpop.f32.mrb[0].mxu0
    %2974 = vmatprep.mubr.f32.mxu0 0.0
    %2975 = vmatmul.mubr.f32.gmra.mrb[0].mxu0 %v2861
    %v2976 = vpop.f32.mrb[0].mxu0
    %v2977 = vadd.f32 0.0, %v2976
    %v2978 = vpop.f32.mrb[0].mxu0
    %2979 = vmatprep.mubr.f32.mxu0 0.0
    %2980 = vmatmul.mubr.f32.gmra.mrb[0].mxu0 %v2864
    %v2981 = vpop.f32.mrb[0].mxu0
    %v2982 = vadd.f32 0.0, %v2981
    %v2983 = vpop.f32.mrb[0].mxu0
    %2984 = vmatprep.mubr.f32.mxu0 0.0
    %2985 = vmatmul.mubr.f32.gmra.mrb[0].mxu0 %v2867
    %v2986 = vpop.f32.mrb[0].mxu0
    %v2987 = vadd.f32 0.0, %v2986
    %v2988 = vpop.f32.mrb[0].mxu0
    %2989 = vmatprep.mubr.f32.mxu0 0.0
    %2990 = vmatmul.mubr.f32.gmra.mrb[0].mxu0 %v2870
    %v2991 = vpop.f32.mrb[0].mxu0
    %v2992 = vadd.f32 0.0, %v2991
    %v2993 = vpop.f32.mrb[0].mxu0
    %2994 = vmatprep.mubr.f32.mxu0 0.0
    %2995 = vmatmul.mubr.f32.gmra.mrb[0].mxu0 %v2873
    %v2996 = vpop.f32.mrb[0].mxu0
    %v2997 = vadd.f32 0.0, %v2996
    %v2998 = vpop.f32.mrb[0].mxu0
    %2999 = vmatprep.mubr.f32.mxu0 0.0
    %3000 = vmatmul.mubr.f32.gmra.mrb[0].mxu0 %v2876
    %v3001 = vpop.f32.mrb[0].mxu0
    %v3002 = vadd.f32 0.0, %v3001
    %v3003 = vpop.f32.mrb[0].mxu0
    %3004 = vmatprep.mubr.f32.mxu0 0.0
    %3005 = vmatmul.mubr.f32.gmra.mrb[0].mxu0 %v2879
    %v3006 = vpop.f32.mrb[0].mxu0
    %v3007 = vadd.f32 0.0, %v3006
    %v3008 = vpop.f32.mrb[0].mxu0
    %3009 = vmatprep.mubr.f32.mxu0 0.0
    %3010 = vmatmul.mubr.f32.gmra.mrb[0].mxu0 %v2882
    %v3011 = vpop.f32.mrb[0].mxu0
    %v3012 = vadd.f32 0.0, %v3011
    %v3013 = vpop.f32.mrb[0].mxu0
    %3014 = vmatprep.mubr.f32.mxu0 0.0
    %3015 = vmatmul.mubr.f32.gmra.mrb[0].mxu0 %v2885
    %v3016 = vpop.f32.mrb[0].mxu0
    %v3017 = vadd.f32 0.0, %v3016
    %v3018 = vpop.f32.mrb[0].mxu0
    %3019 = vmatprep.mubr.f32.mxu0 0.0
    %3020 = vmatmul.mubr.f32.gmra.mrb[0].mxu0 %v2888
    %v3021 = vpop.f32.mrb[0].mxu0
    %v3022 = vadd.f32 0.0, %v3021
    %v3023 = vpop.f32.mrb[0].mxu0
    %3024 = vmatprep.mubr.f32.mxu0 0.0
    %3025 = vmatmul.mubr.f32.gmra.mrb[0].mxu0 %v2891
    %v3026 = vpop.f32.mrb[0].mxu0
    %v3027 = vadd.f32 0.0, %v3026
    %v3028 = vpop.f32.mrb[0].mxu0
    %3029 = vmatprep.mubr.f32.mxu0 0.0
    %3030 = vmatmul.mubr.f32.gmra.mrb[0].mxu0 %v2894
    %v3031 = vpop.f32.mrb[0].mxu0
    %v3032 = vadd.f32 0.0, %v3031
    %v3033 = vpop.f32.mrb[0].mxu0
    %3034 = vmatprep.mubr.f32.mxu0 0.0
    %3035 = vmatmul.mubr.f32.gmra.mrb[0].mxu0 %v2897
    %v3036 = vpop.f32.mrb[0].mxu0
    %v3037 = vadd.f32 0.0, %v3036
    %v3038 = vpop.f32.mrb[0].mxu0
    %3039 = vmatprep.mubr.f32.mxu0 0.0
    %3040 = vmatmul.mubr.f32.gmra.mrb[0].mxu0 %v2900
    %v3041 = vpop.f32.mrb[0].mxu0
    %v3042 = vadd.f32 0.0, %v3041
    %v3043 = vpop.f32.mrb[0].mxu0
    %3044 = vmatprep.mubr.f32.mxu0 0.0
    %3045 = vmatmul.mubr.f32.gmra.mrb[0].mxu0 %v2903
    %v3046 = vpop.f32.mrb[0].mxu0
    %v3047 = vadd.f32 0.0, %v3046
    %v3048 = vpop.f32.mrb[0].mxu0
    %3049 = vdwg.mxu0
    %v3050 = vadd.f32 %v2825, %v2972
    %v3051 = vadd.f32 %v2826, %v2977
    %v3052 = vadd.f32 %v2827, %v2982
    %v3053 = vadd.f32 %v2828, %v2987
    %v3054 = vadd.f32 %v2829, %v2992
    %v3055 = vadd.f32 %v2830, %v2997
    %v3056 = vadd.f32 %v2831, %v3002
    %v3057 = vadd.f32 %v2832, %v3007
    %v3058 = vadd.f32 %v2833, %v3012
    %v3059 = vadd.f32 %v2834, %v3017
    %v3060 = vadd.f32 %v2835, %v3022
    %v3061 = vadd.f32 %v2836, %v3027
    %v3062 = vadd.f32 %v2837, %v3032
    %v3063 = vadd.f32 %v2838, %v3037
    %v3064 = vadd.f32 %v2839, %v3042
    %v3065 = vadd.f32 %v2840, %v3047
    %v3066 = vld [vmem:[%s2181 + $0x1] sm:$0xff]
    %v3067 = vld [vmem:[%s2181 + $0x11] sm:$0xff]
    %v3068 = vld [vmem:[%s2181 + $0x21] sm:$0xff]
    %v3069 = vld [vmem:[%s2181 + $0x31] sm:$0xff]
    %v3070 = vld [vmem:[%s2181 + $0x41] sm:$0xff]
    %v3071 = vld [vmem:[%s2181 + $0x51] sm:$0xff]
    %v3072 = vld [vmem:[%s2181 + $0x61] sm:$0xff]
    %v3073 = vld [vmem:[%s2181 + $0x71] sm:$0xff]
    %v3074 = vld [vmem:[%s2181 + $0xa1] sm:$0xff]
    %v3075 = vld [vmem:[%s2181 + $0xb1] sm:$0xff]
    %v3076 = vld [vmem:[%s2181 + $0xc1] sm:$0xff]
    %v3077 = vld [vmem:[%s2181 + $0xd1] sm:$0xff]
    %v3078 = vld [vmem:[%s2181 + $0xe1] sm:$0xff]
    %v3079 = vld [vmem:[%s2181 + $0xf1] sm:$0xff]
    %v3080 = vld [vmem:[%s2181 + $0x101] sm:$0xff]
    %v3081 = vld [vmem:[%s2181 + $0x111] sm:$0xff]
    %v3083 = vsel %vm210, %v3066, 0
    %v3086 = vsel %vm210, %v3067, 0
    %v3089 = vsel %vm210, %v3068, 0
    %v3092 = vsel %vm210, %v3069, 0
    %v3095 = vsel %vm210, %v3070, 0
    %v3098 = vsel %vm210, %v3071, 0
    %v3101 = vsel %vm210, %v3072, 0
    %v3104 = vsel %vm210, %v3073, 0
    %v3107 = vsel %vm210, %v3074, 0
    %v3110 = vsel %vm210, %v3075, 0
    %v3113 = vsel %vm210, %v3076, 0
    %v3116 = vsel %vm210, %v3077, 0
    %v3119 = vsel %vm210, %v3078, 0
    %v3122 = vsel %vm210, %v3079, 0
    %v3125 = vsel %vm210, %v3080, 0
    %v3128 = vsel %vm210, %v3081, 0
    %3130 = vmatprep.subr.mxu0 0.0
    %3131 = vmatpush1.msra.mxu0 %v47
    %3132 = vmatprep.subr.mxu0 0.0
    %3133 = vmatpush1.msra.mxu0 %v48
    %3134 = vmatprep.subr.mxu0 0.0
    %3135 = vmatpush1.msra.mxu0 0.0
    %3136 = vmatprep.subr.mxu0 0.0
    %3137 = vmatpush1.msra.mxu0 0.0
    %3138 = vmatprep.subr.mxu0 0.0
    %3139 = vmatpush1.msra.mxu0 0.0
    %3140 = vmatprep.subr.mxu0 0.0
    %3141 = vmatpush1.msra.mxu0 0.0
    %3142 = vmatprep.subr.mxu0 0.0
    %3143 = vmatpush1.msra.mxu0 0.0
    %3144 = vmatprep.subr.mxu0 0.0
    %3145 = vmatpush1.msra.mxu0 0.0
    %3146 = vmatprep.subr.mxu0 0.0
    %3147 = vmatpush1.msra.mxu0 0.0
    %3148 = vmatprep.subr.mxu0 0.0
    %3149 = vmatpush1.msra.mxu0 0.0
    %3150 = vmatprep.subr.mxu0 0.0
    %3151 = vmatpush1.msra.mxu0 0.0
    %3152 = vmatprep.subr.mxu0 0.0
    %3153 = vmatpush1.msra.mxu0 0.0
    %3154 = vmatprep.subr.mxu0 0.0
    %3155 = vmatpush1.msra.mxu0 0.0
    %3156 = vmatprep.subr.mxu0 0.0
    %3157 = vmatpush1.msra.mxu0 0.0
    %3158 = vmatprep.subr.mxu0 0.0
    %3159 = vmatpush1.msra.mxu0 0.0
    %3160 = vmatprep.subr.mxu0 0.0
    %3161 = vmatpush1.msra.mxu0 0.0
    %3162 = vmatprep.subr.mxu0 0.0
    %3163 = vmatpush1.msra.mxu0 0.0
    %3164 = vmatprep.subr.mxu0 0.0
    %3165 = vmatpush1.msra.mxu0 0.0
    %3166 = vmatprep.subr.mxu0 0.0
    %3167 = vmatpush1.msra.mxu0 0.0
    %3168 = vmatprep.subr.mxu0 0.0
    %3169 = vmatpush1.msra.mxu0 0.0
    %3170 = vmatprep.subr.mxu0 0.0
    %3171 = vmatpush1.msra.mxu0 0.0
    %3172 = vmatprep.subr.mxu0 0.0
    %3173 = vmatpush1.msra.mxu0 0.0
    %3174 = vmatprep.subr.mxu0 0.0
    %3175 = vmatpush1.msra.mxu0 0.0
    %3176 = vmatprep.subr.mxu0 0.0
    %3177 = vmatpush1.msra.mxu0 0.0
    %3178 = vmatprep.subr.mxu0 0.0
    %3179 = vmatpush1.msra.mxu0 0.0
    %3180 = vmatprep.subr.mxu0 0.0
    %3181 = vmatpush1.msra.mxu0 0.0
    %3182 = vmatprep.subr.mxu0 0.0
    %3183 = vmatpush1.msra.mxu0 0.0
    %3184 = vmatprep.subr.mxu0 0.0
    %3185 = vmatpush1.msra.mxu0 0.0
    %3186 = vmatprep.subr.mxu0 0.0
    %3187 = vmatpush1.msra.mxu0 0.0
    %3188 = vmatprep.subr.mxu0 0.0
    %3189 = vmatpush1.msra.mxu0 0.0
    %3190 = vmatprep.subr.mxu0 0.0
    %3191 = vmatpush1.msra.mxu0 0.0
    %3192 = vmatprep.subr.mxu0 0.0
    %3193 = vmatpush1.msra.mxu0 0.0
    %3194 = vmatprep.mubr.f32.mxu0 0.0
    %3195 = vmatmul.mubr.f32.gmra.mrb[0].mxu0 %v3083
    %v3196 = vpop.f32.mrb[0].mxu0
    %v3197 = vadd.f32 0.0, %v3196
    %v3198 = vpop.f32.mrb[0].mxu0
    %3199 = vmatprep.mubr.f32.mxu0 0.0
    %3200 = vmatmul.mubr.f32.gmra.mrb[0].mxu0 %v3086
    %v3201 = vpop.f32.mrb[0].mxu0
    %v3202 = vadd.f32 0.0, %v3201
    %v3203 = vpop.f32.mrb[0].mxu0
    %3204 = vmatprep.mubr.f32.mxu0 0.0
    %3205 = vmatmul.mubr.f32.gmra.mrb[0].mxu0 %v3089
    %v3206 = vpop.f32.mrb[0].mxu0
    %v3207 = vadd.f32 0.0, %v3206
    %v3208 = vpop.f32.mrb[0].mxu0
    %3209 = vmatprep.mubr.f32.mxu0 0.0
    %3210 = vmatmul.mubr.f32.gmra.mrb[0].mxu0 %v3092
    %v3211 = vpop.f32.mrb[0].mxu0
    %v3212 = vadd.f32 0.0, %v3211
    %v3213 = vpop.f32.mrb[0].mxu0
    %3214 = vmatprep.mubr.f32.mxu0 0.0
    %3215 = vmatmul.mubr.f32.gmra.mrb[0].mxu0 %v3095
    %v3216 = vpop.f32.mrb[0].mxu0
    %v3217 = vadd.f32 0.0, %v3216
    %v3218 = vpop.f32.mrb[0].mxu0
    %3219 = vmatprep.mubr.f32.mxu0 0.0
    %3220 = vmatmul.mubr.f32.gmra.mrb[0].mxu0 %v3098
    %v3221 = vpop.f32.mrb[0].mxu0
    %v3222 = vadd.f32 0.0, %v3221
    %v3223 = vpop.f32.mrb[0].mxu0
    %3224 = vmatprep.mubr.f32.mxu0 0.0
    %3225 = vmatmul.mubr.f32.gmra.mrb[0].mxu0 %v3101
    %v3226 = vpop.f32.mrb[0].mxu0
    %v3227 = vadd.f32 0.0, %v3226
    %v3228 = vpop.f32.mrb[0].mxu0
    %3229 = vmatprep.mubr.f32.mxu0 0.0
    %3230 = vmatmul.mubr.f32.gmra.mrb[0].mxu0 %v3104
    %v3231 = vpop.f32.mrb[0].mxu0
    %v3232 = vadd.f32 0.0, %v3231
    %v3233 = vpop.f32.mrb[0].mxu0
    %3234 = vmatprep.mubr.f32.mxu0 0.0
    %3235 = vmatmul.mubr.f32.gmra.mrb[0].mxu0 %v3107
    %v3236 = vpop.f32.mrb[0].mxu0
    %v3237 = vadd.f32 0.0, %v3236
    %v3238 = vpop.f32.mrb[0].mxu0
    %3239 = vmatprep.mubr.f32.mxu0 0.0
    %3240 = vmatmul.mubr.f32.gmra.mrb[0].mxu0 %v3110
    %v3241 = vpop.f32.mrb[0].mxu0
    %v3242 = vadd.f32 0.0, %v3241
    %v3243 = vpop.f32.mrb[0].mxu0
    %3244 = vmatprep.mubr.f32.mxu0 0.0
    %3245 = vmatmul.mubr.f32.gmra.mrb[0].mxu0 %v3113
    %v3246 = vpop.f32.mrb[0].mxu0
    %v3247 = vadd.f32 0.0, %v3246
    %v3248 = vpop.f32.mrb[0].mxu0
    %3249 = vmatprep.mubr.f32.mxu0 0.0
    %3250 = vmatmul.mubr.f32.gmra.mrb[0].mxu0 %v3116
    %v3251 = vpop.f32.mrb[0].mxu0
    %v3252 = vadd.f32 0.0, %v3251
    %v3253 = vpop.f32.mrb[0].mxu0
    %3254 = vmatprep.mubr.f32.mxu0 0.0
    %3255 = vmatmul.mubr.f32.gmra.mrb[0].mxu0 %v3119
    %v3256 = vpop.f32.mrb[0].mxu0
    %v3257 = vadd.f32 0.0, %v3256
    %v3258 = vpop.f32.mrb[0].mxu0
    %3259 = vmatprep.mubr.f32.mxu0 0.0
    %3260 = vmatmul.mubr.f32.gmra.mrb[0].mxu0 %v3122
    %v3261 = vpop.f32.mrb[0].mxu0
    %v3262 = vadd.f32 0.0, %v3261
    %v3263 = vpop.f32.mrb[0].mxu0
    %3264 = vmatprep.mubr.f32.mxu0 0.0
    %3265 = vmatmul.mubr.f32.gmra.mrb[0].mxu0 %v3125
    %v3266 = vpop.f32.mrb[0].mxu0
    %v3267 = vadd.f32 0.0, %v3266
    %v3268 = vpop.f32.mrb[0].mxu0
    %3269 = vmatprep.mubr.f32.mxu0 0.0
    %3270 = vmatmul.mubr.f32.gmra.mrb[0].mxu0 %v3128
    %v3271 = vpop.f32.mrb[0].mxu0
    %v3272 = vadd.f32 0.0, %v3271
    %v3273 = vpop.f32.mrb[0].mxu0
    %3274 = vdwg.mxu0
    %v3275 = vadd.f32 %v3050, %v3197
    %v3276 = vadd.f32 %v3051, %v3202
    %v3277 = vadd.f32 %v3052, %v3207
    %v3278 = vadd.f32 %v3053, %v3212
    %v3279 = vadd.f32 %v3054, %v3217
    %v3280 = vadd.f32 %v3055, %v3222
    %v3281 = vadd.f32 %v3056, %v3227
    %v3282 = vadd.f32 %v3057, %v3232
    %v3283 = vadd.f32 %v3058, %v3237
    %v3284 = vadd.f32 %v3059, %v3242
    %v3285 = vadd.f32 %v3060, %v3247
    %v3286 = vadd.f32 %v3061, %v3252
    %v3287 = vadd.f32 %v3062, %v3257
    %v3288 = vadd.f32 %v3063, %v3262
    %v3289 = vadd.f32 %v3064, %v3267
    %v3290 = vadd.f32 %v3065, %v3272
    %v3291 = vld [vmem:[%s2181 + $0x2] sm:$0xff]
    %v3292 = vld [vmem:[%s2181 + $0x12] sm:$0xff]
    %v3293 = vld [vmem:[%s2181 + $0x22] sm:$0xff]
    %v3294 = vld [vmem:[%s2181 + $0x32] sm:$0xff]
    %v3295 = vld [vmem:[%s2181 + $0x42] sm:$0xff]
    %v3296 = vld [vmem:[%s2181 + $0x52] sm:$0xff]
    %v3297 = vld [vmem:[%s2181 + $0x62] sm:$0xff]
    %v3298 = vld [vmem:[%s2181 + $0x72] sm:$0xff]
    %v3299 = vld [vmem:[%s2181 + $0xa2] sm:$0xff]
    %v3300 = vld [vmem:[%s2181 + $0xb2] sm:$0xff]
    %v3301 = vld [vmem:[%s2181 + $0xc2] sm:$0xff]
    %v3302 = vld [vmem:[%s2181 + $0xd2] sm:$0xff]
    %v3303 = vld [vmem:[%s2181 + $0xe2] sm:$0xff]
    %v3304 = vld [vmem:[%s2181 + $0xf2] sm:$0xff]
    %v3305 = vld [vmem:[%s2181 + $0x102] sm:$0xff]
    %v3306 = vld [vmem:[%s2181 + $0x112] sm:$0xff]
    %v3308 = vsel %vm210, %v3291, 0
    %v3311 = vsel %vm210, %v3292, 0
    %v3314 = vsel %vm210, %v3293, 0
    %v3317 = vsel %vm210, %v3294, 0
    %v3320 = vsel %vm210, %v3295, 0
    %v3323 = vsel %vm210, %v3296, 0
    %v3326 = vsel %vm210, %v3297, 0
    %v3329 = vsel %vm210, %v3298, 0
    %v3332 = vsel %vm210, %v3299, 0
    %v3335 = vsel %vm210, %v3300, 0
    %v3338 = vsel %vm210, %v3301, 0
    %v3341 = vsel %vm210, %v3302, 0
    %v3344 = vsel %vm210, %v3303, 0
    %v3347 = vsel %vm210, %v3304, 0
    %v3350 = vsel %vm210, %v3305, 0
    %v3353 = vsel %vm210, %v3306, 0
    %3355 = vmatprep.subr.mxu0 0.0
    %3356 = vmatpush1.msra.mxu0 %v49
    %3357 = vmatprep.subr.mxu0 0.0
    %3358 = vmatpush1.msra.mxu0 %v50
    %3359 = vmatprep.subr.mxu0 0.0
    %3360 = vmatpush1.msra.mxu0 0.0
    %3361 = vmatprep.subr.mxu0 0.0
    %3362 = vmatpush1.msra.mxu0 0.0
    %3363 = vmatprep.subr.mxu0 0.0
    %3364 = vmatpush1.msra.mxu0 0.0
    %3365 = vmatprep.subr.mxu0 0.0
    %3366 = vmatpush1.msra.mxu0 0.0
    %3367 = vmatprep.subr.mxu0 0.0
    %3368 = vmatpush1.msra.mxu0 0.0
    %3369 = vmatprep.subr.mxu0 0.0
    %3370 = vmatpush1.msra.mxu0 0.0
    %3371 = vmatprep.subr.mxu0 0.0
    %3372 = vmatpush1.msra.mxu0 0.0
    %3373 = vmatprep.subr.mxu0 0.0
    %3374 = vmatpush1.msra.mxu0 0.0
    %3375 = vmatprep.subr.mxu0 0.0
    %3376 = vmatpush1.msra.mxu0 0.0
    %3377 = vmatprep.subr.mxu0 0.0
    %3378 = vmatpush1.msra.mxu0 0.0
    %3379 = vmatprep.subr.mxu0 0.0
    %3380 = vmatpush1.msra.mxu0 0.0
    %3381 = vmatprep.subr.mxu0 0.0
    %3382 = vmatpush1.msra.mxu0 0.0
    %3383 = vmatprep.subr.mxu0 0.0
    %3384 = vmatpush1.msra.mxu0 0.0
    %3385 = vmatprep.subr.mxu0 0.0
    %3386 = vmatpush1.msra.mxu0 0.0
    %3387 = vmatprep.subr.mxu0 0.0
    %3388 = vmatpush1.msra.mxu0 0.0
    %3389 = vmatprep.subr.mxu0 0.0
    %3390 = vmatpush1.msra.mxu0 0.0
    %3391 = vmatprep.subr.mxu0 0.0
    %3392 = vmatpush1.msra.mxu0 0.0
    %3393 = vmatprep.subr.mxu0 0.0
    %3394 = vmatpush1.msra.mxu0 0.0
    %3395 = vmatprep.subr.mxu0 0.0
    %3396 = vmatpush1.msra.mxu0 0.0
    %3397 = vmatprep.subr.mxu0 0.0
    %3398 = vmatpush1.msra.mxu0 0.0
    %3399 = vmatprep.subr.mxu0 0.0
    %3400 = vmatpush1.msra.mxu0 0.0
    %3401 = vmatprep.subr.mxu0 0.0
    %3402 = vmatpush1.msra.mxu0 0.0
    %3403 = vmatprep.subr.mxu0 0.0
    %3404 = vmatpush1.msra.mxu0 0.0
    %3405 = vmatprep.subr.mxu0 0.0
    %3406 = vmatpush1.msra.mxu0 0.0
    %3407 = vmatprep.subr.mxu0 0.0
    %3408 = vmatpush1.msra.mxu0 0.0
    %3409 = vmatprep.subr.mxu0 0.0
    %3410 = vmatpush1.msra.mxu0 0.0
    %3411 = vmatprep.subr.mxu0 0.0
    %3412 = vmatpush1.msra.mxu0 0.0
    %3413 = vmatprep.subr.mxu0 0.0
    %3414 = vmatpush1.msra.mxu0 0.0
    %3415 = vmatprep.subr.mxu0 0.0
    %3416 = vmatpush1.msra.mxu0 0.0
    %3417 = vmatprep.subr.mxu0 0.0
    %3418 = vmatpush1.msra.mxu0 0.0
    %3419 = vmatprep.mubr.f32.mxu0 0.0
    %3420 = vmatmul.mubr.f32.gmra.mrb[0].mxu0 %v3308
    %v3421 = vpop.f32.mrb[0].mxu0
    %v3422 = vadd.f32 0.0, %v3421
    %v3423 = vpop.f32.mrb[0].mxu0
    %3424 = vmatprep.mubr.f32.mxu0 0.0
    %3425 = vmatmul.mubr.f32.gmra.mrb[0].mxu0 %v3311
    %v3426 = vpop.f32.mrb[0].mxu0
    %v3427 = vadd.f32 0.0, %v3426
    %v3428 = vpop.f32.mrb[0].mxu0
    %3429 = vmatprep.mubr.f32.mxu0 0.0
    %3430 = vmatmul.mubr.f32.gmra.mrb[0].mxu0 %v3314
    %v3431 = vpop.f32.mrb[0].mxu0
    %v3432 = vadd.f32 0.0, %v3431
    %v3433 = vpop.f32.mrb[0].mxu0
    %3434 = vmatprep.mubr.f32.mxu0 0.0
    %3435 = vmatmul.mubr.f32.gmra.mrb[0].mxu0 %v3317
    %v3436 = vpop.f32.mrb[0].mxu0
    %v3437 = vadd.f32 0.0, %v3436
    %v3438 = vpop.f32.mrb[0].mxu0
    %3439 = vmatprep.mubr.f32.mxu0 0.0
    %3440 = vmatmul.mubr.f32.gmra.mrb[0].mxu0 %v3320
    %v3441 = vpop.f32.mrb[0].mxu0
    %v3442 = vadd.f32 0.0, %v3441
    %v3443 = vpop.f32.mrb[0].mxu0
    %3444 = vmatprep.mubr.f32.mxu0 0.0
    %3445 = vmatmul.mubr.f32.gmra.mrb[0].mxu0 %v3323
    %v3446 = vpop.f32.mrb[0].mxu0
    %v3447 = vadd.f32 0.0, %v3446
    %v3448 = vpop.f32.mrb[0].mxu0
    %3449 = vmatprep.mubr.f32.mxu0 0.0
    %3450 = vmatmul.mubr.f32.gmra.mrb[0].mxu0 %v3326
    %v3451 = vpop.f32.mrb[0].mxu0
    %v3452 = vadd.f32 0.0, %v3451
    %v3453 = vpop.f32.mrb[0].mxu0
    %3454 = vmatprep.mubr.f32.mxu0 0.0
    %3455 = vmatmul.mubr.f32.gmra.mrb[0].mxu0 %v3329
    %v3456 = vpop.f32.mrb[0].mxu0
    %v3457 = vadd.f32 0.0, %v3456
    %v3458 = vpop.f32.mrb[0].mxu0
    %3459 = vmatprep.mubr.f32.mxu0 0.0
    %3460 = vmatmul.mubr.f32.gmra.mrb[0].mxu0 %v3332
    %v3461 = vpop.f32.mrb[0].mxu0
    %v3462 = vadd.f32 0.0, %v3461
    %v3463 = vpop.f32.mrb[0].mxu0
    %3464 = vmatprep.mubr.f32.mxu0 0.0
    %3465 = vmatmul.mubr.f32.gmra.mrb[0].mxu0 %v3335
    %v3466 = vpop.f32.mrb[0].mxu0
    %v3467 = vadd.f32 0.0, %v3466
    %v3468 = vpop.f32.mrb[0].mxu0
    %3469 = vmatprep.mubr.f32.mxu0 0.0
    %3470 = vmatmul.mubr.f32.gmra.mrb[0].mxu0 %v3338
    %v3471 = vpop.f32.mrb[0].mxu0
    %v3472 = vadd.f32 0.0, %v3471
    %v3473 = vpop.f32.mrb[0].mxu0
    %3474 = vmatprep.mubr.f32.mxu0 0.0
    %3475 = vmatmul.mubr.f32.gmra.mrb[0].mxu0 %v3341
    %v3476 = vpop.f32.mrb[0].mxu0
    %v3477 = vadd.f32 0.0, %v3476
    %v3478 = vpop.f32.mrb[0].mxu0
    %3479 = vmatprep.mubr.f32.mxu0 0.0
    %3480 = vmatmul.mubr.f32.gmra.mrb[0].mxu0 %v3344
    %v3481 = vpop.f32.mrb[0].mxu0
    %v3482 = vadd.f32 0.0, %v3481
    %v3483 = vpop.f32.mrb[0].mxu0
    %3484 = vmatprep.mubr.f32.mxu0 0.0
    %3485 = vmatmul.mubr.f32.gmra.mrb[0].mxu0 %v3347
    %v3486 = vpop.f32.mrb[0].mxu0
    %v3487 = vadd.f32 0.0, %v3486
    %v3488 = vpop.f32.mrb[0].mxu0
    %3489 = vmatprep.mubr.f32.mxu0 0.0
    %3490 = vmatmul.mubr.f32.gmra.mrb[0].mxu0 %v3350
    %v3491 = vpop.f32.mrb[0].mxu0
    %v3492 = vadd.f32 0.0, %v3491
    %v3493 = vpop.f32.mrb[0].mxu0
    %3494 = vmatprep.mubr.f32.mxu0 0.0
    %3495 = vmatmul.mubr.f32.gmra.mrb[0].mxu0 %v3353
    %v3496 = vpop.f32.mrb[0].mxu0
    %v3497 = vadd.f32 0.0, %v3496
    %v3498 = vpop.f32.mrb[0].mxu0
    %3499 = vdwg.mxu0
    %v3500 = vadd.f32 %v3275, %v3422
    %v3501 = vadd.f32 %v3276, %v3427
    %v3502 = vadd.f32 %v3277, %v3432
    %v3503 = vadd.f32 %v3278, %v3437
    %v3504 = vadd.f32 %v3279, %v3442
    %v3505 = vadd.f32 %v3280, %v3447
    %v3506 = vadd.f32 %v3281, %v3452
    %v3507 = vadd.f32 %v3282, %v3457
    %v3508 = vadd.f32 %v3283, %v3462
    %v3509 = vadd.f32 %v3284, %v3467
    %v3510 = vadd.f32 %v3285, %v3472
    %v3511 = vadd.f32 %v3286, %v3477
    %v3512 = vadd.f32 %v3287, %v3482
    %v3513 = vadd.f32 %v3288, %v3487
    %v3514 = vadd.f32 %v3289, %v3492
    %v3515 = vadd.f32 %v3290, %v3497
    %s3516 = scalar_lea.vmem [#allocation2], 32
    %v3517 = vld [vmem:[%s3516] sm:$0xff]
    %v3518 = vld [vmem:[%s3516 + $0x10] sm:$0xff]
    %v3519 = vld [vmem:[%s3516 + $0x20] sm:$0xff]
    %v3520 = vld [vmem:[%s3516 + $0x30] sm:$0xff]
    %v3521 = vld [vmem:[%s3516 + $0x40] sm:$0xff]
    %v3522 = vld [vmem:[%s3516 + $0x50] sm:$0xff]
    %v3523 = vld [vmem:[%s3516 + $0x60] sm:$0xff]
    %v3524 = vld [vmem:[%s3516 + $0x70] sm:$0xff]
    %v3525 = vld [vmem:[%s3516 + $0xa0] sm:$0xff]
    %v3526 = vld [vmem:[%s3516 + $0xb0] sm:$0xff]
    %v3527 = vld [vmem:[%s3516 + $0xc0] sm:$0xff]
    %v3528 = vld [vmem:[%s3516 + $0xd0] sm:$0xff]
    %v3529 = vld [vmem:[%s3516 + $0xe0] sm:$0xff]
    %v3530 = vld [vmem:[%s3516 + $0xf0] sm:$0xff]
    %v3531 = vld [vmem:[%s3516 + $0x100] sm:$0xff]
    %v3532 = vld [vmem:[%s3516 + $0x110] sm:$0xff]
    %v3534 = vsel %vm210, %v3517, 0
    %v3537 = vsel %vm210, %v3518, 0
    %v3540 = vsel %vm210, %v3519, 0
    %v3543 = vsel %vm210, %v3520, 0
    %v3546 = vsel %vm210, %v3521, 0
    %v3549 = vsel %vm210, %v3522, 0
    %v3552 = vsel %vm210, %v3523, 0
    %v3555 = vsel %vm210, %v3524, 0
    %v3558 = vsel %vm210, %v3525, 0
    %v3561 = vsel %vm210, %v3526, 0
    %v3564 = vsel %vm210, %v3527, 0
    %v3567 = vsel %vm210, %v3528, 0
    %v3570 = vsel %vm210, %v3529, 0
    %v3573 = vsel %vm210, %v3530, 0
    %v3576 = vsel %vm210, %v3531, 0
    %v3579 = vsel %vm210, %v3532, 0
    %3581 = vmatprep.subr.mxu0 0.0
    %3582 = vmatpush1.msra.mxu0 %v51
    %3583 = vmatprep.subr.mxu0 0.0
    %3584 = vmatpush1.msra.mxu0 %v52
    %3585 = vmatprep.subr.mxu0 0.0
    %3586 = vmatpush1.msra.mxu0 0.0
    %3587 = vmatprep.subr.mxu0 0.0
    %3588 = vmatpush1.msra.mxu0 0.0
    %3589 = vmatprep.subr.mxu0 0.0
    %3590 = vmatpush1.msra.mxu0 0.0
    %3591 = vmatprep.subr.mxu0 0.0
    %3592 = vmatpush1.msra.mxu0 0.0
    %3593 = vmatprep.subr.mxu0 0.0
    %3594 = vmatpush1.msra.mxu0 0.0
    %3595 = vmatprep.subr.mxu0 0.0
    %3596 = vmatpush1.msra.mxu0 0.0
    %3597 = vmatprep.subr.mxu0 0.0
    %3598 = vmatpush1.msra.mxu0 0.0
    %3599 = vmatprep.subr.mxu0 0.0
    %3600 = vmatpush1.msra.mxu0 0.0
    %3601 = vmatprep.subr.mxu0 0.0
    %3602 = vmatpush1.msra.mxu0 0.0
    %3603 = vmatprep.subr.mxu0 0.0
    %3604 = vmatpush1.msra.mxu0 0.0
    %3605 = vmatprep.subr.mxu0 0.0
    %3606 = vmatpush1.msra.mxu0 0.0
    %3607 = vmatprep.subr.mxu0 0.0
    %3608 = vmatpush1.msra.mxu0 0.0
    %3609 = vmatprep.subr.mxu0 0.0
    %3610 = vmatpush1.msra.mxu0 0.0
    %3611 = vmatprep.subr.mxu0 0.0
    %3612 = vmatpush1.msra.mxu0 0.0
    %3613 = vmatprep.subr.mxu0 0.0
    %3614 = vmatpush1.msra.mxu0 0.0
    %3615 = vmatprep.subr.mxu0 0.0
    %3616 = vmatpush1.msra.mxu0 0.0
    %3617 = vmatprep.subr.mxu0 0.0
    %3618 = vmatpush1.msra.mxu0 0.0
    %3619 = vmatprep.subr.mxu0 0.0
    %3620 = vmatpush1.msra.mxu0 0.0
    %3621 = vmatprep.subr.mxu0 0.0
    %3622 = vmatpush1.msra.mxu0 0.0
    %3623 = vmatprep.subr.mxu0 0.0
    %3624 = vmatpush1.msra.mxu0 0.0
    %3625 = vmatprep.subr.mxu0 0.0
    %3626 = vmatpush1.msra.mxu0 0.0
    %3627 = vmatprep.subr.mxu0 0.0
    %3628 = vmatpush1.msra.mxu0 0.0
    %3629 = vmatprep.subr.mxu0 0.0
    %3630 = vmatpush1.msra.mxu0 0.0
    %3631 = vmatprep.subr.mxu0 0.0
    %3632 = vmatpush1.msra.mxu0 0.0
    %3633 = vmatprep.subr.mxu0 0.0
    %3634 = vmatpush1.msra.mxu0 0.0
    %3635 = vmatprep.subr.mxu0 0.0
    %3636 = vmatpush1.msra.mxu0 0.0
    %3637 = vmatprep.subr.mxu0 0.0
    %3638 = vmatpush1.msra.mxu0 0.0
    %3639 = vmatprep.subr.mxu0 0.0
    %3640 = vmatpush1.msra.mxu0 0.0
    %3641 = vmatprep.subr.mxu0 0.0
    %3642 = vmatpush1.msra.mxu0 0.0
    %3643 = vmatprep.subr.mxu0 0.0
    %3644 = vmatpush1.msra.mxu0 0.0
    %3645 = vmatprep.mubr.f32.mxu0 0.0
    %3646 = vmatmul.mubr.f32.gmra.mrb[0].mxu0 %v3534
    %v3647 = vpop.f32.mrb[0].mxu0
    %v3648 = vadd.f32 0.0, %v3647
    %v3649 = vpop.f32.mrb[0].mxu0
    %3650 = vmatprep.mubr.f32.mxu0 0.0
    %3651 = vmatmul.mubr.f32.gmra.mrb[0].mxu0 %v3537
    %v3652 = vpop.f32.mrb[0].mxu0
    %v3653 = vadd.f32 0.0, %v3652
    %v3654 = vpop.f32.mrb[0].mxu0
    %3655 = vmatprep.mubr.f32.mxu0 0.0
    %3656 = vmatmul.mubr.f32.gmra.mrb[0].mxu0 %v3540
    %v3657 = vpop.f32.mrb[0].mxu0
    %v3658 = vadd.f32 0.0, %v3657
    %v3659 = vpop.f32.mrb[0].mxu0
    %3660 = vmatprep.mubr.f32.mxu0 0.0
    %3661 = vmatmul.mubr.f32.gmra.mrb[0].mxu0 %v3543
    %v3662 = vpop.f32.mrb[0].mxu0
    %v3663 = vadd.f32 0.0, %v3662
    %v3664 = vpop.f32.mrb[0].mxu0
    %3665 = vmatprep.mubr.f32.mxu0 0.0
    %3666 = vmatmul.mubr.f32.gmra.mrb[0].mxu0 %v3546
    %v3667 = vpop.f32.mrb[0].mxu0
    %v3668 = vadd.f32 0.0, %v3667
    %v3669 = vpop.f32.mrb[0].mxu0
    %3670 = vmatprep.mubr.f32.mxu0 0.0
    %3671 = vmatmul.mubr.f32.gmra.mrb[0].mxu0 %v3549
    %v3672 = vpop.f32.mrb[0].mxu0
    %v3673 = vadd.f32 0.0, %v3672
    %v3674 = vpop.f32.mrb[0].mxu0
    %3675 = vmatprep.mubr.f32.mxu0 0.0
    %3676 = vmatmul.mubr.f32.gmra.mrb[0].mxu0 %v3552
    %v3677 = vpop.f32.mrb[0].mxu0
    %v3678 = vadd.f32 0.0, %v3677
    %v3679 = vpop.f32.mrb[0].mxu0
    %3680 = vmatprep.mubr.f32.mxu0 0.0
    %3681 = vmatmul.mubr.f32.gmra.mrb[0].mxu0 %v3555
    %v3682 = vpop.f32.mrb[0].mxu0
    %v3683 = vadd.f32 0.0, %v3682
    %v3684 = vpop.f32.mrb[0].mxu0
    %3685 = vmatprep.mubr.f32.mxu0 0.0
    %3686 = vmatmul.mubr.f32.gmra.mrb[0].mxu0 %v3558
    %v3687 = vpop.f32.mrb[0].mxu0
    %v3688 = vadd.f32 0.0, %v3687
    %v3689 = vpop.f32.mrb[0].mxu0
    %3690 = vmatprep.mubr.f32.mxu0 0.0
    %3691 = vmatmul.mubr.f32.gmra.mrb[0].mxu0 %v3561
    %v3692 = vpop.f32.mrb[0].mxu0
    %v3693 = vadd.f32 0.0, %v3692
    %v3694 = vpop.f32.mrb[0].mxu0
    %3695 = vmatprep.mubr.f32.mxu0 0.0
    %3696 = vmatmul.mubr.f32.gmra.mrb[0].mxu0 %v3564
    %v3697 = vpop.f32.mrb[0].mxu0
    %v3698 = vadd.f32 0.0, %v3697
    %v3699 = vpop.f32.mrb[0].mxu0
    %3700 = vmatprep.mubr.f32.mxu0 0.0
    %3701 = vmatmul.mubr.f32.gmra.mrb[0].mxu0 %v3567
    %v3702 = vpop.f32.mrb[0].mxu0
    %v3703 = vadd.f32 0.0, %v3702
    %v3704 = vpop.f32.mrb[0].mxu0
    %3705 = vmatprep.mubr.f32.mxu0 0.0
    %3706 = vmatmul.mubr.f32.gmra.mrb[0].mxu0 %v3570
    %v3707 = vpop.f32.mrb[0].mxu0
    %v3708 = vadd.f32 0.0, %v3707
    %v3709 = vpop.f32.mrb[0].mxu0
    %3710 = vmatprep.mubr.f32.mxu0 0.0
    %3711 = vmatmul.mubr.f32.gmra.mrb[0].mxu0 %v3573
    %v3712 = vpop.f32.mrb[0].mxu0
    %v3713 = vadd.f32 0.0, %v3712
    %v3714 = vpop.f32.mrb[0].mxu0
    %3715 = vmatprep.mubr.f32.mxu0 0.0
    %3716 = vmatmul.mubr.f32.gmra.mrb[0].mxu0 %v3576
    %v3717 = vpop.f32.mrb[0].mxu0
    %v3718 = vadd.f32 0.0, %v3717
    %v3719 = vpop.f32.mrb[0].mxu0
    %3720 = vmatprep.mubr.f32.mxu0 0.0
    %3721 = vmatmul.mubr.f32.gmra.mrb[0].mxu0 %v3579
    %v3722 = vpop.f32.mrb[0].mxu0
    %v3723 = vadd.f32 0.0, %v3722
    %v3724 = vpop.f32.mrb[0].mxu0
    %3725 = vdwg.mxu0
    %v3726 = vadd.f32 %v3500, %v3648
    %v3727 = vadd.f32 %v3501, %v3653
    %v3728 = vadd.f32 %v3502, %v3658
    %v3729 = vadd.f32 %v3503, %v3663
    %v3730 = vadd.f32 %v3504, %v3668
    %v3731 = vadd.f32 %v3505, %v3673
    %v3732 = vadd.f32 %v3506, %v3678
    %v3733 = vadd.f32 %v3507, %v3683
    %v3734 = vadd.f32 %v3508, %v3688
    %v3735 = vadd.f32 %v3509, %v3693
    %v3736 = vadd.f32 %v3510, %v3698
    %v3737 = vadd.f32 %v3511, %v3703
    %v3738 = vadd.f32 %v3512, %v3708
    %v3739 = vadd.f32 %v3513, %v3713
    %v3740 = vadd.f32 %v3514, %v3718
    %v3741 = vadd.f32 %v3515, %v3723
    %v3742 = vld [vmem:[%s3516 + $0x1] sm:$0xff]
    %v3743 = vld [vmem:[%s3516 + $0x11] sm:$0xff]
    %v3744 = vld [vmem:[%s3516 + $0x21] sm:$0xff]
    %v3745 = vld [vmem:[%s3516 + $0x31] sm:$0xff]
    %v3746 = vld [vmem:[%s3516 + $0x41] sm:$0xff]
    %v3747 = vld [vmem:[%s3516 + $0x51] sm:$0xff]
    %v3748 = vld [vmem:[%s3516 + $0x61] sm:$0xff]
    %v3749 = vld [vmem:[%s3516 + $0x71] sm:$0xff]
    %v3750 = vld [vmem:[%s3516 + $0xa1] sm:$0xff]
    %v3751 = vld [vmem:[%s3516 + $0xb1] sm:$0xff]
    %v3752 = vld [vmem:[%s3516 + $0xc1] sm:$0xff]
    %v3753 = vld [vmem:[%s3516 + $0xd1] sm:$0xff]
    %v3754 = vld [vmem:[%s3516 + $0xe1] sm:$0xff]
    %v3755 = vld [vmem:[%s3516 + $0xf1] sm:$0xff]
    %v3756 = vld [vmem:[%s3516 + $0x101] sm:$0xff]
    %v3757 = vld [vmem:[%s3516 + $0x111] sm:$0xff]
    %v3759 = vsel %vm210, %v3742, 0
    %v3762 = vsel %vm210, %v3743, 0
    %v3765 = vsel %vm210, %v3744, 0
    %v3768 = vsel %vm210, %v3745, 0
    %v3771 = vsel %vm210, %v3746, 0
    %v3774 = vsel %vm210, %v3747, 0
    %v3777 = vsel %vm210, %v3748, 0
    %v3780 = vsel %vm210, %v3749, 0
    %v3783 = vsel %vm210, %v3750, 0
    %v3786 = vsel %vm210, %v3751, 0
    %v3789 = vsel %vm210, %v3752, 0
    %v3792 = vsel %vm210, %v3753, 0
    %v3795 = vsel %vm210, %v3754, 0
    %v3798 = vsel %vm210, %v3755, 0
    %v3801 = vsel %vm210, %v3756, 0
    %v3804 = vsel %vm210, %v3757, 0
    %3806 = vmatprep.subr.mxu0 0.0
    %3807 = vmatpush1.msra.mxu0 %v53
    %3808 = vmatprep.subr.mxu0 0.0
    %3809 = vmatpush1.msra.mxu0 %v54
    %3810 = vmatprep.subr.mxu0 0.0
    %3811 = vmatpush1.msra.mxu0 0.0
    %3812 = vmatprep.subr.mxu0 0.0
    %3813 = vmatpush1.msra.mxu0 0.0
    %3814 = vmatprep.subr.mxu0 0.0
    %3815 = vmatpush1.msra.mxu0 0.0
    %3816 = vmatprep.subr.mxu0 0.0
    %3817 = vmatpush1.msra.mxu0 0.0
    %3818 = vmatprep.subr.mxu0 0.0
    %3819 = vmatpush1.msra.mxu0 0.0
    %3820 = vmatprep.subr.mxu0 0.0
    %3821 = vmatpush1.msra.mxu0 0.0
    %3822 = vmatprep.subr.mxu0 0.0
    %3823 = vmatpush1.msra.mxu0 0.0
    %3824 = vmatprep.subr.mxu0 0.0
    %3825 = vmatpush1.msra.mxu0 0.0
    %3826 = vmatprep.subr.mxu0 0.0
    %3827 = vmatpush1.msra.mxu0 0.0
    %3828 = vmatprep.subr.mxu0 0.0
    %3829 = vmatpush1.msra.mxu0 0.0
    %3830 = vmatprep.subr.mxu0 0.0
    %3831 = vmatpush1.msra.mxu0 0.0
    %3832 = vmatprep.subr.mxu0 0.0
    %3833 = vmatpush1.msra.mxu0 0.0
    %3834 = vmatprep.subr.mxu0 0.0
    %3835 = vmatpush1.msra.mxu0 0.0
    %3836 = vmatprep.subr.mxu0 0.0
    %3837 = vmatpush1.msra.mxu0 0.0
    %3838 = vmatprep.subr.mxu0 0.0
    %3839 = vmatpush1.msra.mxu0 0.0
    %3840 = vmatprep.subr.mxu0 0.0
    %3841 = vmatpush1.msra.mxu0 0.0
    %3842 = vmatprep.subr.mxu0 0.0
    %3843 = vmatpush1.msra.mxu0 0.0
    %3844 = vmatprep.subr.mxu0 0.0
    %3845 = vmatpush1.msra.mxu0 0.0
    %3846 = vmatprep.subr.mxu0 0.0
    %3847 = vmatpush1.msra.mxu0 0.0
    %3848 = vmatprep.subr.mxu0 0.0
    %3849 = vmatpush1.msra.mxu0 0.0
    %3850 = vmatprep.subr.mxu0 0.0
    %3851 = vmatpush1.msra.mxu0 0.0
    %3852 = vmatprep.subr.mxu0 0.0
    %3853 = vmatpush1.msra.mxu0 0.0
    %3854 = vmatprep.subr.mxu0 0.0
    %3855 = vmatpush1.msra.mxu0 0.0
    %3856 = vmatprep.subr.mxu0 0.0
    %3857 = vmatpush1.msra.mxu0 0.0
    %3858 = vmatprep.subr.mxu0 0.0
    %3859 = vmatpush1.msra.mxu0 0.0
    %3860 = vmatprep.subr.mxu0 0.0
    %3861 = vmatpush1.msra.mxu0 0.0
    %3862 = vmatprep.subr.mxu0 0.0
    %3863 = vmatpush1.msra.mxu0 0.0
    %3864 = vmatprep.subr.mxu0 0.0
    %3865 = vmatpush1.msra.mxu0 0.0
    %3866 = vmatprep.subr.mxu0 0.0
    %3867 = vmatpush1.msra.mxu0 0.0
    %3868 = vmatprep.subr.mxu0 0.0
    %3869 = vmatpush1.msra.mxu0 0.0
    %3870 = vmatprep.mubr.f32.mxu0 0.0
    %3871 = vmatmul.mubr.f32.gmra.mrb[0].mxu0 %v3759
    %v3872 = vpop.f32.mrb[0].mxu0
    %v3873 = vadd.f32 0.0, %v3872
    %v3874 = vpop.f32.mrb[0].mxu0
    %3875 = vmatprep.mubr.f32.mxu0 0.0
    %3876 = vmatmul.mubr.f32.gmra.mrb[0].mxu0 %v3762
    %v3877 = vpop.f32.mrb[0].mxu0
    %v3878 = vadd.f32 0.0, %v3877
    %v3879 = vpop.f32.mrb[0].mxu0
    %3880 = vmatprep.mubr.f32.mxu0 0.0
    %3881 = vmatmul.mubr.f32.gmra.mrb[0].mxu0 %v3765
    %v3882 = vpop.f32.mrb[0].mxu0
    %v3883 = vadd.f32 0.0, %v3882
    %v3884 = vpop.f32.mrb[0].mxu0
    %3885 = vmatprep.mubr.f32.mxu0 0.0
    %3886 = vmatmul.mubr.f32.gmra.mrb[0].mxu0 %v3768
    %v3887 = vpop.f32.mrb[0].mxu0
    %v3888 = vadd.f32 0.0, %v3887
    %v3889 = vpop.f32.mrb[0].mxu0
    %3890 = vmatprep.mubr.f32.mxu0 0.0
    %3891 = vmatmul.mubr.f32.gmra.mrb[0].mxu0 %v3771
    %v3892 = vpop.f32.mrb[0].mxu0
    %v3893 = vadd.f32 0.0, %v3892
    %v3894 = vpop.f32.mrb[0].mxu0
    %3895 = vmatprep.mubr.f32.mxu0 0.0
    %3896 = vmatmul.mubr.f32.gmra.mrb[0].mxu0 %v3774
    %v3897 = vpop.f32.mrb[0].mxu0
    %v3898 = vadd.f32 0.0, %v3897
    %v3899 = vpop.f32.mrb[0].mxu0
    %3900 = vmatprep.mubr.f32.mxu0 0.0
    %3901 = vmatmul.mubr.f32.gmra.mrb[0].mxu0 %v3777
    %v3902 = vpop.f32.mrb[0].mxu0
    %v3903 = vadd.f32 0.0, %v3902
    %v3904 = vpop.f32.mrb[0].mxu0
    %3905 = vmatprep.mubr.f32.mxu0 0.0
    %3906 = vmatmul.mubr.f32.gmra.mrb[0].mxu0 %v3780
    %v3907 = vpop.f32.mrb[0].mxu0
    %v3908 = vadd.f32 0.0, %v3907
    %v3909 = vpop.f32.mrb[0].mxu0
    %3910 = vmatprep.mubr.f32.mxu0 0.0
    %3911 = vmatmul.mubr.f32.gmra.mrb[0].mxu0 %v3783
    %v3912 = vpop.f32.mrb[0].mxu0
    %v3913 = vadd.f32 0.0, %v3912
    %v3914 = vpop.f32.mrb[0].mxu0
    %3915 = vmatprep.mubr.f32.mxu0 0.0
    %3916 = vmatmul.mubr.f32.gmra.mrb[0].mxu0 %v3786
    %v3917 = vpop.f32.mrb[0].mxu0
    %v3918 = vadd.f32 0.0, %v3917
    %v3919 = vpop.f32.mrb[0].mxu0
    %3920 = vmatprep.mubr.f32.mxu0 0.0
    %3921 = vmatmul.mubr.f32.gmra.mrb[0].mxu0 %v3789
    %v3922 = vpop.f32.mrb[0].mxu0
    %v3923 = vadd.f32 0.0, %v3922
    %v3924 = vpop.f32.mrb[0].mxu0
    %3925 = vmatprep.mubr.f32.mxu0 0.0
    %3926 = vmatmul.mubr.f32.gmra.mrb[0].mxu0 %v3792
    %v3927 = vpop.f32.mrb[0].mxu0
    %v3928 = vadd.f32 0.0, %v3927
    %v3929 = vpop.f32.mrb[0].mxu0
    %3930 = vmatprep.mubr.f32.mxu0 0.0
    %3931 = vmatmul.mubr.f32.gmra.mrb[0].mxu0 %v3795
    %v3932 = vpop.f32.mrb[0].mxu0
    %v3933 = vadd.f32 0.0, %v3932
    %v3934 = vpop.f32.mrb[0].mxu0
    %3935 = vmatprep.mubr.f32.mxu0 0.0
    %3936 = vmatmul.mubr.f32.gmra.mrb[0].mxu0 %v3798
    %v3937 = vpop.f32.mrb[0].mxu0
    %v3938 = vadd.f32 0.0, %v3937
    %v3939 = vpop.f32.mrb[0].mxu0
    %3940 = vmatprep.mubr.f32.mxu0 0.0
    %3941 = vmatmul.mubr.f32.gmra.mrb[0].mxu0 %v3801
    %v3942 = vpop.f32.mrb[0].mxu0
    %v3943 = vadd.f32 0.0, %v3942
    %v3944 = vpop.f32.mrb[0].mxu0
    %3945 = vmatprep.mubr.f32.mxu0 0.0
    %3946 = vmatmul.mubr.f32.gmra.mrb[0].mxu0 %v3804
    %v3947 = vpop.f32.mrb[0].mxu0
    %v3948 = vadd.f32 0.0, %v3947
    %v3949 = vpop.f32.mrb[0].mxu0
    %3950 = vdwg.mxu0
    %v3951 = vadd.f32 %v3726, %v3873
    %v3952 = vadd.f32 %v3727, %v3878
    %v3953 = vadd.f32 %v3728, %v3883
    %v3954 = vadd.f32 %v3729, %v3888
    %v3955 = vadd.f32 %v3730, %v3893
    %v3956 = vadd.f32 %v3731, %v3898
    %v3957 = vadd.f32 %v3732, %v3903
    %v3958 = vadd.f32 %v3733, %v3908
    %v3959 = vadd.f32 %v3734, %v3913
    %v3960 = vadd.f32 %v3735, %v3918
    %v3961 = vadd.f32 %v3736, %v3923
    %v3962 = vadd.f32 %v3737, %v3928
    %v3963 = vadd.f32 %v3738, %v3933
    %v3964 = vadd.f32 %v3739, %v3938
    %v3965 = vadd.f32 %v3740, %v3943
    %v3966 = vadd.f32 %v3741, %v3948
    %v3967 = vld [vmem:[%s3516 + $0x2] sm:$0xff]
    %v3968 = vld [vmem:[%s3516 + $0x12] sm:$0xff]
    %v3969 = vld [vmem:[%s3516 + $0x22] sm:$0xff]
    %v3970 = vld [vmem:[%s3516 + $0x32] sm:$0xff]
    %v3971 = vld [vmem:[%s3516 + $0x42] sm:$0xff]
    %v3972 = vld [vmem:[%s3516 + $0x52] sm:$0xff]
    %v3973 = vld [vmem:[%s3516 + $0x62] sm:$0xff]
    %v3974 = vld [vmem:[%s3516 + $0x72] sm:$0xff]
    %v3975 = vld [vmem:[%s3516 + $0xa2] sm:$0xff]
    %v3976 = vld [vmem:[%s3516 + $0xb2] sm:$0xff]
    %v3977 = vld [vmem:[%s3516 + $0xc2] sm:$0xff]
    %v3978 = vld [vmem:[%s3516 + $0xd2] sm:$0xff]
    %v3979 = vld [vmem:[%s3516 + $0xe2] sm:$0xff]
    %v3980 = vld [vmem:[%s3516 + $0xf2] sm:$0xff]
    %v3981 = vld [vmem:[%s3516 + $0x102] sm:$0xff]
    %v3982 = vld [vmem:[%s3516 + $0x112] sm:$0xff]
    %v3984 = vsel %vm210, %v3967, 0
    %v3987 = vsel %vm210, %v3968, 0
    %v3990 = vsel %vm210, %v3969, 0
    %v3993 = vsel %vm210, %v3970, 0
    %v3996 = vsel %vm210, %v3971, 0
    %v3999 = vsel %vm210, %v3972, 0
    %v4002 = vsel %vm210, %v3973, 0
    %v4005 = vsel %vm210, %v3974, 0
    %v4008 = vsel %vm210, %v3975, 0
    %v4011 = vsel %vm210, %v3976, 0
    %v4014 = vsel %vm210, %v3977, 0
    %v4017 = vsel %vm210, %v3978, 0
    %v4020 = vsel %vm210, %v3979, 0
    %v4023 = vsel %vm210, %v3980, 0
    %v4026 = vsel %vm210, %v3981, 0
    %v4029 = vsel %vm210, %v3982, 0
    %4031 = vmatprep.subr.mxu0 0.0
    %4032 = vmatpush1.msra.mxu0 %v55
    %4033 = vmatprep.subr.mxu0 0.0
    %4034 = vmatpush1.msra.mxu0 %v56
    %4035 = vmatprep.subr.mxu0 0.0
    %4036 = vmatpush1.msra.mxu0 0.0
    %4037 = vmatprep.subr.mxu0 0.0
    %4038 = vmatpush1.msra.mxu0 0.0
    %4039 = vmatprep.subr.mxu0 0.0
    %4040 = vmatpush1.msra.mxu0 0.0
    %4041 = vmatprep.subr.mxu0 0.0
    %4042 = vmatpush1.msra.mxu0 0.0
    %4043 = vmatprep.subr.mxu0 0.0
    %4044 = vmatpush1.msra.mxu0 0.0
    %4045 = vmatprep.subr.mxu0 0.0
    %4046 = vmatpush1.msra.mxu0 0.0
    %4047 = vmatprep.subr.mxu0 0.0
    %4048 = vmatpush1.msra.mxu0 0.0
    %4049 = vmatprep.subr.mxu0 0.0
    %4050 = vmatpush1.msra.mxu0 0.0
    %4051 = vmatprep.subr.mxu0 0.0
    %4052 = vmatpush1.msra.mxu0 0.0
    %4053 = vmatprep.subr.mxu0 0.0
    %4054 = vmatpush1.msra.mxu0 0.0
    %4055 = vmatprep.subr.mxu0 0.0
    %4056 = vmatpush1.msra.mxu0 0.0
    %4057 = vmatprep.subr.mxu0 0.0
    %4058 = vmatpush1.msra.mxu0 0.0
    %4059 = vmatprep.subr.mxu0 0.0
    %4060 = vmatpush1.msra.mxu0 0.0
    %4061 = vmatprep.subr.mxu0 0.0
    %4062 = vmatpush1.msra.mxu0 0.0
    %4063 = vmatprep.subr.mxu0 0.0
    %4064 = vmatpush1.msra.mxu0 0.0
    %4065 = vmatprep.subr.mxu0 0.0
    %4066 = vmatpush1.msra.mxu0 0.0
    %4067 = vmatprep.subr.mxu0 0.0
    %4068 = vmatpush1.msra.mxu0 0.0
    %4069 = vmatprep.subr.mxu0 0.0
    %4070 = vmatpush1.msra.mxu0 0.0
    %4071 = vmatprep.subr.mxu0 0.0
    %4072 = vmatpush1.msra.mxu0 0.0
    %4073 = vmatprep.subr.mxu0 0.0
    %4074 = vmatpush1.msra.mxu0 0.0
    %4075 = vmatprep.subr.mxu0 0.0
    %4076 = vmatpush1.msra.mxu0 0.0
    %4077 = vmatprep.subr.mxu0 0.0
    %4078 = vmatpush1.msra.mxu0 0.0
    %4079 = vmatprep.subr.mxu0 0.0
    %4080 = vmatpush1.msra.mxu0 0.0
    %4081 = vmatprep.subr.mxu0 0.0
    %4082 = vmatpush1.msra.mxu0 0.0
    %4083 = vmatprep.subr.mxu0 0.0
    %4084 = vmatpush1.msra.mxu0 0.0
    %4085 = vmatprep.subr.mxu0 0.0
    %4086 = vmatpush1.msra.mxu0 0.0
    %4087 = vmatprep.subr.mxu0 0.0
    %4088 = vmatpush1.msra.mxu0 0.0
    %4089 = vmatprep.subr.mxu0 0.0
    %4090 = vmatpush1.msra.mxu0 0.0
    %4091 = vmatprep.subr.mxu0 0.0
    %4092 = vmatpush1.msra.mxu0 0.0
    %4093 = vmatprep.subr.mxu0 0.0
    %4094 = vmatpush1.msra.mxu0 0.0
    %4095 = vmatprep.mubr.f32.mxu0 0.0
    %4096 = vmatmul.mubr.f32.gmra.mrb[0].mxu0 %v3984
    %v4097 = vpop.f32.mrb[0].mxu0
    %v4098 = vadd.f32 0.0, %v4097
    %v4099 = vpop.f32.mrb[0].mxu0
    %4100 = vmatprep.mubr.f32.mxu0 0.0
    %4101 = vmatmul.mubr.f32.gmra.mrb[0].mxu0 %v3987
    %v4102 = vpop.f32.mrb[0].mxu0
    %v4103 = vadd.f32 0.0, %v4102
    %v4104 = vpop.f32.mrb[0].mxu0
    %4105 = vmatprep.mubr.f32.mxu0 0.0
    %4106 = vmatmul.mubr.f32.gmra.mrb[0].mxu0 %v3990
    %v4107 = vpop.f32.mrb[0].mxu0
    %v4108 = vadd.f32 0.0, %v4107
    %v4109 = vpop.f32.mrb[0].mxu0
    %4110 = vmatprep.mubr.f32.mxu0 0.0
    %4111 = vmatmul.mubr.f32.gmra.mrb[0].mxu0 %v3993
    %v4112 = vpop.f32.mrb[0].mxu0
    %v4113 = vadd.f32 0.0, %v4112
    %v4114 = vpop.f32.mrb[0].mxu0
    %4115 = vmatprep.mubr.f32.mxu0 0.0
    %4116 = vmatmul.mubr.f32.gmra.mrb[0].mxu0 %v3996
    %v4117 = vpop.f32.mrb[0].mxu0
    %v4118 = vadd.f32 0.0, %v4117
    %v4119 = vpop.f32.mrb[0].mxu0
    %4120 = vmatprep.mubr.f32.mxu0 0.0
    %4121 = vmatmul.mubr.f32.gmra.mrb[0].mxu0 %v3999
    %v4122 = vpop.f32.mrb[0].mxu0
    %v4123 = vadd.f32 0.0, %v4122
    %v4124 = vpop.f32.mrb[0].mxu0
    %4125 = vmatprep.mubr.f32.mxu0 0.0
    %4126 = vmatmul.mubr.f32.gmra.mrb[0].mxu0 %v4002
    %v4127 = vpop.f32.mrb[0].mxu0
    %v4128 = vadd.f32 0.0, %v4127
    %v4129 = vpop.f32.mrb[0].mxu0
    %4130 = vmatprep.mubr.f32.mxu0 0.0
    %4131 = vmatmul.mubr.f32.gmra.mrb[0].mxu0 %v4005
    %v4132 = vpop.f32.mrb[0].mxu0
    %v4133 = vadd.f32 0.0, %v4132
    %v4134 = vpop.f32.mrb[0].mxu0
    %4135 = vmatprep.mubr.f32.mxu0 0.0
    %4136 = vmatmul.mubr.f32.gmra.mrb[0].mxu0 %v4008
    %v4137 = vpop.f32.mrb[0].mxu0
    %v4138 = vadd.f32 0.0, %v4137
    %v4139 = vpop.f32.mrb[0].mxu0
    %4140 = vmatprep.mubr.f32.mxu0 0.0
    %4141 = vmatmul.mubr.f32.gmra.mrb[0].mxu0 %v4011
    %v4142 = vpop.f32.mrb[0].mxu0
    %v4143 = vadd.f32 0.0, %v4142
    %v4144 = vpop.f32.mrb[0].mxu0
    %4145 = vmatprep.mubr.f32.mxu0 0.0
    %4146 = vmatmul.mubr.f32.gmra.mrb[0].mxu0 %v4014
    %v4147 = vpop.f32.mrb[0].mxu0
    %v4148 = vadd.f32 0.0, %v4147
    %v4149 = vpop.f32.mrb[0].mxu0
    %4150 = vmatprep.mubr.f32.mxu0 0.0
    %4151 = vmatmul.mubr.f32.gmra.mrb[0].mxu0 %v4017
    %v4152 = vpop.f32.mrb[0].mxu0
    %v4153 = vadd.f32 0.0, %v4152
    %v4154 = vpop.f32.mrb[0].mxu0
    %4155 = vmatprep.mubr.f32.mxu0 0.0
    %4156 = vmatmul.mubr.f32.gmra.mrb[0].mxu0 %v4020
    %v4157 = vpop.f32.mrb[0].mxu0
    %v4158 = vadd.f32 0.0, %v4157
    %v4159 = vpop.f32.mrb[0].mxu0
    %4160 = vmatprep.mubr.f32.mxu0 0.0
    %4161 = vmatmul.mubr.f32.gmra.mrb[0].mxu0 %v4023
    %v4162 = vpop.f32.mrb[0].mxu0
    %v4163 = vadd.f32 0.0, %v4162
    %v4164 = vpop.f32.mrb[0].mxu0
    %4165 = vmatprep.mubr.f32.mxu0 0.0
    %4166 = vmatmul.mubr.f32.gmra.mrb[0].mxu0 %v4026
    %v4167 = vpop.f32.mrb[0].mxu0
    %v4168 = vadd.f32 0.0, %v4167
    %v4169 = vpop.f32.mrb[0].mxu0
    %4170 = vmatprep.mubr.f32.mxu0 0.0
    %4171 = vmatmul.mubr.f32.gmra.mrb[0].mxu0 %v4029
    %v4172 = vpop.f32.mrb[0].mxu0
    %v4173 = vadd.f32 0.0, %v4172
    %v4174 = vpop.f32.mrb[0].mxu0
    %4175 = vdwg.mxu0
    %v4176 = vadd.f32 %v3951, %v4098
    %v4177 = vadd.f32 %v3952, %v4103
    %v4178 = vadd.f32 %v3953, %v4108
    %v4179 = vadd.f32 %v3954, %v4113
    %v4180 = vadd.f32 %v3955, %v4118
    %v4181 = vadd.f32 %v3956, %v4123
    %v4182 = vadd.f32 %v3957, %v4128
    %v4183 = vadd.f32 %v3958, %v4133
    %v4184 = vadd.f32 %v3959, %v4138
    %v4185 = vadd.f32 %v3960, %v4143
    %v4186 = vadd.f32 %v3961, %v4148
    %v4187 = vadd.f32 %v3962, %v4153
    %v4188 = vadd.f32 %v3963, %v4158
    %v4189 = vadd.f32 %v3964, %v4163
    %v4190 = vadd.f32 %v3965, %v4168
    %v4191 = vadd.f32 %v3966, %v4173
    %v4192 = vld [vmem:[%s4] sm:$0x1]
    %v4194 = vlaneseq
    %v4195 = vshrl.u32 %v4194, 7
    %v4196 = vsub.s32 0, %v4195
    %v4197 = vrot.slane %v4192, %v4196
    %v4199 = vadd.f32 %v4176, %v4197
    %v4200 = vadd.f32 %v4177, %v4197
    %v4201 = vadd.f32 %v4178, %v4197
    %v4202 = vadd.f32 %v4179, %v4197
    %v4203 = vadd.f32 %v4180, %v4197
    %v4204 = vadd.f32 %v4181, %v4197
    %v4205 = vadd.f32 %v4182, %v4197
    %v4206 = vadd.f32 %v4183, %v4197
    %v4207 = vadd.f32 %v4184, %v4197
    %v4208 = vadd.f32 %v4185, %v4197
    %v4209 = vadd.f32 %v4186, %v4197
    %v4210 = vadd.f32 %v4187, %v4197
    %v4211 = vadd.f32 %v4188, %v4197
    %v4212 = vadd.f32 %v4189, %v4197
    %v4213 = vadd.f32 %v4190, %v4197
    %v4214 = vadd.f32 %v4191, %v4197
    %vm4215 = vcmask 261120
    %4216 = vst.msk [vmem:[#allocation3] sm:$0xff] %vm4215, %v4199
    %4217 = vst.msk [vmem:[#allocation3 + $0x8] sm:$0xff] %vm4215, %v4200
    %4218 = vst.msk [vmem:[#allocation3 + $0x10] sm:$0xff] %vm4215, %v4201
    %4219 = vst.msk [vmem:[#allocation3 + $0x18] sm:$0xff] %vm4215, %v4202
    %4220 = vst.msk [vmem:[#allocation3 + $0x20] sm:$0xff] %vm4215, %v4203
    %4221 = vst.msk [vmem:[#allocation3 + $0x28] sm:$0xff] %vm4215, %v4204
    %4222 = vst.msk [vmem:[#allocation3 + $0x30] sm:$0xff] %vm4215, %v4205
    %4223 = vst.msk [vmem:[#allocation3 + $0x38] sm:$0xff] %vm4215, %v4206
    %4224 = vst.msk [vmem:[#allocation3 + $0x40] sm:$0xff] %vm4215, %v4207
    %4225 = vst.msk [vmem:[#allocation3 + $0x48] sm:$0xff] %vm4215, %v4208
    %4226 = vst.msk [vmem:[#allocation3 + $0x50] sm:$0xff] %vm4215, %v4209
    %4227 = vst.msk [vmem:[#allocation3 + $0x58] sm:$0xff] %vm4215, %v4210
    %4228 = vst.msk [vmem:[#allocation3 + $0x60] sm:$0xff] %vm4215, %v4211
    %4229 = vst.msk [vmem:[#allocation3 + $0x68] sm:$0xff] %vm4215, %v4212
    %4230 = vst.msk [vmem:[#allocation3 + $0x70] sm:$0xff] %vm4215, %v4213
    %4231 = vst.msk [vmem:[#allocation3 + $0x78] sm:$0xff] %vm4215, %v4214
    // Predicated region
    $region22: #{dual_sep_conv.1} parent=1 // pred_check
      _
    $region23: #{dual_sep_conv.1} parent=1 // pred_check_branch
      %4233 = sbr.rel (0) target = $region25
    $region24: #{dual_sep_conv.1} parent=1 // pred_region
      %s4235 = ssub.s32 2048, 2048
      %4236 = vsyncadd [#allocation4], %s4235
      %s4237 = sshll.u32 [#allocation3], 4
      %s4238 = int_to_ptr.vmem [resolvable:$true] %s4237
      %4243 = dma.vmem_to_hbm [thread:$0]  %s4238, 2048, %s5, [#allocation4], 128, 128, 8
    $region25: #{dual_sep_conv.1} parent=1 // pred_fallthru
      _
    // Predicated region
    $region26: #{dual_sep_conv.1} parent=1 // pred_check
      _
    $region27: #{dual_sep_conv.1} parent=1 // pred_check_branch
      %4245 = sbr.rel (0) target = $region29
    $region28: #{dual_sep_conv.1} parent=1 // pred_region
      %4246 = dma.done [#allocation4], 2048
    $region29: #{dual_sep_conv.1} parent=1 // pred_fallthru
      _
    %4247 = vsyncpa [#allocation4], 1

</llo_original>
